<compile_context>
chip_gen: v6e
topology: v6e:2x2x1
jax: 0.10.0
libtpu: 0.0.40
codegen_flags: <defaults>
</compile_context>

<pallas_src>
import functools

import jax
import jax.numpy as jnp
from jax import lax
from jax.experimental import pallas as pl
from jax.experimental.pallas import tpu as pltpu


def _apply_gates(gates, c, hidden_dim):
    """PyTorch LSTM gate math.  `gates` (B, 4H) pre-activations whose g-gate
    columns were pre-scaled by 2 on the host, so tanh(g) == 2*sigmoid(g')-1."""
    H = hidden_dim
    sig = jax.nn.sigmoid(gates)          # one full-width EUP launch
    i = sig[:, 0 * H:1 * H]
    f = sig[:, 1 * H:2 * H]
    g = 2.0 * sig[:, 2 * H:3 * H] - 1.0  # == tanh of the unscaled pre-activation
    o = sig[:, 3 * H:4 * H]
    c_new = f * c + i * g
    h_new = o * jnp.tanh(c_new)          # unavoidable per-step EUP launch
    return h_new, c_new


def timetable_ae_kernel(
    x_ref,                                   # (T, TB, D)
    w_in_ref,                                # (D, 8H)  fused [enc_fwd | dec_x] input weights
    whh_f_ref, b_f_ref,                      # encoder fwd: (H,4H), (1,4H)
    wih_r_ref, b_r_ref,                      # encoder rev: (D,4H), (1,4H)
    wz_ref, bz_ref,                          # fc_z: (2H,EP), (1,EP)   (lane-padded)
    wzd_ref, whh_d_ref, b_d_ref,             # decoder: (EP,4H), (H,4H), (1,4H)
    wo_ref, bo_ref,                          # output: (T*H, T*D) block-diag, (1, T*D)
    out_ref, z_ref,                          # (TB, T*D), (TB, EP)
    enc_pre_ref, dec_pre_ref, dec_h_ref,     # scratch: (T,TB,4H), (T,TB,4H), (TB,T*H)
    *, hidden_dim,
):
    T, TB, D = x_ref.shape
    H = hidden_dim

    x = x_ref[...].astype(jnp.float32)                        # (T, TB, D)
    h0 = jnp.zeros((TB, H), jnp.float32)
    c0 = jnp.zeros((TB, H), jnp.float32)

    # ---- Fused input projection (one MXU pass over the whole x tile) -------
    # columns [0,4H)  : encoder-forward gate pre-activations
    # columns [4H,8H) : decoder x-part gate pre-activations
    pre_all = jnp.dot(x.reshape(T * TB, D), w_in_ref[...],
                      preferred_element_type=jnp.float32).reshape(T, TB, 8 * H)
    enc_pre_ref[...] = pre_all[:, :, :4 * H] + b_f_ref[...][None]
    dec_pre_ref[...] = pre_all[:, :, 4 * H:]

    # ---- Encoder, forward direction ----------------------------------------
    # NOTE: holding whh_f resident in the MXU via matmul_push_rhs/acc_lhs/pop
    # would drop the per-step RHS reload; left as a follow-up.
    whh_f = whh_f_ref[...]

    def enc_step(t, carry):
        h, c = carry
        gates = enc_pre_ref[t] + jnp.dot(h, whh_f,
                                         preferred_element_type=jnp.float32)
        return _apply_gates(gates, c, H)

    h_fwd, _ = lax.fori_loop(0, T, enc_step, (h0, c0), unroll=True)   # (TB, H)

    # ---- Encoder, reverse direction -----------------------------------------
    # Only enc_out[:, -1, H:] feeds fc_z; for the reverse LSTM that position is
    # its FIRST step from a zero state (input x[T-1]).  One cell step is exactly
    # the full reverse pass for that output.
    # NOTE(guard): this shortcut is only valid while fc_z consumes exactly
    # enc_out[:, -1, :]; if other reverse timesteps are ever used, run the loop.
    gates_r = (jnp.dot(x[T - 1], wih_r_ref[...],
                       preferred_element_type=jnp.float32) + b_r_ref[...])
    h_bwd, _ = _apply_gates(gates_r, c0, H)                            # (TB, H)

    # ---- z = tanh(fc_z(enc_out[:, -1, :])) ----------------------------------
    # fc_z weights are lane-padded to EP (multiple of 128); padded columns are
    # zero so z[:, E:] == tanh(0) == 0.  Split (2H,EP) into fwd/rev halves to
    # avoid a lane concat.
    wz = wz_ref[...]
    z = jnp.tanh(jnp.dot(h_fwd, wz[:H], preferred_element_type=jnp.float32)
                 + jnp.dot(h_bwd, wz[H:], preferred_element_type=jnp.float32)
                 + bz_ref[...])
    z_ref[...] = z.astype(z_ref.dtype)                                 # full-lane store

    # ---- Decoder -------------------------------------------------------------
    # decoder_input[t] = concat([z, x[t]], -1); the z contribution (+ bias) is
    # identical at every timestep, so compute it once and add per step.
    # wzd is row-padded to EP with zeros, so the padded z lanes contribute 0.
    z_part = (jnp.dot(z, wzd_ref[...], preferred_element_type=jnp.float32)
              + b_d_ref[...])                                          # (TB, 4H)
    whh_d = whh_d_ref[...]

    # Static Python loop: T is small & static, and the static lane-slice stores
    # below build the (TB, T*H) hidden-state slab for the lane-dense output.
    h, c = h0, c0
    for t in range(T):
        gates = (dec_pre_ref[t] + z_part
                 + jnp.dot(h, whh_d, preferred_element_type=jnp.float32))
        h, c = _apply_gates(gates, c, H)
        dec_h_ref[:, t * H:(t + 1) * H] = h

    # ---- Output projection: one matmul against the block-diagonal Wo ---------
    # (TB, T*H) @ (T*H, T*D) -> (TB, T*D): lane-dense (128-wide for T=8, D=16)
    # slab, stored unmasked, and batch-first on the host via a pure reshape.
    out = (jnp.dot(dec_h_ref[...], wo_ref[...],
                   preferred_element_type=jnp.float32) + bo_ref[...])
    out_ref[...] = out.astype(out_ref.dtype)


def timetable_autoencoder(x, params, *, hidden_dim, batch_tile=128):
    """x: (B, T, input_dim) f32 -> (output (B,T,input_dim), z (B,embed_dim))."""
    B, T, D = x.shape
    H = hidden_dim
    E = params["wz"].shape[0]
    EP = ((E + 127) // 128) * 128          # lane-padded embed dim for dense stores

    # -------- host-side weight prep (scaled / transposed / fused, XLA glue) --
    # Scale the g-gate block by 2 so the kernel can use 2*sigmoid(.)-1 == tanh.
    def scale_g(w):                         # (4H, in_dim): rows [2H,3H) * 2
        return w.at[2 * H:3 * H].multiply(2.0)

    def scale_gb(b):                        # (1, 4H): cols [2H,3H) * 2
        return b.at[:, 2 * H:3 * H].multiply(2.0)

    wih_f = scale_g(params["wih_f"]); whh_f = scale_g(params["whh_f"]); b_f = scale_gb(params["b_f"])
    wih_r = scale_g(params["wih_r"]); b_r = scale_gb(params["b_r"])
    wih_d = scale_g(params["wih_d"]); whh_d = scale_g(params["whh_d"]); b_d = scale_gb(params["b_d"])

    w_in = jnp.concatenate([wih_f.T, wih_d[:, E:].T], axis=1)      # (D, 8H)
    whh_f_t = whh_f.T                                              # (H, 4H)
    wih_r_t = wih_r.T                                              # (D, 4H)
    wz_pad = jnp.zeros((2 * H, EP), jnp.float32).at[:, :E].set(params["wz"].T)
    bz_pad = jnp.zeros((1, EP), jnp.float32).at[:, :E].set(params["bz"])
    wzd_pad = jnp.zeros((EP, 4 * H), jnp.float32).at[:E].set(wih_d[:, :E].T)
    whh_d_t = whh_d.T                                              # (H, 4H)
    wo_big = jnp.kron(jnp.eye(T, dtype=jnp.float32), params["wo"].T)   # (T*H, T*D) block-diag
    bo_big = jnp.tile(params["bo"], (1, T))                             # (1, T*D)

    # -------- batch tiling ----------------------------------------------------
    # Big tiles amortize the ~0.35us per-grid-step overhead and fill the MXU M
    # dim; keep >=2 grid steps when possible so v7x can shard the "parallel"
    # axis across both TensorCores.
    TB = max(8, min(batch_tile, ((B + 7) // 8) * 8))
    if (B + TB - 1) // TB < 2 and TB > 8:
        TB = max(8, ((TB // 2) + 7) // 8 * 8)
    B_pad = ((B + TB - 1) // TB) * TB

    x_tm = jnp.transpose(x, (1, 0, 2))                             # (T, B, D) time-major
    if B_pad != B:
        x_tm = jnp.pad(x_tm, ((0, 0), (0, B_pad - B), (0, 0)))

    args = (x_tm,
            w_in,
            whh_f_t, b_f,
            wih_r_t, b_r,
            wz_pad, bz_pad,
            wzd_pad, whh_d_t, b_d,
            wo_big, bo_big)

    def full_spec(a):
        nd = a.ndim
        return pl.BlockSpec(a.shape, lambda b: (0,) * nd)

    in_specs = ([pl.BlockSpec((T, TB, D), lambda b: (0, b, 0))]
                + [full_spec(a) for a in args[1:]])

    out_slab, z_full = pl.pallas_call(
        functools.partial(timetable_ae_kernel, hidden_dim=H),
        grid=(B_pad // TB,),
        out_shape=(
            jax.ShapeDtypeStruct((B_pad, T * D), jnp.float32),     # lane-dense recon slab
            jax.ShapeDtypeStruct((B_pad, EP), jnp.float32),        # lane-padded z
        ),
        in_specs=in_specs,
        out_specs=(
            pl.BlockSpec((TB, T * D), lambda b: (b, 0)),
            pl.BlockSpec((TB, EP), lambda b: (b, 0)),
        ),
        scratch_shapes=[
            pltpu.VMEM((T, TB, 4 * H), jnp.float32),   # encoder fwd gate pre-activations
            pltpu.VMEM((T, TB, 4 * H), jnp.float32),   # decoder x-part gate pre-activations
            pltpu.VMEM((TB, T * H), jnp.float32),      # decoder hidden-state slab
        ],
        compiler_params=pltpu.CompilerParams(
            dimension_semantics=("parallel",),
            vmem_limit_bytes=32 * 1024 * 1024),
    )(*args)

    out = out_slab[:B].reshape(B, T, D)    # batch-first for free (pure reshape)
    z = z_full[:B, :E]
    return out, z


# ----------------------------- setup & reference -----------------------------

def init_params(key, input_dim, embed_dim, hidden_dim):
    D, E, H = input_dim, embed_dim, hidden_dim
    ks = iter(jax.random.split(key, 20))
    sH = 1.0 / (H ** 0.5)
    s2H = 1.0 / ((2 * H) ** 0.5)

    def u(shape, scale):
        return jax.random.uniform(next(ks), shape, jnp.float32, -scale, scale)

    # LSTM biases: init b_ih and b_hh (as in nn.LSTM) and fold their sum into one.
    def lstm(in_dim):
        wih = u((4 * H, in_dim), sH)
        whh = u((4 * H, H), sH)
        b = u((1, 4 * H), sH) + u((1, 4 * H), sH)
        return wih, whh, b

    wih_f, whh_f, b_f = lstm(D)            # encoder forward direction
    wih_r, whh_r, b_r = lstm(D)            # encoder reverse direction
    wz = u((E, 2 * H), s2H)
    bz = u((1, E), s2H)
    wih_d, whh_d, b_d = lstm(E + D)        # decoder LSTM
    wo = u((D, H), sH)
    bo = u((1, D), sH)
    return dict(wih_f=wih_f, whh_f=whh_f, b_f=b_f,
                wih_r=wih_r, whh_r=whh_r, b_r=b_r,
                wz=wz, bz=bz,
                wih_d=wih_d, whh_d=whh_d, b_d=b_d,
                wo=wo, bo=bo)


def reference_forward(x, params, hidden_dim):
    """Plain-JAX replica of the torch forward (p=None), full bidirectional encoder."""
    B, T, D = x.shape
    H = hidden_dim

    def cell(xt, h, c, wih, whh, b):
        g = xt @ wih.T + h @ whh.T + b
        i, f, gg, o = jnp.split(g, 4, axis=-1)
        c = jax.nn.sigmoid(f) * c + jax.nn.sigmoid(i) * jnp.tanh(gg)
        h = jax.nn.sigmoid(o) * jnp.tanh(c)
        return h, c

    h = c = jnp.zeros((B, H), jnp.float32)
    fwd = []
    for t in range(T):
        h, c = cell(x[:, t], h, c, params["wih_f"], params["whh_f"], params["b_f"])
        fwd.append(h)
    h = c = jnp.zeros((B, H), jnp.float32)
    rev = [None] * T
    for t in range(T - 1, -1, -1):
        h, c = cell(x[:, t], h, c, params["wih_r"], params["whh_r"], params["b_r"])
        rev[t] = h
    enc_last = jnp.concatenate([fwd[-1], rev[-1]], axis=-1)
    z = jnp.tanh(enc_last @ params["wz"].T + params["bz"])

    h = c = jnp.zeros((B, H), jnp.float32)
    outs = []
    for t in range(T):
        di = jnp.concatenate([z, x[:, t]], axis=-1)
        h, c = cell(di, h, c, params["wih_d"], params["whh_d"], params["b_d"])
        outs.append(h @ params["wo"].T + params["bo"])
    return jnp.stack(outs, axis=1), z


if __name__ == "__main__":
    B, T, D, E, H = 2, 8, 16, 32, 32  # batch, seq, input_dim, embed_dim, hidden_dim
    key = jax.random.PRNGKey(0)
    kx, kp = jax.random.split(key)
    x = jax.random.normal(kx, (B, T, D), jnp.float32)
    params = init_params(kp, D, E, H)

    out, z = timetable_autoencoder(x, params, hidden_dim=H)
    jax.block_until_ready((out, z))

    ref_out, ref_z = reference_forward(x, params, H)
    assert out.shape == (B, T, D) and z.shape == (B, E)
    assert jnp.allclose(out, ref_out, atol=1e-2, rtol=1e-2), \
        float(jnp.max(jnp.abs(out - ref_out)))
    assert jnp.allclose(z, ref_z, atol=1e-2, rtol=1e-2), \
        float(jnp.max(jnp.abs(z - ref_z)))
    print("KERNEL_OK")
</pallas_src>

<mosaic_0001>
module attributes {stable_mosaic.version = 11 : i64} {
  func.func @timetable_ae_kernel(%arg0: i32, %arg1: memref<8x8x16xf32, #tpu.memory_space<vmem>>, %arg2: memref<16x256xf32, #tpu.memory_space<vmem>>, %arg3: memref<32x128xf32, #tpu.memory_space<vmem>>, %arg4: memref<1x128xf32, #tpu.memory_space<vmem>>, %arg5: memref<16x128xf32, #tpu.memory_space<vmem>>, %arg6: memref<1x128xf32, #tpu.memory_space<vmem>>, %arg7: memref<64x128xf32, #tpu.memory_space<vmem>>, %arg8: memref<1x128xf32, #tpu.memory_space<vmem>>, %arg9: memref<128x128xf32, #tpu.memory_space<vmem>>, %arg10: memref<32x128xf32, #tpu.memory_space<vmem>>, %arg11: memref<1x128xf32, #tpu.memory_space<vmem>>, %arg12: memref<256x128xf32, #tpu.memory_space<vmem>>, %arg13: memref<1x128xf32, #tpu.memory_space<vmem>>, %arg14: memref<8x128xf32, #tpu.memory_space<vmem>>, %arg15: memref<8x128xf32, #tpu.memory_space<vmem>>, %arg16: memref<8x8x128xf32, #tpu.memory_space<vmem>>, %arg17: memref<8x8x128xf32, #tpu.memory_space<vmem>>, %arg18: memref<8x256xf32, #tpu.memory_space<vmem>>) attributes {dimension_semantics = [#tpu.dimension_semantics<parallel>], iteration_bounds = array<i64: 1>, scalar_prefetch = 0 : i64, scratch_operands = 3 : i64, tpu.core_type = #tpu.core_type<tc>, window_params = [{transform_indices = @transform_0, window_bounds = array<i64: 8, 8, 16>}, {pipeline_mode = #tpu.pipeline_mode<synchronous>, transform_indices = @transform_1, window_bounds = array<i64: 16, 256>}, {pipeline_mode = #tpu.pipeline_mode<synchronous>, transform_indices = @transform_2, window_bounds = array<i64: 32, 128>}, {pipeline_mode = #tpu.pipeline_mode<synchronous>, transform_indices = @transform_3, window_bounds = array<i64: 1, 128>}, {pipeline_mode = #tpu.pipeline_mode<synchronous>, transform_indices = @transform_4, window_bounds = array<i64: 16, 128>}, {pipeline_mode = #tpu.pipeline_mode<synchronous>, transform_indices = @transform_5, window_bounds = array<i64: 1, 128>}, {pipeline_mode = #tpu.pipeline_mode<synchronous>, transform_indices = @transform_6, window_bounds = array<i64: 64, 128>}, {pipeline_mode = #tpu.pipeline_mode<synchronous>, transform_indices = @transform_7, window_bounds = array<i64: 1, 128>}, {pipeline_mode = #tpu.pipeline_mode<synchronous>, transform_indices = @transform_8, window_bounds = array<i64: 128, 128>}, {pipeline_mode = #tpu.pipeline_mode<synchronous>, transform_indices = @transform_9, window_bounds = array<i64: 32, 128>}, {pipeline_mode = #tpu.pipeline_mode<synchronous>, transform_indices = @transform_10, window_bounds = array<i64: 1, 128>}, {pipeline_mode = #tpu.pipeline_mode<synchronous>, transform_indices = @transform_11, window_bounds = array<i64: 256, 128>}, {pipeline_mode = #tpu.pipeline_mode<synchronous>, transform_indices = @transform_12, window_bounds = array<i64: 1, 128>}, {transform_indices = @transform_13, window_bounds = array<i64: 8, 128>}, {transform_indices = @transform_14, window_bounds = array<i64: 8, 128>}]} {
    %c0 = arith.constant 0 : index
    %c0_0 = arith.constant 0 : index
    %c0_1 = arith.constant 0 : index
    %0 = vector.load %arg1[%c0, %c0_0, %c0_1] : memref<8x8x16xf32, #tpu.memory_space<vmem>>, vector<8x8x16xf32>
    %cst = arith.constant 0.000000e+00 : f32
    %1 = vector.broadcast %cst : f32 to vector<8x32xf32>
    %cst_2 = arith.constant 0.000000e+00 : f32
    %2 = vector.broadcast %cst_2 : f32 to vector<8x32xf32>
    %3 = vector.shape_cast %0 : vector<8x8x16xf32> to vector<64x16xf32>
    %c0_3 = arith.constant 0 : index
    %c0_4 = arith.constant 0 : index
    %4 = vector.load %arg2[%c0_3, %c0_4] : memref<16x256xf32, #tpu.memory_space<vmem>>, vector<16x256xf32>
    %cst_5 = arith.constant dense<0.000000e+00> : vector<64x256xf32>
    %5 = tpu.matmul %3, %4, %cst_5 {dimension_numbers = #tpu.dot_dimension_numbers<[1], [0], [0], [1], [0, 0, 1, 1], [], []>} : vector<64x16xf32>, vector<16x256xf32>, vector<64x256xf32> -> vector<64x256xf32>
    %6 = vector.shape_cast %5 : vector<64x256xf32> to vector<8x8x256xf32>
    %7 = vector.extract_strided_slice %6 {offsets = [0, 0, 0], sizes = [8, 8, 128], strides = [1, 1, 1]} : vector<8x8x256xf32> to vector<8x8x128xf32>
    %c0_6 = arith.constant 0 : index
    %c0_7 = arith.constant 0 : index
    %8 = vector.load %arg4[%c0_6, %c0_7] : memref<1x128xf32, #tpu.memory_space<vmem>>, vector<1x128xf32>
    %9 = vector.shape_cast %8 : vector<1x128xf32> to vector<1x1x128xf32>
    %10 = vector.broadcast %9 : vector<1x1x128xf32> to vector<8x8x128xf32>
    %11 = arith.addf %7, %10 : vector<8x8x128xf32>
    %c0_8 = arith.constant 0 : index
    %c0_9 = arith.constant 0 : index
    %c0_10 = arith.constant 0 : index
    %12 = vector.load %arg16[%c0_8, %c0_9, %c0_10] : memref<8x8x128xf32, #tpu.memory_space<vmem>>, vector<8x8x128xf32>
    tpu.vector_store %arg16[%c0_8, %c0_9, %c0_10], %11 {strides = array<i32>} : memref<8x8x128xf32, #tpu.memory_space<vmem>>, vector<8x8x128xf32>,
    %13 = vector.extract_strided_slice %6 {offsets = [0, 0, 128], sizes = [8, 8, 128], strides = [1, 1, 1]} : vector<8x8x256xf32> to vector<8x8x128xf32>
    %c0_11 = arith.constant 0 : index
    %c0_12 = arith.constant 0 : index
    %c0_13 = arith.constant 0 : index
    %14 = vector.load %arg17[%c0_11, %c0_12, %c0_13] : memref<8x8x128xf32, #tpu.memory_space<vmem>>, vector<8x8x128xf32>
    tpu.vector_store %arg17[%c0_11, %c0_12, %c0_13], %13 {strides = array<i32>} : memref<8x8x128xf32, #tpu.memory_space<vmem>>, vector<8x8x128xf32>,
    %c0_14 = arith.constant 0 : index
    %c0_15 = arith.constant 0 : index
    %15 = vector.load %arg3[%c0_14, %c0_15] : memref<32x128xf32, #tpu.memory_space<vmem>>, vector<32x128xf32>
    %c0_i32 = arith.constant 0 : i32
    %16 = arith.index_cast %c0_i32 : i32 to index
    %c0_16 = arith.constant 0 : index
    %c0_17 = arith.constant 0 : index
    %17 = vector.load %arg16[%16, %c0_16, %c0_17] : memref<8x8x128xf32, #tpu.memory_space<vmem>>, vector<1x8x128xf32>
    %18 = vector.shape_cast %17 : vector<1x8x128xf32> to vector<8x128xf32>
    %cst_18 = arith.constant dense<0.000000e+00> : vector<8x128xf32>
    %19 = tpu.matmul %1, %15, %cst_18 {dimension_numbers = #tpu.dot_dimension_numbers<[1], [0], [0], [1], [0, 0, 1, 1], [], []>} : vector<8x32xf32>, vector<32x128xf32>, vector<8x128xf32> -> vector<8x128xf32>
    %20 = arith.addf %18, %19 : vector<8x128xf32>
    %21 = arith.negf %20 : vector<8x128xf32>
    %22 = math.exp %21 : vector<8x128xf32>
    %cst_19 = arith.constant 1.000000e+00 : f32
    %23 = vector.broadcast %cst_19 : f32 to vector<8x128xf32>
    %24 = arith.addf %23, %22 : vector<8x128xf32>
    %25 = arith.divf %23, %24 : vector<8x128xf32>
    %26 = vector.extract_strided_slice %25 {offsets = [0, 0], sizes = [8, 32], strides = [1, 1]} : vector<8x128xf32> to vector<8x32xf32>
    %27 = vector.extract_strided_slice %25 {offsets = [0, 32], sizes = [8, 32], strides = [1, 1]} : vector<8x128xf32> to vector<8x32xf32>
    %28 = vector.extract_strided_slice %25 {offsets = [0, 64], sizes = [8, 32], strides = [1, 1]} : vector<8x128xf32> to vector<8x32xf32>
    %cst_20 = arith.constant 2.000000e+00 : f32
    %29 = vector.broadcast %cst_20 : f32 to vector<8x32xf32>
    %30 = arith.mulf %29, %28 : vector<8x32xf32>
    %cst_21 = arith.constant 1.000000e+00 : f32
    %31 = vector.broadcast %cst_21 : f32 to vector<8x32xf32>
    %32 = arith.subf %30, %31 : vector<8x32xf32>
    %33 = vector.extract_strided_slice %25 {offsets = [0, 96], sizes = [8, 32], strides = [1, 1]} : vector<8x128xf32> to vector<8x32xf32>
    %34 = arith.mulf %27, %2 : vector<8x32xf32>
    %35 = arith.mulf %26, %32 : vector<8x32xf32>
    %36 = arith.addf %34, %35 : vector<8x32xf32>
    %37 = math.tanh %36 : vector<8x32xf32>
    %38 = arith.mulf %33, %37 : vector<8x32xf32>
    %c1_i32 = arith.constant 1 : i32
    %39 = arith.index_cast %c1_i32 : i32 to index
    %c0_22 = arith.constant 0 : index
    %c0_23 = arith.constant 0 : index
    %40 = vector.load %arg16[%39, %c0_22, %c0_23] : memref<8x8x128xf32, #tpu.memory_space<vmem>>, vector<1x8x128xf32>
    %41 = vector.shape_cast %40 : vector<1x8x128xf32> to vector<8x128xf32>
    %cst_24 = arith.constant dense<0.000000e+00> : vector<8x128xf32>
    %42 = tpu.matmul %38, %15, %cst_24 {dimension_numbers = #tpu.dot_dimension_numbers<[1], [0], [0], [1], [0, 0, 1, 1], [], []>} : vector<8x32xf32>, vector<32x128xf32>, vector<8x128xf32> -> vector<8x128xf32>
    %43 = arith.addf %41, %42 : vector<8x128xf32>
    %44 = arith.negf %43 : vector<8x128xf32>
    %45 = math.exp %44 : vector<8x128xf32>
    %cst_25 = arith.constant 1.000000e+00 : f32
    %46 = vector.broadcast %cst_25 : f32 to vector<8x128xf32>
    %47 = arith.addf %46, %45 : vector<8x128xf32>
    %48 = arith.divf %46, %47 : vector<8x128xf32>
    %49 = vector.extract_strided_slice %48 {offsets = [0, 0], sizes = [8, 32], strides = [1, 1]} : vector<8x128xf32> to vector<8x32xf32>
    %50 = vector.extract_strided_slice %48 {offsets = [0, 32], sizes = [8, 32], strides = [1, 1]} : vector<8x128xf32> to vector<8x32xf32>
    %51 = vector.extract_strided_slice %48 {offsets = [0, 64], sizes = [8, 32], strides = [1, 1]} : vector<8x128xf32> to vector<8x32xf32>
    %cst_26 = arith.constant 2.000000e+00 : f32
    %52 = vector.broadcast %cst_26 : f32 to vector<8x32xf32>
    %53 = arith.mulf %52, %51 : vector<8x32xf32>
    %cst_27 = arith.constant 1.000000e+00 : f32
    %54 = vector.broadcast %cst_27 : f32 to vector<8x32xf32>
    %55 = arith.subf %53, %54 : vector<8x32xf32>
    %56 = vector.extract_strided_slice %48 {offsets = [0, 96], sizes = [8, 32], strides = [1, 1]} : vector<8x128xf32> to vector<8x32xf32>
    %57 = arith.mulf %50, %36 : vector<8x32xf32>
    %58 = arith.mulf %49, %55 : vector<8x32xf32>
    %59 = arith.addf %57, %58 : vector<8x32xf32>
    %60 = math.tanh %59 : vector<8x32xf32>
    %61 = arith.mulf %56, %60 : vector<8x32xf32>
    %c2_i32 = arith.constant 2 : i32
    %62 = arith.index_cast %c2_i32 : i32 to index
    %c0_28 = arith.constant 0 : index
    %c0_29 = arith.constant 0 : index
    %63 = vector.load %arg16[%62, %c0_28, %c0_29] : memref<8x8x128xf32, #tpu.memory_space<vmem>>, vector<1x8x128xf32>
    %64 = vector.shape_cast %63 : vector<1x8x128xf32> to vector<8x128xf32>
    %cst_30 = arith.constant dense<0.000000e+00> : vector<8x128xf32>
    %65 = tpu.matmul %61, %15, %cst_30 {dimension_numbers = #tpu.dot_dimension_numbers<[1], [0], [0], [1], [0, 0, 1, 1], [], []>} : vector<8x32xf32>, vector<32x128xf32>, vector<8x128xf32> -> vector<8x128xf32>
    %66 = arith.addf %64, %65 : vector<8x128xf32>
    %67 = arith.negf %66 : vector<8x128xf32>
    %68 = math.exp %67 : vector<8x128xf32>
    %cst_31 = arith.constant 1.000000e+00 : f32
    %69 = vector.broadcast %cst_31 : f32 to vector<8x128xf32>
    %70 = arith.addf %69, %68 : vector<8x128xf32>
    %71 = arith.divf %69, %70 : vector<8x128xf32>
    %72 = vector.extract_strided_slice %71 {offsets = [0, 0], sizes = [8, 32], strides = [1, 1]} : vector<8x128xf32> to vector<8x32xf32>
    %73 = vector.extract_strided_slice %71 {offsets = [0, 32], sizes = [8, 32], strides = [1, 1]} : vector<8x128xf32> to vector<8x32xf32>
    %74 = vector.extract_strided_slice %71 {offsets = [0, 64], sizes = [8, 32], strides = [1, 1]} : vector<8x128xf32> to vector<8x32xf32>
    %cst_32 = arith.constant 2.000000e+00 : f32
    %75 = vector.broadcast %cst_32 : f32 to vector<8x32xf32>
    %76 = arith.mulf %75, %74 : vector<8x32xf32>
    %cst_33 = arith.constant 1.000000e+00 : f32
    %77 = vector.broadcast %cst_33 : f32 to vector<8x32xf32>
    %78 = arith.subf %76, %77 : vector<8x32xf32>
    %79 = vector.extract_strided_slice %71 {offsets = [0, 96], sizes = [8, 32], strides = [1, 1]} : vector<8x128xf32> to vector<8x32xf32>
    %80 = arith.mulf %73, %59 : vector<8x32xf32>
    %81 = arith.mulf %72, %78 : vector<8x32xf32>
    %82 = arith.addf %80, %81 : vector<8x32xf32>
    %83 = math.tanh %82 : vector<8x32xf32>
    %84 = arith.mulf %79, %83 : vector<8x32xf32>
    %c3_i32 = arith.constant 3 : i32
    %85 = arith.index_cast %c3_i32 : i32 to index
    %c0_34 = arith.constant 0 : index
    %c0_35 = arith.constant 0 : index
    %86 = vector.load %arg16[%85, %c0_34, %c0_35] : memref<8x8x128xf32, #tpu.memory_space<vmem>>, vector<1x8x128xf32>
    %87 = vector.shape_cast %86 : vector<1x8x128xf32> to vector<8x128xf32>
    %cst_36 = arith.constant dense<0.000000e+00> : vector<8x128xf32>
    %88 = tpu.matmul %84, %15, %cst_36 {dimension_numbers = #tpu.dot_dimension_numbers<[1], [0], [0], [1], [0, 0, 1, 1], [], []>} : vector<8x32xf32>, vector<32x128xf32>, vector<8x128xf32> -> vector<8x128xf32>
    %89 = arith.addf %87, %88 : vector<8x128xf32>
    %90 = arith.negf %89 : vector<8x128xf32>
    %91 = math.exp %90 : vector<8x128xf32>
    %cst_37 = arith.constant 1.000000e+00 : f32
    %92 = vector.broadcast %cst_37 : f32 to vector<8x128xf32>
    %93 = arith.addf %92, %91 : vector<8x128xf32>
    %94 = arith.divf %92, %93 : vector<8x128xf32>
    %95 = vector.extract_strided_slice %94 {offsets = [0, 0], sizes = [8, 32], strides = [1, 1]} : vector<8x128xf32> to vector<8x32xf32>
    %96 = vector.extract_strided_slice %94 {offsets = [0, 32], sizes = [8, 32], strides = [1, 1]} : vector<8x128xf32> to vector<8x32xf32>
    %97 = vector.extract_strided_slice %94 {offsets = [0, 64], sizes = [8, 32], strides = [1, 1]} : vector<8x128xf32> to vector<8x32xf32>
    %cst_38 = arith.constant 2.000000e+00 : f32
    %98 = vector.broadcast %cst_38 : f32 to vector<8x32xf32>
    %99 = arith.mulf %98, %97 : vector<8x32xf32>
    %cst_39 = arith.constant 1.000000e+00 : f32
    %100 = vector.broadcast %cst_39 : f32 to vector<8x32xf32>
    %101 = arith.subf %99, %100 : vector<8x32xf32>
    %102 = vector.extract_strided_slice %94 {offsets = [0, 96], sizes = [8, 32], strides = [1, 1]} : vector<8x128xf32> to vector<8x32xf32>
    %103 = arith.mulf %96, %82 : vector<8x32xf32>
    %104 = arith.mulf %95, %101 : vector<8x32xf32>
    %105 = arith.addf %103, %104 : vector<8x32xf32>
    %106 = math.tanh %105 : vector<8x32xf32>
    %107 = arith.mulf %102, %106 : vector<8x32xf32>
    %c4_i32 = arith.constant 4 : i32
    %108 = arith.index_cast %c4_i32 : i32 to index
    %c0_40 = arith.constant 0 : index
    %c0_41 = arith.constant 0 : index
    %109 = vector.load %arg16[%108, %c0_40, %c0_41] : memref<8x8x128xf32, #tpu.memory_space<vmem>>, vector<1x8x128xf32>
    %110 = vector.shape_cast %109 : vector<1x8x128xf32> to vector<8x128xf32>
    %cst_42 = arith.constant dense<0.000000e+00> : vector<8x128xf32>
    %111 = tpu.matmul %107, %15, %cst_42 {dimension_numbers = #tpu.dot_dimension_numbers<[1], [0], [0], [1], [0, 0, 1, 1], [], []>} : vector<8x32xf32>, vector<32x128xf32>, vector<8x128xf32> -> vector<8x128xf32>
    %112 = arith.addf %110, %111 : vector<8x128xf32>
    %113 = arith.negf %112 : vector<8x128xf32>
    %114 = math.exp %113 : vector<8x128xf32>
    %cst_43 = arith.constant 1.000000e+00 : f32
    %115 = vector.broadcast %cst_43 : f32 to vector<8x128xf32>
    %116 = arith.addf %115, %114 : vector<8x128xf32>
    %117 = arith.divf %115, %116 : vector<8x128xf32>
    %118 = vector.extract_strided_slice %117 {offsets = [0, 0], sizes = [8, 32], strides = [1, 1]} : vector<8x128xf32> to vector<8x32xf32>
    %119 = vector.extract_strided_slice %117 {offsets = [0, 32], sizes = [8, 32], strides = [1, 1]} : vector<8x128xf32> to vector<8x32xf32>
    %120 = vector.extract_strided_slice %117 {offsets = [0, 64], sizes = [8, 32], strides = [1, 1]} : vector<8x128xf32> to vector<8x32xf32>
    %cst_44 = arith.constant 2.000000e+00 : f32
    %121 = vector.broadcast %cst_44 : f32 to vector<8x32xf32>
    %122 = arith.mulf %121, %120 : vector<8x32xf32>
    %cst_45 = arith.constant 1.000000e+00 : f32
    %123 = vector.broadcast %cst_45 : f32 to vector<8x32xf32>
    %124 = arith.subf %122, %123 : vector<8x32xf32>
    %125 = vector.extract_strided_slice %117 {offsets = [0, 96], sizes = [8, 32], strides = [1, 1]} : vector<8x128xf32> to vector<8x32xf32>
    %126 = arith.mulf %119, %105 : vector<8x32xf32>
    %127 = arith.mulf %118, %124 : vector<8x32xf32>
    %128 = arith.addf %126, %127 : vector<8x32xf32>
    %129 = math.tanh %128 : vector<8x32xf32>
    %130 = arith.mulf %125, %129 : vector<8x32xf32>
    %c5_i32 = arith.constant 5 : i32
    %131 = arith.index_cast %c5_i32 : i32 to index
    %c0_46 = arith.constant 0 : index
    %c0_47 = arith.constant 0 : index
    %132 = vector.load %arg16[%131, %c0_46, %c0_47] : memref<8x8x128xf32, #tpu.memory_space<vmem>>, vector<1x8x128xf32>
    %133 = vector.shape_cast %132 : vector<1x8x128xf32> to vector<8x128xf32>
    %cst_48 = arith.constant dense<0.000000e+00> : vector<8x128xf32>
    %134 = tpu.matmul %130, %15, %cst_48 {dimension_numbers = #tpu.dot_dimension_numbers<[1], [0], [0], [1], [0, 0, 1, 1], [], []>} : vector<8x32xf32>, vector<32x128xf32>, vector<8x128xf32> -> vector<8x128xf32>
    %135 = arith.addf %133, %134 : vector<8x128xf32>
    %136 = arith.negf %135 : vector<8x128xf32>
    %137 = math.exp %136 : vector<8x128xf32>
    %cst_49 = arith.constant 1.000000e+00 : f32
    %138 = vector.broadcast %cst_49 : f32 to vector<8x128xf32>
    %139 = arith.addf %138, %137 : vector<8x128xf32>
    %140 = arith.divf %138, %139 : vector<8x128xf32>
    %141 = vector.extract_strided_slice %140 {offsets = [0, 0], sizes = [8, 32], strides = [1, 1]} : vector<8x128xf32> to vector<8x32xf32>
    %142 = vector.extract_strided_slice %140 {offsets = [0, 32], sizes = [8, 32], strides = [1, 1]} : vector<8x128xf32> to vector<8x32xf32>
    %143 = vector.extract_strided_slice %140 {offsets = [0, 64], sizes = [8, 32], strides = [1, 1]} : vector<8x128xf32> to vector<8x32xf32>
    %cst_50 = arith.constant 2.000000e+00 : f32
    %144 = vector.broadcast %cst_50 : f32 to vector<8x32xf32>
    %145 = arith.mulf %144, %143 : vector<8x32xf32>
    %cst_51 = arith.constant 1.000000e+00 : f32
    %146 = vector.broadcast %cst_51 : f32 to vector<8x32xf32>
    %147 = arith.subf %145, %146 : vector<8x32xf32>
    %148 = vector.extract_strided_slice %140 {offsets = [0, 96], sizes = [8, 32], strides = [1, 1]} : vector<8x128xf32> to vector<8x32xf32>
    %149 = arith.mulf %142, %128 : vector<8x32xf32>
    %150 = arith.mulf %141, %147 : vector<8x32xf32>
    %151 = arith.addf %149, %150 : vector<8x32xf32>
    %152 = math.tanh %151 : vector<8x32xf32>
    %153 = arith.mulf %148, %152 : vector<8x32xf32>
    %c6_i32 = arith.constant 6 : i32
    %154 = arith.index_cast %c6_i32 : i32 to index
    %c0_52 = arith.constant 0 : index
    %c0_53 = arith.constant 0 : index
    %155 = vector.load %arg16[%154, %c0_52, %c0_53] : memref<8x8x128xf32, #tpu.memory_space<vmem>>, vector<1x8x128xf32>
    %156 = vector.shape_cast %155 : vector<1x8x128xf32> to vector<8x128xf32>
    %cst_54 = arith.constant dense<0.000000e+00> : vector<8x128xf32>
    %157 = tpu.matmul %153, %15, %cst_54 {dimension_numbers = #tpu.dot_dimension_numbers<[1], [0], [0], [1], [0, 0, 1, 1], [], []>} : vector<8x32xf32>, vector<32x128xf32>, vector<8x128xf32> -> vector<8x128xf32>
    %158 = arith.addf %156, %157 : vector<8x128xf32>
    %159 = arith.negf %158 : vector<8x128xf32>
    %160 = math.exp %159 : vector<8x128xf32>
    %cst_55 = arith.constant 1.000000e+00 : f32
    %161 = vector.broadcast %cst_55 : f32 to vector<8x128xf32>
    %162 = arith.addf %161, %160 : vector<8x128xf32>
    %163 = arith.divf %161, %162 : vector<8x128xf32>
    %164 = vector.extract_strided_slice %163 {offsets = [0, 0], sizes = [8, 32], strides = [1, 1]} : vector<8x128xf32> to vector<8x32xf32>
    %165 = vector.extract_strided_slice %163 {offsets = [0, 32], sizes = [8, 32], strides = [1, 1]} : vector<8x128xf32> to vector<8x32xf32>
    %166 = vector.extract_strided_slice %163 {offsets = [0, 64], sizes = [8, 32], strides = [1, 1]} : vector<8x128xf32> to vector<8x32xf32>
    %cst_56 = arith.constant 2.000000e+00 : f32
    %167 = vector.broadcast %cst_56 : f32 to vector<8x32xf32>
    %168 = arith.mulf %167, %166 : vector<8x32xf32>
    %cst_57 = arith.constant 1.000000e+00 : f32
    %169 = vector.broadcast %cst_57 : f32 to vector<8x32xf32>
    %170 = arith.subf %168, %169 : vector<8x32xf32>
    %171 = vector.extract_strided_slice %163 {offsets = [0, 96], sizes = [8, 32], strides = [1, 1]} : vector<8x128xf32> to vector<8x32xf32>
    %172 = arith.mulf %165, %151 : vector<8x32xf32>
    %173 = arith.mulf %164, %170 : vector<8x32xf32>
    %174 = arith.addf %172, %173 : vector<8x32xf32>
    %175 = math.tanh %174 : vector<8x32xf32>
    %176 = arith.mulf %171, %175 : vector<8x32xf32>
    %c7_i32 = arith.constant 7 : i32
    %177 = arith.index_cast %c7_i32 : i32 to index
    %c0_58 = arith.constant 0 : index
    %c0_59 = arith.constant 0 : index
    %178 = vector.load %arg16[%177, %c0_58, %c0_59] : memref<8x8x128xf32, #tpu.memory_space<vmem>>, vector<1x8x128xf32>
    %179 = vector.shape_cast %178 : vector<1x8x128xf32> to vector<8x128xf32>
    %cst_60 = arith.constant dense<0.000000e+00> : vector<8x128xf32>
    %180 = tpu.matmul %176, %15, %cst_60 {dimension_numbers = #tpu.dot_dimension_numbers<[1], [0], [0], [1], [0, 0, 1, 1], [], []>} : vector<8x32xf32>, vector<32x128xf32>, vector<8x128xf32> -> vector<8x128xf32>
    %181 = arith.addf %179, %180 : vector<8x128xf32>
    %182 = arith.negf %181 : vector<8x128xf32>
    %183 = math.exp %182 : vector<8x128xf32>
    %cst_61 = arith.constant 1.000000e+00 : f32
    %184 = vector.broadcast %cst_61 : f32 to vector<8x128xf32>
    %185 = arith.addf %184, %183 : vector<8x128xf32>
    %186 = arith.divf %184, %185 : vector<8x128xf32>
    %187 = vector.extract_strided_slice %186 {offsets = [0, 0], sizes = [8, 32], strides = [1, 1]} : vector<8x128xf32> to vector<8x32xf32>
    %188 = vector.extract_strided_slice %186 {offsets = [0, 32], sizes = [8, 32], strides = [1, 1]} : vector<8x128xf32> to vector<8x32xf32>
    %189 = vector.extract_strided_slice %186 {offsets = [0, 64], sizes = [8, 32], strides = [1, 1]} : vector<8x128xf32> to vector<8x32xf32>
    %cst_62 = arith.constant 2.000000e+00 : f32
    %190 = vector.broadcast %cst_62 : f32 to vector<8x32xf32>
    %191 = arith.mulf %190, %189 : vector<8x32xf32>
    %cst_63 = arith.constant 1.000000e+00 : f32
    %192 = vector.broadcast %cst_63 : f32 to vector<8x32xf32>
    %193 = arith.subf %191, %192 : vector<8x32xf32>
    %194 = vector.extract_strided_slice %186 {offsets = [0, 96], sizes = [8, 32], strides = [1, 1]} : vector<8x128xf32> to vector<8x32xf32>
    %195 = arith.mulf %188, %174 : vector<8x32xf32>
    %196 = arith.mulf %187, %193 : vector<8x32xf32>
    %197 = arith.addf %195, %196 : vector<8x32xf32>
    %198 = math.tanh %197 : vector<8x32xf32>
    %199 = arith.mulf %194, %198 : vector<8x32xf32>
    %c8_i32 = arith.constant 8 : i32
    %200 = vector.extract_strided_slice %0 {offsets = [7, 0, 0], sizes = [1, 8, 16], strides = [1, 1, 1]} : vector<8x8x16xf32> to vector<1x8x16xf32>
    %201 = vector.shape_cast %200 : vector<1x8x16xf32> to vector<8x16xf32>
    %c0_64 = arith.constant 0 : index
    %c0_65 = arith.constant 0 : index
    %202 = vector.load %arg5[%c0_64, %c0_65] : memref<16x128xf32, #tpu.memory_space<vmem>>, vector<16x128xf32>
    %cst_66 = arith.constant dense<0.000000e+00> : vector<8x128xf32>
    %203 = tpu.matmul %201, %202, %cst_66 {dimension_numbers = #tpu.dot_dimension_numbers<[1], [0], [0], [1], [0, 0, 1, 1], [], []>} : vector<8x16xf32>, vector<16x128xf32>, vector<8x128xf32> -> vector<8x128xf32>
    %c0_67 = arith.constant 0 : index
    %c0_68 = arith.constant 0 : index
    %204 = vector.load %arg6[%c0_67, %c0_68] : memref<1x128xf32, #tpu.memory_space<vmem>>, vector<1x128xf32>
    %205 = vector.broadcast %204 : vector<1x128xf32> to vector<8x128xf32>
    %206 = arith.addf %203, %205 : vector<8x128xf32>
    %207 = arith.negf %206 : vector<8x128xf32>
    %208 = math.exp %207 : vector<8x128xf32>
    %cst_69 = arith.constant 1.000000e+00 : f32
    %209 = vector.broadcast %cst_69 : f32 to vector<8x128xf32>
    %210 = arith.addf %209, %208 : vector<8x128xf32>
    %211 = arith.divf %209, %210 : vector<8x128xf32>
    %212 = vector.extract_strided_slice %211 {offsets = [0, 0], sizes = [8, 32], strides = [1, 1]} : vector<8x128xf32> to vector<8x32xf32>
    %213 = vector.extract_strided_slice %211 {offsets = [0, 32], sizes = [8, 32], strides = [1, 1]} : vector<8x128xf32> to vector<8x32xf32>
    %214 = vector.extract_strided_slice %211 {offsets = [0, 64], sizes = [8, 32], strides = [1, 1]} : vector<8x128xf32> to vector<8x32xf32>
    %cst_70 = arith.constant 2.000000e+00 : f32
    %215 = vector.broadcast %cst_70 : f32 to vector<8x32xf32>
    %216 = arith.mulf %215, %214 : vector<8x32xf32>
    %cst_71 = arith.constant 1.000000e+00 : f32
    %217 = vector.broadcast %cst_71 : f32 to vector<8x32xf32>
    %218 = arith.subf %216, %217 : vector<8x32xf32>
    %219 = vector.extract_strided_slice %211 {offsets = [0, 96], sizes = [8, 32], strides = [1, 1]} : vector<8x128xf32> to vector<8x32xf32>
    %220 = arith.mulf %213, %2 : vector<8x32xf32>
    %221 = arith.mulf %212, %218 : vector<8x32xf32>
    %222 = arith.addf %220, %221 : vector<8x32xf32>
    %223 = math.tanh %222 : vector<8x32xf32>
    %224 = arith.mulf %219, %223 : vector<8x32xf32>
    %c0_72 = arith.constant 0 : index
    %c0_73 = arith.constant 0 : index
    %225 = vector.load %arg7[%c0_72, %c0_73] : memref<64x128xf32, #tpu.memory_space<vmem>>, vector<64x128xf32>
    %226 = vector.extract_strided_slice %225 {offsets = [0, 0], sizes = [32, 128], strides = [1, 1]} : vector<64x128xf32> to vector<32x128xf32>
    %cst_74 = arith.constant dense<0.000000e+00> : vector<8x128xf32>
    %227 = tpu.matmul %199, %226, %cst_74 {dimension_numbers = #tpu.dot_dimension_numbers<[1], [0], [0], [1], [0, 0, 1, 1], [], []>} : vector<8x32xf32>, vector<32x128xf32>, vector<8x128xf32> -> vector<8x128xf32>
    %228 = vector.extract_strided_slice %225 {offsets = [32, 0], sizes = [32, 128], strides = [1, 1]} : vector<64x128xf32> to vector<32x128xf32>
    %cst_75 = arith.constant dense<0.000000e+00> : vector<8x128xf32>
    %229 = tpu.matmul %224, %228, %cst_75 {dimension_numbers = #tpu.dot_dimension_numbers<[1], [0], [0], [1], [0, 0, 1, 1], [], []>} : vector<8x32xf32>, vector<32x128xf32>, vector<8x128xf32> -> vector<8x128xf32>
    %230 = arith.addf %227, %229 : vector<8x128xf32>
    %c0_76 = arith.constant 0 : index
    %c0_77 = arith.constant 0 : index
    %231 = vector.load %arg8[%c0_76, %c0_77] : memref<1x128xf32, #tpu.memory_space<vmem>>, vector<1x128xf32>
    %232 = vector.broadcast %231 : vector<1x128xf32> to vector<8x128xf32>
    %233 = arith.addf %230, %232 : vector<8x128xf32>
    %234 = math.tanh %233 : vector<8x128xf32>
    %c0_78 = arith.constant 0 : index
    %c0_79 = arith.constant 0 : index
    %235 = vector.load %arg15[%c0_78, %c0_79] : memref<8x128xf32, #tpu.memory_space<vmem>>, vector<8x128xf32>
    tpu.vector_store %arg15[%c0_78, %c0_79], %234 {strides = array<i32>} : memref<8x128xf32, #tpu.memory_space<vmem>>, vector<8x128xf32>,
    %c0_80 = arith.constant 0 : index
    %c0_81 = arith.constant 0 : index
    %236 = vector.load %arg9[%c0_80, %c0_81] : memref<128x128xf32, #tpu.memory_space<vmem>>, vector<128x128xf32>
    %cst_82 = arith.constant dense<0.000000e+00> : vector<8x128xf32>
    %237 = tpu.matmul %234, %236, %cst_82 {dimension_numbers = #tpu.dot_dimension_numbers<[1], [0], [0], [1], [0, 0, 1, 1], [], []>} : vector<8x128xf32>, vector<128x128xf32>, vector<8x128xf32> -> vector<8x128xf32>
    %c0_83 = arith.constant 0 : index
    %c0_84 = arith.constant 0 : index
    %238 = vector.load %arg11[%c0_83, %c0_84] : memref<1x128xf32, #tpu.memory_space<vmem>>, vector<1x128xf32>
    %239 = vector.broadcast %238 : vector<1x128xf32> to vector<8x128xf32>
    %240 = arith.addf %237, %239 : vector<8x128xf32>
    %c0_85 = arith.constant 0 : index
    %c0_86 = arith.constant 0 : index
    %241 = vector.load %arg10[%c0_85, %c0_86] : memref<32x128xf32, #tpu.memory_space<vmem>>, vector<32x128xf32>
    %c0_87 = arith.constant 0 : index
    %c0_88 = arith.constant 0 : index
    %c0_89 = arith.constant 0 : index
    %242 = vector.load %arg17[%c0_87, %c0_88, %c0_89] : memref<8x8x128xf32, #tpu.memory_space<vmem>>, vector<1x8x128xf32>
    %243 = vector.shape_cast %242 : vector<1x8x128xf32> to vector<8x128xf32>
    %244 = arith.addf %243, %240 : vector<8x128xf32>
    %cst_90 = arith.constant dense<0.000000e+00> : vector<8x128xf32>
    %245 = tpu.matmul %1, %241, %cst_90 {dimension_numbers = #tpu.dot_dimension_numbers<[1], [0], [0], [1], [0, 0, 1, 1], [], []>} : vector<8x32xf32>, vector<32x128xf32>, vector<8x128xf32> -> vector<8x128xf32>
    %246 = arith.addf %244, %245 : vector<8x128xf32>
    %247 = arith.negf %246 : vector<8x128xf32>
    %248 = math.exp %247 : vector<8x128xf32>
    %cst_91 = arith.constant 1.000000e+00 : f32
    %249 = vector.broadcast %cst_91 : f32 to vector<8x128xf32>
    %250 = arith.addf %249, %248 : vector<8x128xf32>
    %251 = arith.divf %249, %250 : vector<8x128xf32>
    %252 = vector.extract_strided_slice %251 {offsets = [0, 0], sizes = [8, 32], strides = [1, 1]} : vector<8x128xf32> to vector<8x32xf32>
    %253 = vector.extract_strided_slice %251 {offsets = [0, 32], sizes = [8, 32], strides = [1, 1]} : vector<8x128xf32> to vector<8x32xf32>
    %254 = vector.extract_strided_slice %251 {offsets = [0, 64], sizes = [8, 32], strides = [1, 1]} : vector<8x128xf32> to vector<8x32xf32>
    %cst_92 = arith.constant 2.000000e+00 : f32
    %255 = vector.broadcast %cst_92 : f32 to vector<8x32xf32>
    %256 = arith.mulf %255, %254 : vector<8x32xf32>
    %cst_93 = arith.constant 1.000000e+00 : f32
    %257 = vector.broadcast %cst_93 : f32 to vector<8x32xf32>
    %258 = arith.subf %256, %257 : vector<8x32xf32>
    %259 = vector.extract_strided_slice %251 {offsets = [0, 96], sizes = [8, 32], strides = [1, 1]} : vector<8x128xf32> to vector<8x32xf32>
    %260 = arith.mulf %253, %2 : vector<8x32xf32>
    %261 = arith.mulf %252, %258 : vector<8x32xf32>
    %262 = arith.addf %260, %261 : vector<8x32xf32>
    %263 = math.tanh %262 : vector<8x32xf32>
    %264 = arith.mulf %259, %263 : vector<8x32xf32>
    %c0_94 = arith.constant 0 : index
    %c0_95 = arith.constant 0 : index
    %265 = vector.load %arg18[%c0_94, %c0_95] : memref<8x256xf32, #tpu.memory_space<vmem>>, vector<8x32xf32>
    tpu.vector_store %arg18[%c0_94, %c0_95], %264 {strides = array<i32>} : memref<8x256xf32, #tpu.memory_space<vmem>>, vector<8x32xf32>,
    %c1 = arith.constant 1 : index
    %c0_96 = arith.constant 0 : index
    %c0_97 = arith.constant 0 : index
    %266 = vector.load %arg17[%c1, %c0_96, %c0_97] : memref<8x8x128xf32, #tpu.memory_space<vmem>>, vector<1x8x128xf32>
    %267 = vector.shape_cast %266 : vector<1x8x128xf32> to vector<8x128xf32>
    %268 = arith.addf %267, %240 : vector<8x128xf32>
    %cst_98 = arith.constant dense<0.000000e+00> : vector<8x128xf32>
    %269 = tpu.matmul %264, %241, %cst_98 {dimension_numbers = #tpu.dot_dimension_numbers<[1], [0], [0], [1], [0, 0, 1, 1], [], []>} : vector<8x32xf32>, vector<32x128xf32>, vector<8x128xf32> -> vector<8x128xf32>
    %270 = arith.addf %268, %269 : vector<8x128xf32>
    %271 = arith.negf %270 : vector<8x128xf32>
    %272 = math.exp %271 : vector<8x128xf32>
    %cst_99 = arith.constant 1.000000e+00 : f32
    %273 = vector.broadcast %cst_99 : f32 to vector<8x128xf32>
    %274 = arith.addf %273, %272 : vector<8x128xf32>
    %275 = arith.divf %273, %274 : vector<8x128xf32>
    %276 = vector.extract_strided_slice %275 {offsets = [0, 0], sizes = [8, 32], strides = [1, 1]} : vector<8x128xf32> to vector<8x32xf32>
    %277 = vector.extract_strided_slice %275 {offsets = [0, 32], sizes = [8, 32], strides = [1, 1]} : vector<8x128xf32> to vector<8x32xf32>
    %278 = vector.extract_strided_slice %275 {offsets = [0, 64], sizes = [8, 32], strides = [1, 1]} : vector<8x128xf32> to vector<8x32xf32>
    %cst_100 = arith.constant 2.000000e+00 : f32
    %279 = vector.broadcast %cst_100 : f32 to vector<8x32xf32>
    %280 = arith.mulf %279, %278 : vector<8x32xf32>
    %cst_101 = arith.constant 1.000000e+00 : f32
    %281 = vector.broadcast %cst_101 : f32 to vector<8x32xf32>
    %282 = arith.subf %280, %281 : vector<8x32xf32>
    %283 = vector.extract_strided_slice %275 {offsets = [0, 96], sizes = [8, 32], strides = [1, 1]} : vector<8x128xf32> to vector<8x32xf32>
    %284 = arith.mulf %277, %262 : vector<8x32xf32>
    %285 = arith.mulf %276, %282 : vector<8x32xf32>
    %286 = arith.addf %284, %285 : vector<8x32xf32>
    %287 = math.tanh %286 : vector<8x32xf32>
    %288 = arith.mulf %283, %287 : vector<8x32xf32>
    %c0_102 = arith.constant 0 : index
    %c32 = arith.constant 32 : index
    %289 = vector.load %arg18[%c0_102, %c32] : memref<8x256xf32, #tpu.memory_space<vmem>>, vector<8x32xf32>
    tpu.vector_store %arg18[%c0_102, %c32], %288 {strides = array<i32>} : memref<8x256xf32, #tpu.memory_space<vmem>>, vector<8x32xf32>,
    %c2 = arith.constant 2 : index
    %c0_103 = arith.constant 0 : index
    %c0_104 = arith.constant 0 : index
    %290 = vector.load %arg17[%c2, %c0_103, %c0_104] : memref<8x8x128xf32, #tpu.memory_space<vmem>>, vector<1x8x128xf32>
    %291 = vector.shape_cast %290 : vector<1x8x128xf32> to vector<8x128xf32>
    %292 = arith.addf %291, %240 : vector<8x128xf32>
    %cst_105 = arith.constant dense<0.000000e+00> : vector<8x128xf32>
    %293 = tpu.matmul %288, %241, %cst_105 {dimension_numbers = #tpu.dot_dimension_numbers<[1], [0], [0], [1], [0, 0, 1, 1], [], []>} : vector<8x32xf32>, vector<32x128xf32>, vector<8x128xf32> -> vector<8x128xf32>
    %294 = arith.addf %292, %293 : vector<8x128xf32>
    %295 = arith.negf %294 : vector<8x128xf32>
    %296 = math.exp %295 : vector<8x128xf32>
    %cst_106 = arith.constant 1.000000e+00 : f32
    %297 = vector.broadcast %cst_106 : f32 to vector<8x128xf32>
    %298 = arith.addf %297, %296 : vector<8x128xf32>
    %299 = arith.divf %297, %298 : vector<8x128xf32>
    %300 = vector.extract_strided_slice %299 {offsets = [0, 0], sizes = [8, 32], strides = [1, 1]} : vector<8x128xf32> to vector<8x32xf32>
    %301 = vector.extract_strided_slice %299 {offsets = [0, 32], sizes = [8, 32], strides = [1, 1]} : vector<8x128xf32> to vector<8x32xf32>
    %302 = vector.extract_strided_slice %299 {offsets = [0, 64], sizes = [8, 32], strides = [1, 1]} : vector<8x128xf32> to vector<8x32xf32>
    %cst_107 = arith.constant 2.000000e+00 : f32
    %303 = vector.broadcast %cst_107 : f32 to vector<8x32xf32>
    %304 = arith.mulf %303, %302 : vector<8x32xf32>
    %cst_108 = arith.constant 1.000000e+00 : f32
    %305 = vector.broadcast %cst_108 : f32 to vector<8x32xf32>
    %306 = arith.subf %304, %305 : vector<8x32xf32>
    %307 = vector.extract_strided_slice %299 {offsets = [0, 96], sizes = [8, 32], strides = [1, 1]} : vector<8x128xf32> to vector<8x32xf32>
    %308 = arith.mulf %301, %286 : vector<8x32xf32>
    %309 = arith.mulf %300, %306 : vector<8x32xf32>
    %310 = arith.addf %308, %309 : vector<8x32xf32>
    %311 = math.tanh %310 : vector<8x32xf32>
    %312 = arith.mulf %307, %311 : vector<8x32xf32>
    %c0_109 = arith.constant 0 : index
    %c64 = arith.constant 64 : index
    %313 = vector.load %arg18[%c0_109, %c64] : memref<8x256xf32, #tpu.memory_space<vmem>>, vector<8x32xf32>
    tpu.vector_store %arg18[%c0_109, %c64], %312 {strides = array<i32>} : memref<8x256xf32, #tpu.memory_space<vmem>>, vector<8x32xf32>,
    %c3 = arith.constant 3 : index
    %c0_110 = arith.constant 0 : index
    %c0_111 = arith.constant 0 : index
    %314 = vector.load %arg17[%c3, %c0_110, %c0_111] : memref<8x8x128xf32, #tpu.memory_space<vmem>>, vector<1x8x128xf32>
    %315 = vector.shape_cast %314 : vector<1x8x128xf32> to vector<8x128xf32>
    %316 = arith.addf %315, %240 : vector<8x128xf32>
    %cst_112 = arith.constant dense<0.000000e+00> : vector<8x128xf32>
    %317 = tpu.matmul %312, %241, %cst_112 {dimension_numbers = #tpu.dot_dimension_numbers<[1], [0], [0], [1], [0, 0, 1, 1], [], []>} : vector<8x32xf32>, vector<32x128xf32>, vector<8x128xf32> -> vector<8x128xf32>
    %318 = arith.addf %316, %317 : vector<8x128xf32>
    %319 = arith.negf %318 : vector<8x128xf32>
    %320 = math.exp %319 : vector<8x128xf32>
    %cst_113 = arith.constant 1.000000e+00 : f32
    %321 = vector.broadcast %cst_113 : f32 to vector<8x128xf32>
    %322 = arith.addf %321, %320 : vector<8x128xf32>
    %323 = arith.divf %321, %322 : vector<8x128xf32>
    %324 = vector.extract_strided_slice %323 {offsets = [0, 0], sizes = [8, 32], strides = [1, 1]} : vector<8x128xf32> to vector<8x32xf32>
    %325 = vector.extract_strided_slice %323 {offsets = [0, 32], sizes = [8, 32], strides = [1, 1]} : vector<8x128xf32> to vector<8x32xf32>
    %326 = vector.extract_strided_slice %323 {offsets = [0, 64], sizes = [8, 32], strides = [1, 1]} : vector<8x128xf32> to vector<8x32xf32>
    %cst_114 = arith.constant 2.000000e+00 : f32
    %327 = vector.broadcast %cst_114 : f32 to vector<8x32xf32>
    %328 = arith.mulf %327, %326 : vector<8x32xf32>
    %cst_115 = arith.constant 1.000000e+00 : f32
    %329 = vector.broadcast %cst_115 : f32 to vector<8x32xf32>
    %330 = arith.subf %328, %329 : vector<8x32xf32>
    %331 = vector.extract_strided_slice %323 {offsets = [0, 96], sizes = [8, 32], strides = [1, 1]} : vector<8x128xf32> to vector<8x32xf32>
    %332 = arith.mulf %325, %310 : vector<8x32xf32>
    %333 = arith.mulf %324, %330 : vector<8x32xf32>
    %334 = arith.addf %332, %333 : vector<8x32xf32>
    %335 = math.tanh %334 : vector<8x32xf32>
    %336 = arith.mulf %331, %335 : vector<8x32xf32>
    %c0_116 = arith.constant 0 : index
    %c96 = arith.constant 96 : index
    %337 = vector.load %arg18[%c0_116, %c96] : memref<8x256xf32, #tpu.memory_space<vmem>>, vector<8x32xf32>
    tpu.vector_store %arg18[%c0_116, %c96], %336 {strides = array<i32>} : memref<8x256xf32, #tpu.memory_space<vmem>>, vector<8x32xf32>,
    %c4 = arith.constant 4 : index
    %c0_117 = arith.constant 0 : index
    %c0_118 = arith.constant 0 : index
    %338 = vector.load %arg17[%c4, %c0_117, %c0_118] : memref<8x8x128xf32, #tpu.memory_space<vmem>>, vector<1x8x128xf32>
    %339 = vector.shape_cast %338 : vector<1x8x128xf32> to vector<8x128xf32>
    %340 = arith.addf %339, %240 : vector<8x128xf32>
    %cst_119 = arith.constant dense<0.000000e+00> : vector<8x128xf32>
    %341 = tpu.matmul %336, %241, %cst_119 {dimension_numbers = #tpu.dot_dimension_numbers<[1], [0], [0], [1], [0, 0, 1, 1], [], []>} : vector<8x32xf32>, vector<32x128xf32>, vector<8x128xf32> -> vector<8x128xf32>
    %342 = arith.addf %340, %341 : vector<8x128xf32>
    %343 = arith.negf %342 : vector<8x128xf32>
    %344 = math.exp %343 : vector<8x128xf32>
    %cst_120 = arith.constant 1.000000e+00 : f32
    %345 = vector.broadcast %cst_120 : f32 to vector<8x128xf32>
    %346 = arith.addf %345, %344 : vector<8x128xf32>
    %347 = arith.divf %345, %346 : vector<8x128xf32>
    %348 = vector.extract_strided_slice %347 {offsets = [0, 0], sizes = [8, 32], strides = [1, 1]} : vector<8x128xf32> to vector<8x32xf32>
    %349 = vector.extract_strided_slice %347 {offsets = [0, 32], sizes = [8, 32], strides = [1, 1]} : vector<8x128xf32> to vector<8x32xf32>
    %350 = vector.extract_strided_slice %347 {offsets = [0, 64], sizes = [8, 32], strides = [1, 1]} : vector<8x128xf32> to vector<8x32xf32>
    %cst_121 = arith.constant 2.000000e+00 : f32
    %351 = vector.broadcast %cst_121 : f32 to vector<8x32xf32>
    %352 = arith.mulf %351, %350 : vector<8x32xf32>
    %cst_122 = arith.constant 1.000000e+00 : f32
    %353 = vector.broadcast %cst_122 : f32 to vector<8x32xf32>
    %354 = arith.subf %352, %353 : vector<8x32xf32>
    %355 = vector.extract_strided_slice %347 {offsets = [0, 96], sizes = [8, 32], strides = [1, 1]} : vector<8x128xf32> to vector<8x32xf32>
    %356 = arith.mulf %349, %334 : vector<8x32xf32>
    %357 = arith.mulf %348, %354 : vector<8x32xf32>
    %358 = arith.addf %356, %357 : vector<8x32xf32>
    %359 = math.tanh %358 : vector<8x32xf32>
    %360 = arith.mulf %355, %359 : vector<8x32xf32>
    %c0_123 = arith.constant 0 : index
    %c128 = arith.constant 128 : index
    %361 = vector.load %arg18[%c0_123, %c128] : memref<8x256xf32, #tpu.memory_space<vmem>>, vector<8x32xf32>
    tpu.vector_store %arg18[%c0_123, %c128], %360 {strides = array<i32>} : memref<8x256xf32, #tpu.memory_space<vmem>>, vector<8x32xf32>,
    %c5 = arith.constant 5 : index
    %c0_124 = arith.constant 0 : index
    %c0_125 = arith.constant 0 : index
    %362 = vector.load %arg17[%c5, %c0_124, %c0_125] : memref<8x8x128xf32, #tpu.memory_space<vmem>>, vector<1x8x128xf32>
    %363 = vector.shape_cast %362 : vector<1x8x128xf32> to vector<8x128xf32>
    %364 = arith.addf %363, %240 : vector<8x128xf32>
    %cst_126 = arith.constant dense<0.000000e+00> : vector<8x128xf32>
    %365 = tpu.matmul %360, %241, %cst_126 {dimension_numbers = #tpu.dot_dimension_numbers<[1], [0], [0], [1], [0, 0, 1, 1], [], []>} : vector<8x32xf32>, vector<32x128xf32>, vector<8x128xf32> -> vector<8x128xf32>
    %366 = arith.addf %364, %365 : vector<8x128xf32>
    %367 = arith.negf %366 : vector<8x128xf32>
    %368 = math.exp %367 : vector<8x128xf32>
    %cst_127 = arith.constant 1.000000e+00 : f32
    %369 = vector.broadcast %cst_127 : f32 to vector<8x128xf32>
    %370 = arith.addf %369, %368 : vector<8x128xf32>
    %371 = arith.divf %369, %370 : vector<8x128xf32>
    %372 = vector.extract_strided_slice %371 {offsets = [0, 0], sizes = [8, 32], strides = [1, 1]} : vector<8x128xf32> to vector<8x32xf32>
    %373 = vector.extract_strided_slice %371 {offsets = [0, 32], sizes = [8, 32], strides = [1, 1]} : vector<8x128xf32> to vector<8x32xf32>
    %374 = vector.extract_strided_slice %371 {offsets = [0, 64], sizes = [8, 32], strides = [1, 1]} : vector<8x128xf32> to vector<8x32xf32>
    %cst_128 = arith.constant 2.000000e+00 : f32
    %375 = vector.broadcast %cst_128 : f32 to vector<8x32xf32>
    %376 = arith.mulf %375, %374 : vector<8x32xf32>
    %cst_129 = arith.constant 1.000000e+00 : f32
    %377 = vector.broadcast %cst_129 : f32 to vector<8x32xf32>
    %378 = arith.subf %376, %377 : vector<8x32xf32>
    %379 = vector.extract_strided_slice %371 {offsets = [0, 96], sizes = [8, 32], strides = [1, 1]} : vector<8x128xf32> to vector<8x32xf32>
    %380 = arith.mulf %373, %358 : vector<8x32xf32>
    %381 = arith.mulf %372, %378 : vector<8x32xf32>
    %382 = arith.addf %380, %381 : vector<8x32xf32>
    %383 = math.tanh %382 : vector<8x32xf32>
    %384 = arith.mulf %379, %383 : vector<8x32xf32>
    %c0_130 = arith.constant 0 : index
    %c160 = arith.constant 160 : index
    %385 = vector.load %arg18[%c0_130, %c160] : memref<8x256xf32, #tpu.memory_space<vmem>>, vector<8x32xf32>
    tpu.vector_store %arg18[%c0_130, %c160], %384 {strides = array<i32>} : memref<8x256xf32, #tpu.memory_space<vmem>>, vector<8x32xf32>,
    %c6 = arith.constant 6 : index
    %c0_131 = arith.constant 0 : index
    %c0_132 = arith.constant 0 : index
    %386 = vector.load %arg17[%c6, %c0_131, %c0_132] : memref<8x8x128xf32, #tpu.memory_space<vmem>>, vector<1x8x128xf32>
    %387 = vector.shape_cast %386 : vector<1x8x128xf32> to vector<8x128xf32>
    %388 = arith.addf %387, %240 : vector<8x128xf32>
    %cst_133 = arith.constant dense<0.000000e+00> : vector<8x128xf32>
    %389 = tpu.matmul %384, %241, %cst_133 {dimension_numbers = #tpu.dot_dimension_numbers<[1], [0], [0], [1], [0, 0, 1, 1], [], []>} : vector<8x32xf32>, vector<32x128xf32>, vector<8x128xf32> -> vector<8x128xf32>
    %390 = arith.addf %388, %389 : vector<8x128xf32>
    %391 = arith.negf %390 : vector<8x128xf32>
    %392 = math.exp %391 : vector<8x128xf32>
    %cst_134 = arith.constant 1.000000e+00 : f32
    %393 = vector.broadcast %cst_134 : f32 to vector<8x128xf32>
    %394 = arith.addf %393, %392 : vector<8x128xf32>
    %395 = arith.divf %393, %394 : vector<8x128xf32>
    %396 = vector.extract_strided_slice %395 {offsets = [0, 0], sizes = [8, 32], strides = [1, 1]} : vector<8x128xf32> to vector<8x32xf32>
    %397 = vector.extract_strided_slice %395 {offsets = [0, 32], sizes = [8, 32], strides = [1, 1]} : vector<8x128xf32> to vector<8x32xf32>
    %398 = vector.extract_strided_slice %395 {offsets = [0, 64], sizes = [8, 32], strides = [1, 1]} : vector<8x128xf32> to vector<8x32xf32>
    %cst_135 = arith.constant 2.000000e+00 : f32
    %399 = vector.broadcast %cst_135 : f32 to vector<8x32xf32>
    %400 = arith.mulf %399, %398 : vector<8x32xf32>
    %cst_136 = arith.constant 1.000000e+00 : f32
    %401 = vector.broadcast %cst_136 : f32 to vector<8x32xf32>
    %402 = arith.subf %400, %401 : vector<8x32xf32>
    %403 = vector.extract_strided_slice %395 {offsets = [0, 96], sizes = [8, 32], strides = [1, 1]} : vector<8x128xf32> to vector<8x32xf32>
    %404 = arith.mulf %397, %382 : vector<8x32xf32>
    %405 = arith.mulf %396, %402 : vector<8x32xf32>
    %406 = arith.addf %404, %405 : vector<8x32xf32>
    %407 = math.tanh %406 : vector<8x32xf32>
    %408 = arith.mulf %403, %407 : vector<8x32xf32>
    %c0_137 = arith.constant 0 : index
    %c192 = arith.constant 192 : index
    %409 = vector.load %arg18[%c0_137, %c192] : memref<8x256xf32, #tpu.memory_space<vmem>>, vector<8x32xf32>
    tpu.vector_store %arg18[%c0_137, %c192], %408 {strides = array<i32>} : memref<8x256xf32, #tpu.memory_space<vmem>>, vector<8x32xf32>,
    %c7 = arith.constant 7 : index
    %c0_138 = arith.constant 0 : index
    %c0_139 = arith.constant 0 : index
    %410 = vector.load %arg17[%c7, %c0_138, %c0_139] : memref<8x8x128xf32, #tpu.memory_space<vmem>>, vector<1x8x128xf32>
    %411 = vector.shape_cast %410 : vector<1x8x128xf32> to vector<8x128xf32>
    %412 = arith.addf %411, %240 : vector<8x128xf32>
    %cst_140 = arith.constant dense<0.000000e+00> : vector<8x128xf32>
    %413 = tpu.matmul %408, %241, %cst_140 {dimension_numbers = #tpu.dot_dimension_numbers<[1], [0], [0], [1], [0, 0, 1, 1], [], []>} : vector<8x32xf32>, vector<32x128xf32>, vector<8x128xf32> -> vector<8x128xf32>
    %414 = arith.addf %412, %413 : vector<8x128xf32>
    %415 = arith.negf %414 : vector<8x128xf32>
    %416 = math.exp %415 : vector<8x128xf32>
    %cst_141 = arith.constant 1.000000e+00 : f32
    %417 = vector.broadcast %cst_141 : f32 to vector<8x128xf32>
    %418 = arith.addf %417, %416 : vector<8x128xf32>
    %419 = arith.divf %417, %418 : vector<8x128xf32>
    %420 = vector.extract_strided_slice %419 {offsets = [0, 0], sizes = [8, 32], strides = [1, 1]} : vector<8x128xf32> to vector<8x32xf32>
    %421 = vector.extract_strided_slice %419 {offsets = [0, 32], sizes = [8, 32], strides = [1, 1]} : vector<8x128xf32> to vector<8x32xf32>
    %422 = vector.extract_strided_slice %419 {offsets = [0, 64], sizes = [8, 32], strides = [1, 1]} : vector<8x128xf32> to vector<8x32xf32>
    %cst_142 = arith.constant 2.000000e+00 : f32
    %423 = vector.broadcast %cst_142 : f32 to vector<8x32xf32>
    %424 = arith.mulf %423, %422 : vector<8x32xf32>
    %cst_143 = arith.constant 1.000000e+00 : f32
    %425 = vector.broadcast %cst_143 : f32 to vector<8x32xf32>
    %426 = arith.subf %424, %425 : vector<8x32xf32>
    %427 = vector.extract_strided_slice %419 {offsets = [0, 96], sizes = [8, 32], strides = [1, 1]} : vector<8x128xf32> to vector<8x32xf32>
    %428 = arith.mulf %421, %406 : vector<8x32xf32>
    %429 = arith.mulf %420, %426 : vector<8x32xf32>
    %430 = arith.addf %428, %429 : vector<8x32xf32>
    %431 = math.tanh %430 : vector<8x32xf32>
    %432 = arith.mulf %427, %431 : vector<8x32xf32>
    %c0_144 = arith.constant 0 : index
    %c224 = arith.constant 224 : index
    %433 = vector.load %arg18[%c0_144, %c224] : memref<8x256xf32, #tpu.memory_space<vmem>>, vector<8x32xf32>
    tpu.vector_store %arg18[%c0_144, %c224], %432 {strides = array<i32>} : memref<8x256xf32, #tpu.memory_space<vmem>>, vector<8x32xf32>,
    %c0_145 = arith.constant 0 : index
    %c0_146 = arith.constant 0 : index
    %434 = vector.load %arg18[%c0_145, %c0_146] : memref<8x256xf32, #tpu.memory_space<vmem>>, vector<8x256xf32>
    %c0_147 = arith.constant 0 : index
    %c0_148 = arith.constant 0 : index
    %435 = vector.load %arg12[%c0_147, %c0_148] : memref<256x128xf32, #tpu.memory_space<vmem>>, vector<256x128xf32>
    %cst_149 = arith.constant dense<0.000000e+00> : vector<8x128xf32>
    %436 = tpu.matmul %434, %435, %cst_149 {dimension_numbers = #tpu.dot_dimension_numbers<[1], [0], [0], [1], [0, 0, 1, 1], [], []>} : vector<8x256xf32>, vector<256x128xf32>, vector<8x128xf32> -> vector<8x128xf32>
    %c0_150 = arith.constant 0 : index
    %c0_151 = arith.constant 0 : index
    %437 = vector.load %arg13[%c0_150, %c0_151] : memref<1x128xf32, #tpu.memory_space<vmem>>, vector<1x128xf32>
    %438 = vector.broadcast %437 : vector<1x128xf32> to vector<8x128xf32>
    %439 = arith.addf %436, %438 : vector<8x128xf32>
    %c0_152 = arith.constant 0 : index
    %c0_153 = arith.constant 0 : index
    %440 = vector.load %arg14[%c0_152, %c0_153] : memref<8x128xf32, #tpu.memory_space<vmem>>, vector<8x128xf32>
    tpu.vector_store %arg14[%c0_152, %c0_153], %439 {strides = array<i32>} : memref<8x128xf32, #tpu.memory_space<vmem>>, vector<8x128xf32>,
    return
  }
  func.func @transform_0(%arg0: i32) -> (i32, i32, i32) {
    %c0_i32 = arith.constant 0 : i32
    %c0_i32_0 = arith.constant 0 : i32
    %c0_i32_1 = arith.constant 0 : i32
    return %c0_i32, %arg0, %c0_i32_0 : i32, i32, i32
  }
  func.func @transform_1(%arg0: i32) -> (i32, i32) {
    %c0_i32 = arith.constant 0 : i32
    %c0_i32_0 = arith.constant 0 : i32
    %c0_i32_1 = arith.constant 0 : i32
    return %c0_i32, %c0_i32_0 : i32, i32
  }
  func.func @transform_2(%arg0: i32) -> (i32, i32) {
    %c0_i32 = arith.constant 0 : i32
    %c0_i32_0 = arith.constant 0 : i32
    %c0_i32_1 = arith.constant 0 : i32
    return %c0_i32, %c0_i32_0 : i32, i32
  }
  func.func @transform_3(%arg0: i32) -> (i32, i32) {
    %c0_i32 = arith.constant 0 : i32
    %c0_i32_0 = arith.constant 0 : i32
    %c0_i32_1 = arith.constant 0 : i32
    return %c0_i32, %c0_i32_0 : i32, i32
  }
  func.func @transform_4(%arg0: i32) -> (i32, i32) {
    %c0_i32 = arith.constant 0 : i32
    %c0_i32_0 = arith.constant 0 : i32
    %c0_i32_1 = arith.constant 0 : i32
    return %c0_i32, %c0_i32_0 : i32, i32
  }
  func.func @transform_5(%arg0: i32) -> (i32, i32) {
    %c0_i32 = arith.constant 0 : i32
    %c0_i32_0 = arith.constant 0 : i32
    %c0_i32_1 = arith.constant 0 : i32
    return %c0_i32, %c0_i32_0 : i32, i32
  }
  func.func @transform_6(%arg0: i32) -> (i32, i32) {
    %c0_i32 = arith.constant 0 : i32
    %c0_i32_0 = arith.constant 0 : i32
    %c0_i32_1 = arith.constant 0 : i32
    return %c0_i32, %c0_i32_0 : i32, i32
  }
  func.func @transform_7(%arg0: i32) -> (i32, i32) {
    %c0_i32 = arith.constant 0 : i32
    %c0_i32_0 = arith.constant 0 : i32
    %c0_i32_1 = arith.constant 0 : i32
    return %c0_i32, %c0_i32_0 : i32, i32
  }
  func.func @transform_8(%arg0: i32) -> (i32, i32) {
    %c0_i32 = arith.constant 0 : i32
    %c0_i32_0 = arith.constant 0 : i32
    %c0_i32_1 = arith.constant 0 : i32
    return %c0_i32, %c0_i32_0 : i32, i32
  }
  func.func @transform_9(%arg0: i32) -> (i32, i32) {
    %c0_i32 = arith.constant 0 : i32
    %c0_i32_0 = arith.constant 0 : i32
    %c0_i32_1 = arith.constant 0 : i32
    return %c0_i32, %c0_i32_0 : i32, i32
  }
  func.func @transform_10(%arg0: i32) -> (i32, i32) {
    %c0_i32 = arith.constant 0 : i32
    %c0_i32_0 = arith.constant 0 : i32
    %c0_i32_1 = arith.constant 0 : i32
    return %c0_i32, %c0_i32_0 : i32, i32
  }
  func.func @transform_11(%arg0: i32) -> (i32, i32) {
    %c0_i32 = arith.constant 0 : i32
    %c0_i32_0 = arith.constant 0 : i32
    %c0_i32_1 = arith.constant 0 : i32
    return %c0_i32, %c0_i32_0 : i32, i32
  }
  func.func @transform_12(%arg0: i32) -> (i32, i32) {
    %c0_i32 = arith.constant 0 : i32
    %c0_i32_0 = arith.constant 0 : i32
    %c0_i32_1 = arith.constant 0 : i32
    return %c0_i32, %c0_i32_0 : i32, i32
  }
  func.func @transform_13(%arg0: i32) -> (i32, i32) {
    %c0_i32 = arith.constant 0 : i32
    %c0_i32_0 = arith.constant 0 : i32
    return %arg0, %c0_i32 : i32, i32
  }
  func.func @transform_14(%arg0: i32) -> (i32, i32) {
    %c0_i32 = arith.constant 0 : i32
    %c0_i32_0 = arith.constant 0 : i32
    return %arg0, %c0_i32 : i32, i32
  }
}

</mosaic_0001>

<llo_original>
// kernel: tpu_custom_call.1
$region0: #{tpu_custom_call.1}
  #allocation0 [shape = 'u32[]', space=smem, size = 0x4, offset = 0x4, fixed_abs, tag = 'smem constant byte address 0x4 - core index']
  #allocation1 [shape = 'u32[144,128]{1,0:T(1,128)}', space=vmem, size = 0x12000, scoped, tag = 'internal scratch']
  #allocation2 [shape = 'f32[8,8,128]{2,1,0:T(8,128)}', space=vmem, size = 0x8000, scoped, tag = 'scratch operand']
  #allocation3 [shape = 'f32[8,8,128]{2,1,0:T(8,128)}', space=vmem, size = 0x8000, scoped, tag = 'scratch operand']
  #allocation4 [shape = 'f32[8,256]{1,0:T(8,128)}', space=vmem, size = 0x2000, scoped, tag = 'scratch operand']
  %s0 = inlined_call_operand.hbm [shape: f32[8,8,16], index: 0, kind: input, shape index: {}]
  %s1 = inlined_call_operand.hbm [shape: f32[16,256], index: 1, kind: input, shape index: {}]
  %s2 = inlined_call_operand.hbm [shape: f32[32,128], index: 2, kind: input, shape index: {}]
  %s3 = inlined_call_operand.vmem [shape: f32[1,128], index: 3, kind: input, shape index: {}]
  %s4 = inlined_call_operand.hbm [shape: f32[16,128], index: 4, kind: input, shape index: {}]
  %s5 = inlined_call_operand.vmem [shape: f32[1,128], index: 5, kind: input, shape index: {}]
  %s6 = inlined_call_operand.hbm [shape: f32[64,128], index: 6, kind: input, shape index: {}]
  %s7 = inlined_call_operand.vmem [shape: f32[1,128], index: 7, kind: input, shape index: {}]
  %s8 = inlined_call_operand.hbm [shape: f32[128,128], index: 8, kind: input, shape index: {}]
  %s9 = inlined_call_operand.hbm [shape: f32[32,128], index: 9, kind: input, shape index: {}]
  %s10 = inlined_call_operand.vmem [shape: f32[1,128], index: 10, kind: input, shape index: {}]
  %s11 = inlined_call_operand.hbm [shape: f32[256,128], index: 11, kind: input, shape index: {}]
  %s12 = inlined_call_operand.vmem [shape: f32[1,128], index: 12, kind: input, shape index: {}]
  %s13 = inlined_call_operand.hbm [shape: f32[8,128], index: 13, kind: output, shape index: {0}]
  %s14 = inlined_call_operand.hbm [shape: f32[8,128], index: 14, kind: output, shape index: {1}]
  %15 = xla_tuple %s13, %s14
  %s16 = sld [smem:[#allocation0]]
  $region102: #{tpu_custom_call.1} parent=0
    _
  %s18 = ssub.s32 1, %s16
  %s19 = scalar_select 0, %s18, %s16
  $region1: #{tpu_custom_call.1} parent=0
    #allocation5 [shape = 'u8[32768]{0}', space=vmem, size = 0x8000, scoped, tag = 'input window, operand 0, single buffered']
    #allocation6 [shape = 's32[1]{0}', space=sflag, size = 0x4, scoped, tag = 'scoped memory for tpu_custom_call.1']
    #allocation7 [shape = 's32[1]{0}', space=sflag, size = 0x4, scoped, tag = 'scoped memory for tpu_custom_call.1']
    #allocation8 [shape = 'u8[16384]{0}', space=vmem, size = 0x4000, scoped, tag = 'input window, operand 1, single buffered']
    #allocation9 [shape = 's32[1]{0}', space=sflag, size = 0x4, scoped, tag = 'scoped memory for tpu_custom_call.1']
    #allocation10 [shape = 'u8[16384]{0}', space=vmem, size = 0x4000, scoped, tag = 'input window, operand 2, single buffered']
    #allocation11 [shape = 'u8[8192]{0}', space=vmem, size = 0x2000, scoped, tag = 'input window, operand 4, single buffered']
    #allocation12 [shape = 's32[1]{0}', space=sflag, size = 0x4, scoped, tag = 'scoped memory for tpu_custom_call.1']
    #allocation13 [shape = 'u8[32768]{0}', space=vmem, size = 0x8000, scoped, tag = 'input window, operand 6, single buffered']
    #allocation14 [shape = 'u8[65536]{0}', space=vmem, size = 0x10000, scoped, tag = 'input window, operand 8, single buffered']
    #allocation15 [shape = 's32[1]{0}', space=sflag, size = 0x4, scoped, tag = 'scoped memory for tpu_custom_call.1']
    #allocation16 [shape = 'u8[16384]{0}', space=vmem, size = 0x4000, scoped, tag = 'input window, operand 9, single buffered']
    #allocation17 [shape = 'u8[131072]{0}', space=vmem, size = 0x20000, scoped, tag = 'input window, operand 11, single buffered']
    #allocation18 [shape = 's32[1]{0}', space=sflag, size = 0x4, scoped, tag = 'scoped memory for tpu_custom_call.1']
    #allocation19 [shape = 'u8[4096]{0}', space=vmem, size = 0x1000, scoped, tag = 'output window, operand 0, single buffered']
    #allocation20 [shape = 'u8[4096]{0}', space=vmem, size = 0x1000, scoped, tag = 'output window, operand 1, single buffered']
    #allocation21 [shape = 's32[1]{0}', space=sflag, size = 0x4, scoped, tag = 'scoped memory for tpu_custom_call.1']
    %20 = vsyncpa [#allocation6], 0
    %21 = vsyncpa [#allocation9], 0
    %22 = vsyncpa [#allocation12], 0
    %23 = vsyncpa [#allocation15], 0
    %24 = vsyncpa [#allocation18], 0
    %25 = vsyncpa [#allocation7], 0
    %26 = vsyncpa [#allocation21], 0
    // Predicated region
    $region2: #{tpu_custom_call.1} parent=1 // pred_check
      _
    $region3: #{tpu_custom_call.1} parent=1 // pred_check_branch
      %28 = sbr.rel (0) target = $region5
    $region4: #{tpu_custom_call.1} parent=1 // pred_region
      %s30 = ssub.s32 1024, 1024
      %31 = vsyncadd [#allocation6], %s30
      %s32 = sshll.u32 [#allocation5], 4
      %s33 = int_to_ptr.vmem [resolvable:$true] %s32
      %38 = dma.hbm_to_vmem [thread:$0]  %s0, 1024, %s33, [#allocation6], 128, 128, 8
    $region5: #{tpu_custom_call.1} parent=1 // pred_fallthru
      _
    // Predicated region
    $region6: #{tpu_custom_call.1} parent=1 // pred_check
      _
    $region7: #{tpu_custom_call.1} parent=1 // pred_check_branch
      %40 = sbr.rel (0) target = $region9
    $region8: #{tpu_custom_call.1} parent=1 // pred_region
      %s42 = ssub.s32 512, 512
      %43 = vsyncadd [#allocation9], %s42
      %s44 = sshll.u32 [#allocation8], 4
      %s45 = int_to_ptr.vmem [resolvable:$true] %s44
      %50 = dma.hbm_to_vmem [thread:$0]  %s1, 512, %s45, [#allocation9], 256, 256, 16
    $region9: #{tpu_custom_call.1} parent=1 // pred_fallthru
      _
    // Predicated region
    $region10: #{tpu_custom_call.1} parent=1 // pred_check
      _
    $region11: #{tpu_custom_call.1} parent=1 // pred_check_branch
      %52 = sbr.rel (0) target = $region13
    $region12: #{tpu_custom_call.1} parent=1 // pred_region
      %s54 = ssub.s32 512, 512
      %55 = vsyncadd [#allocation9], %s54
      %s56 = sshll.u32 [#allocation10], 4
      %s57 = int_to_ptr.vmem [resolvable:$true] %s56
      %62 = dma.hbm_to_vmem [thread:$0]  %s2, 512, %s57, [#allocation9], 128, 128, 8
    $region13: #{tpu_custom_call.1} parent=1 // pred_fallthru
      _
    // Predicated region
    $region14: #{tpu_custom_call.1} parent=1 // pred_check
      _
    $region15: #{tpu_custom_call.1} parent=1 // pred_check_branch
      %64 = sbr.rel (0) target = $region17
    $region16: #{tpu_custom_call.1} parent=1 // pred_region
      _
    $region17: #{tpu_custom_call.1} parent=1 // pred_fallthru
      _
    // Predicated region
    $region18: #{tpu_custom_call.1} parent=1 // pred_check
      _
    $region19: #{tpu_custom_call.1} parent=1 // pred_check_branch
      %66 = sbr.rel (0) target = $region21
    $region20: #{tpu_custom_call.1} parent=1 // pred_region
      %s68 = ssub.s32 256, 256
      %69 = vsyncadd [#allocation12], %s68
      %s70 = sshll.u32 [#allocation11], 4
      %s71 = int_to_ptr.vmem [resolvable:$true] %s70
      %76 = dma.hbm_to_vmem [thread:$0]  %s4, 256, %s71, [#allocation12], 128, 128, 8
    $region21: #{tpu_custom_call.1} parent=1 // pred_fallthru
      _
    // Predicated region
    $region22: #{tpu_custom_call.1} parent=1 // pred_check
      _
    $region23: #{tpu_custom_call.1} parent=1 // pred_check_branch
      %78 = sbr.rel (0) target = $region25
    $region24: #{tpu_custom_call.1} parent=1 // pred_region
      _
    $region25: #{tpu_custom_call.1} parent=1 // pred_fallthru
      _
    // Predicated region
    $region26: #{tpu_custom_call.1} parent=1 // pred_check
      _
    $region27: #{tpu_custom_call.1} parent=1 // pred_check_branch
      %80 = sbr.rel (0) target = $region29
    $region28: #{tpu_custom_call.1} parent=1 // pred_region
      %s82 = ssub.s32 1024, 1024
      %83 = vsyncadd [#allocation12], %s82
      %s84 = sshll.u32 [#allocation13], 4
      %s85 = int_to_ptr.vmem [resolvable:$true] %s84
      %90 = dma.hbm_to_vmem [thread:$0]  %s6, 1024, %s85, [#allocation12], 128, 128, 8
    $region29: #{tpu_custom_call.1} parent=1 // pred_fallthru
      _
    // Predicated region
    $region30: #{tpu_custom_call.1} parent=1 // pred_check
      _
    $region31: #{tpu_custom_call.1} parent=1 // pred_check_branch
      %92 = sbr.rel (0) target = $region33
    $region32: #{tpu_custom_call.1} parent=1 // pred_region
      _
    $region33: #{tpu_custom_call.1} parent=1 // pred_fallthru
      _
    // Predicated region
    $region34: #{tpu_custom_call.1} parent=1 // pred_check
      _
    $region35: #{tpu_custom_call.1} parent=1 // pred_check_branch
      %94 = sbr.rel (0) target = $region37
    $region36: #{tpu_custom_call.1} parent=1 // pred_region
      %s96 = ssub.s32 2048, 2048
      %97 = vsyncadd [#allocation15], %s96
      %s98 = sshll.u32 [#allocation14], 4
      %s99 = int_to_ptr.vmem [resolvable:$true] %s98
      %104 = dma.hbm_to_vmem [thread:$0]  %s8, 2048, %s99, [#allocation15], 128, 128, 8
    $region37: #{tpu_custom_call.1} parent=1 // pred_fallthru
      _
    // Predicated region
    $region38: #{tpu_custom_call.1} parent=1 // pred_check
      _
    $region39: #{tpu_custom_call.1} parent=1 // pred_check_branch
      %106 = sbr.rel (0) target = $region41
    $region40: #{tpu_custom_call.1} parent=1 // pred_region
      %s108 = ssub.s32 512, 512
      %109 = vsyncadd [#allocation15], %s108
      %s110 = sshll.u32 [#allocation16], 4
      %s111 = int_to_ptr.vmem [resolvable:$true] %s110
      %116 = dma.hbm_to_vmem [thread:$0]  %s9, 512, %s111, [#allocation15], 128, 128, 8
    $region41: #{tpu_custom_call.1} parent=1 // pred_fallthru
      _
    // Predicated region
    $region42: #{tpu_custom_call.1} parent=1 // pred_check
      _
    $region43: #{tpu_custom_call.1} parent=1 // pred_check_branch
      %118 = sbr.rel (0) target = $region45
    $region44: #{tpu_custom_call.1} parent=1 // pred_region
      _
    $region45: #{tpu_custom_call.1} parent=1 // pred_fallthru
      _
    // Predicated region
    $region46: #{tpu_custom_call.1} parent=1 // pred_check
      _
    $region47: #{tpu_custom_call.1} parent=1 // pred_check_branch
      %120 = sbr.rel (0) target = $region49
    $region48: #{tpu_custom_call.1} parent=1 // pred_region
      %s122 = ssub.s32 4096, 4096
      %123 = vsyncadd [#allocation18], %s122
      %s124 = sshll.u32 [#allocation17], 4
      %s125 = int_to_ptr.vmem [resolvable:$true] %s124
      %130 = dma.hbm_to_vmem [thread:$0]  %s11, 4096, %s125, [#allocation18], 128, 128, 8
    $region49: #{tpu_custom_call.1} parent=1 // pred_fallthru
      _
    // Predicated region
    $region50: #{tpu_custom_call.1} parent=1 // pred_check
      _
    $region51: #{tpu_custom_call.1} parent=1 // pred_check_branch
      %132 = sbr.rel (0) target = $region53
    $region52: #{tpu_custom_call.1} parent=1 // pred_region
      _
    $region53: #{tpu_custom_call.1} parent=1 // pred_fallthru
      _
    // Predicated region
    $region54: #{tpu_custom_call.1} parent=1 // pred_check
      _
    $region55: #{tpu_custom_call.1} parent=1 // pred_check_branch
      %134 = sbr.rel (0) target = $region57
    $region56: #{tpu_custom_call.1} parent=1 // pred_region
      %135 = dma.done [#allocation6], 1024
    $region57: #{tpu_custom_call.1} parent=1 // pred_fallthru
      _
    // Predicated region
    $region58: #{tpu_custom_call.1} parent=1 // pred_check
      _
    $region59: #{tpu_custom_call.1} parent=1 // pred_check_branch
      %137 = sbr.rel (0) target = $region61
    $region60: #{tpu_custom_call.1} parent=1 // pred_region
      %138 = dma.done [#allocation9], 512
    $region61: #{tpu_custom_call.1} parent=1 // pred_fallthru
      _
    // Predicated region
    $region62: #{tpu_custom_call.1} parent=1 // pred_check
      _
    $region63: #{tpu_custom_call.1} parent=1 // pred_check_branch
      %140 = sbr.rel (0) target = $region65
    $region64: #{tpu_custom_call.1} parent=1 // pred_region
      %141 = dma.done [#allocation9], 512
    $region65: #{tpu_custom_call.1} parent=1 // pred_fallthru
      _
    // Predicated region
    $region66: #{tpu_custom_call.1} parent=1 // pred_check
      _
    $region67: #{tpu_custom_call.1} parent=1 // pred_check_branch
      %143 = sbr.rel (0) target = $region69
    $region68: #{tpu_custom_call.1} parent=1 // pred_region
      %144 = dma.done [#allocation12], 256
    $region69: #{tpu_custom_call.1} parent=1 // pred_fallthru
      _
    // Predicated region
    $region70: #{tpu_custom_call.1} parent=1 // pred_check
      _
    $region71: #{tpu_custom_call.1} parent=1 // pred_check_branch
      %146 = sbr.rel (0) target = $region73
    $region72: #{tpu_custom_call.1} parent=1 // pred_region
      %147 = dma.done [#allocation12], 1024
    $region73: #{tpu_custom_call.1} parent=1 // pred_fallthru
      _
    // Predicated region
    $region74: #{tpu_custom_call.1} parent=1 // pred_check
      _
    $region75: #{tpu_custom_call.1} parent=1 // pred_check_branch
      %149 = sbr.rel (0) target = $region77
    $region76: #{tpu_custom_call.1} parent=1 // pred_region
      %150 = dma.done [#allocation15], 2048
    $region77: #{tpu_custom_call.1} parent=1 // pred_fallthru
      _
    // Predicated region
    $region78: #{tpu_custom_call.1} parent=1 // pred_check
      _
    $region79: #{tpu_custom_call.1} parent=1 // pred_check_branch
      %152 = sbr.rel (0) target = $region81
    $region80: #{tpu_custom_call.1} parent=1 // pred_region
      %153 = dma.done [#allocation15], 512
    $region81: #{tpu_custom_call.1} parent=1 // pred_fallthru
      _
    // Predicated region
    $region82: #{tpu_custom_call.1} parent=1 // pred_check
      _
    $region83: #{tpu_custom_call.1} parent=1 // pred_check_branch
      %155 = sbr.rel (0) target = $region85
    $region84: #{tpu_custom_call.1} parent=1 // pred_region
      %156 = dma.done [#allocation18], 4096
    $region85: #{tpu_custom_call.1} parent=1 // pred_fallthru
      _
    %v157 = vld [vmem:[#allocation5] sm:$0xff]
    %v158 = vld [vmem:[#allocation5 + $0x8] sm:$0xff]
    %v159 = vld [vmem:[#allocation5 + $0x10] sm:$0xff]
    %v160 = vld [vmem:[#allocation5 + $0x18] sm:$0xff]
    %v161 = vld [vmem:[#allocation5 + $0x20] sm:$0xff]
    %v162 = vld [vmem:[#allocation5 + $0x28] sm:$0xff]
    %v163 = vld [vmem:[#allocation5 + $0x30] sm:$0xff]
    %v164 = vld [vmem:[#allocation5 + $0x38] sm:$0xff]
    %v165 = vld [vmem:[#allocation8] sm:$0xff]
    %v166 = vld [vmem:[#allocation8 + $0x8] sm:$0xff]
    %v167 = vld [vmem:[#allocation8 + $0x10] sm:$0xff]
    %v168 = vld [vmem:[#allocation8 + $0x18] sm:$0xff]
    %vm169 = vcmask 130048
    %v171 = vsel %vm169, %v157, 0
    %v174 = vsel %vm169, %v158, 0
    %v177 = vsel %vm169, %v159, 0
    %v180 = vsel %vm169, %v160, 0
    %v183 = vsel %vm169, %v161, 0
    %v186 = vsel %vm169, %v162, 0
    %v189 = vsel %vm169, %v163, 0
    %v192 = vsel %vm169, %v164, 0
    %194 = vmatprep.subr.mxu0 0.0
    %195 = vmatpush1.msra.mxu0 0.0
    %196 = vmatprep.subr.mxu0 0.0
    %197 = vmatpush1.msra.mxu0 0.0
    %198 = vmatprep.subr.mxu0 0.0
    %199 = vmatpush1.msra.mxu0 0.0
    %200 = vmatprep.subr.mxu0 0.0
    %201 = vmatpush1.msra.mxu0 0.0
    %202 = vmatprep.subr.mxu0 0.0
    %203 = vmatpush1.msra.mxu0 0.0
    %204 = vmatprep.subr.mxu0 0.0
    %205 = vmatpush1.msra.mxu0 0.0
    %206 = vmatprep.subr.mxu0 0.0
    %207 = vmatpush1.msra.mxu0 0.0
    %208 = vmatprep.subr.mxu0 0.0
    %209 = vmatpush1.msra.mxu0 0.0
    %210 = vmatprep.subr.mxu0 0.0
    %211 = vmatpush1.msra.mxu0 0.0
    %212 = vmatprep.subr.mxu0 0.0
    %213 = vmatpush1.msra.mxu0 0.0
    %214 = vmatprep.subr.mxu0 0.0
    %215 = vmatpush1.msra.mxu0 0.0
    %216 = vmatprep.subr.mxu0 0.0
    %217 = vmatpush1.msra.mxu0 0.0
    %218 = vmatprep.subr.mxu0 0.0
    %219 = vmatpush1.msra.mxu0 0.0
    %220 = vmatprep.subr.mxu0 0.0
    %221 = vmatpush1.msra.mxu0 0.0
    %222 = vmatprep.subr.mxu0 %v168
    %223 = vmatpush1.msra.mxu0 %v167
    %224 = vmatprep.subr.mxu0 %v166
    %225 = vmatpush1.msra.mxu0 %v165
    %226 = vmatprep.subr.mxu0 0.0
    %227 = vmatpush2.msra.mxu0 0.0
    %228 = vmatprep.subr.mxu0 0.0
    %229 = vmatpush2.msra.mxu0 0.0
    %230 = vmatprep.subr.mxu0 0.0
    %231 = vmatpush2.msra.mxu0 0.0
    %232 = vmatprep.subr.mxu0 0.0
    %233 = vmatpush2.msra.mxu0 0.0
    %234 = vmatprep.subr.mxu0 0.0
    %235 = vmatpush2.msra.mxu0 0.0
    %236 = vmatprep.subr.mxu0 0.0
    %237 = vmatpush2.msra.mxu0 0.0
    %238 = vmatprep.subr.mxu0 0.0
    %239 = vmatpush2.msra.mxu0 0.0
    %240 = vmatprep.subr.mxu0 0.0
    %241 = vmatpush2.msra.mxu0 0.0
    %242 = vmatprep.subr.mxu0 0.0
    %243 = vmatpush2.msra.mxu0 0.0
    %244 = vmatprep.subr.mxu0 0.0
    %245 = vmatpush2.msra.mxu0 0.0
    %246 = vmatprep.subr.mxu0 0.0
    %247 = vmatpush2.msra.mxu0 0.0
    %248 = vmatprep.subr.mxu0 0.0
    %249 = vmatpush2.msra.mxu0 0.0
    %250 = vmatprep.subr.mxu0 0.0
    %251 = vmatpush2.msra.mxu0 0.0
    %252 = vmatprep.subr.mxu0 0.0
    %253 = vmatpush2.msra.mxu0 0.0
    %254 = vmatprep.subr.mxu0 0.0
    %255 = vmatpush2.msra.mxu0 0.0
    %256 = vmatprep.subr.mxu0 0.0
    %257 = vmatpush2.msra.mxu0 0.0
    %258 = vmatprep.mubr.f32.mxu0 0.0
    %259 = vmatmul.mubr.f32.gmra.mxu0 %v171
    %v260 = vpop.f32.mrf.mxu0
    %v261 = vadd.f32 0.0, %v260
    %v262 = vpop.f32.mrf.mxu0
    %v263 = vadd.f32 0.0, %v262
    %264 = vmatprep.mubr.f32.mxu0 0.0
    %265 = vmatmul.mubr.f32.gmra.mxu0 %v174
    %v266 = vpop.f32.mrf.mxu0
    %v267 = vadd.f32 0.0, %v266
    %v268 = vpop.f32.mrf.mxu0
    %v269 = vadd.f32 0.0, %v268
    %270 = vmatprep.mubr.f32.mxu0 0.0
    %271 = vmatmul.mubr.f32.gmra.mxu0 %v177
    %v272 = vpop.f32.mrf.mxu0
    %v273 = vadd.f32 0.0, %v272
    %v274 = vpop.f32.mrf.mxu0
    %v275 = vadd.f32 0.0, %v274
    %276 = vmatprep.mubr.f32.mxu0 0.0
    %277 = vmatmul.mubr.f32.gmra.mxu0 %v180
    %v278 = vpop.f32.mrf.mxu0
    %v279 = vadd.f32 0.0, %v278
    %v280 = vpop.f32.mrf.mxu0
    %v281 = vadd.f32 0.0, %v280
    %282 = vmatprep.mubr.f32.mxu0 0.0
    %283 = vmatmul.mubr.f32.gmra.mxu0 %v183
    %v284 = vpop.f32.mrf.mxu0
    %v285 = vadd.f32 0.0, %v284
    %v286 = vpop.f32.mrf.mxu0
    %v287 = vadd.f32 0.0, %v286
    %288 = vmatprep.mubr.f32.mxu0 0.0
    %289 = vmatmul.mubr.f32.gmra.mxu0 %v186
    %v290 = vpop.f32.mrf.mxu0
    %v291 = vadd.f32 0.0, %v290
    %v292 = vpop.f32.mrf.mxu0
    %v293 = vadd.f32 0.0, %v292
    %294 = vmatprep.mubr.f32.mxu0 0.0
    %295 = vmatmul.mubr.f32.gmra.mxu0 %v189
    %v296 = vpop.f32.mrf.mxu0
    %v297 = vadd.f32 0.0, %v296
    %v298 = vpop.f32.mrf.mxu0
    %v299 = vadd.f32 0.0, %v298
    %300 = vmatprep.mubr.f32.mxu0 0.0
    %301 = vmatmul.mubr.f32.gmra.mxu0 %v192
    %v302 = vpop.f32.mrf.mxu0
    %v303 = vadd.f32 0.0, %v302
    %v304 = vpop.f32.mrf.mxu0
    %v305 = vadd.f32 0.0, %v304
    %306 = vdwg.mxu0
    %v307 = vld [vmem:[%s3] sm:$0x1]
    %v309 = vlaneseq
    %v310 = vshrl.u32 %v309, 7
    %v311 = vsub.s32 0, %v310
    %v312 = vrot.slane %v307, %v311
    %v314 = vadd.f32 %v261, %v312
    %v315 = vadd.f32 %v267, %v312
    %v316 = vadd.f32 %v273, %v312
    %v317 = vadd.f32 %v279, %v312
    %v318 = vadd.f32 %v285, %v312
    %v319 = vadd.f32 %v291, %v312
    %v320 = vadd.f32 %v297, %v312
    %v321 = vadd.f32 %v303, %v312
    %322 = vst [vmem:[#allocation2] sm:$0xff] %v314
    %323 = vst [vmem:[#allocation2 + $0x8] sm:$0xff] %v315
    %324 = vst [vmem:[#allocation2 + $0x10] sm:$0xff] %v316
    %325 = vst [vmem:[#allocation2 + $0x18] sm:$0xff] %v317
    %326 = vst [vmem:[#allocation2 + $0x20] sm:$0xff] %v318
    %327 = vst [vmem:[#allocation2 + $0x28] sm:$0xff] %v319
    %328 = vst [vmem:[#allocation2 + $0x30] sm:$0xff] %v320
    %329 = vst [vmem:[#allocation2 + $0x38] sm:$0xff] %v321
    %330 = vst [vmem:[#allocation3] sm:$0xff] %v263
    %331 = vst [vmem:[#allocation3 + $0x8] sm:$0xff] %v269
    %332 = vst [vmem:[#allocation3 + $0x10] sm:$0xff] %v275
    %333 = vst [vmem:[#allocation3 + $0x18] sm:$0xff] %v281
    %334 = vst [vmem:[#allocation3 + $0x20] sm:$0xff] %v287
    %335 = vst [vmem:[#allocation3 + $0x28] sm:$0xff] %v293
    %336 = vst [vmem:[#allocation3 + $0x30] sm:$0xff] %v299
    %337 = vst [vmem:[#allocation3 + $0x38] sm:$0xff] %v305
    %v338 = vld [vmem:[#allocation10] sm:$0xff]
    %v339 = vld [vmem:[#allocation10 + $0x8] sm:$0xff]
    %v340 = vld [vmem:[#allocation10 + $0x10] sm:$0xff]
    %v341 = vld [vmem:[#allocation10 + $0x18] sm:$0xff]
    %v342 = vld [vmem:[#allocation2] sm:$0xff]
    %vm343 = vcmask 261120
    %v345 = vsel %vm343, 0.0, 0
    %347 = vmatprep.subr.mxu0 0.0
    %348 = vmatpush1.msra.mxu0 0.0
    %349 = vmatprep.subr.mxu0 0.0
    %350 = vmatpush1.msra.mxu0 0.0
    %351 = vmatprep.subr.mxu0 0.0
    %352 = vmatpush1.msra.mxu0 0.0
    %353 = vmatprep.subr.mxu0 0.0
    %354 = vmatpush1.msra.mxu0 0.0
    %355 = vmatprep.subr.mxu0 0.0
    %356 = vmatpush1.msra.mxu0 0.0
    %357 = vmatprep.subr.mxu0 0.0
    %358 = vmatpush1.msra.mxu0 0.0
    %359 = vmatprep.subr.mxu0 0.0
    %360 = vmatpush1.msra.mxu0 0.0
    %361 = vmatprep.subr.mxu0 0.0
    %362 = vmatpush1.msra.mxu0 0.0
    %363 = vmatprep.subr.mxu0 0.0
    %364 = vmatpush1.msra.mxu0 0.0
    %365 = vmatprep.subr.mxu0 0.0
    %366 = vmatpush1.msra.mxu0 0.0
    %367 = vmatprep.subr.mxu0 0.0
    %368 = vmatpush1.msra.mxu0 0.0
    %369 = vmatprep.subr.mxu0 0.0
    %370 = vmatpush1.msra.mxu0 0.0
    %371 = vmatprep.subr.mxu0 0.0
    %372 = vmatpush1.msra.mxu0 %v341
    %373 = vmatprep.subr.mxu0 0.0
    %374 = vmatpush1.msra.mxu0 %v340
    %375 = vmatprep.subr.mxu0 0.0
    %376 = vmatpush1.msra.mxu0 %v339
    %377 = vmatprep.subr.mxu0 0.0
    %378 = vmatpush1.msra.mxu0 %v338
    %379 = vmatprep.subr.mxu0 0.0
    %380 = vmatpush2.msra.mxu0 0.0
    %381 = vmatprep.subr.mxu0 0.0
    %382 = vmatpush2.msra.mxu0 0.0
    %383 = vmatprep.subr.mxu0 0.0
    %384 = vmatpush2.msra.mxu0 0.0
    %385 = vmatprep.subr.mxu0 0.0
    %386 = vmatpush2.msra.mxu0 0.0
    %387 = vmatprep.subr.mxu0 0.0
    %388 = vmatpush2.msra.mxu0 0.0
    %389 = vmatprep.subr.mxu0 0.0
    %390 = vmatpush2.msra.mxu0 0.0
    %391 = vmatprep.subr.mxu0 0.0
    %392 = vmatpush2.msra.mxu0 0.0
    %393 = vmatprep.subr.mxu0 0.0
    %394 = vmatpush2.msra.mxu0 0.0
    %395 = vmatprep.subr.mxu0 0.0
    %396 = vmatpush2.msra.mxu0 0.0
    %397 = vmatprep.subr.mxu0 0.0
    %398 = vmatpush2.msra.mxu0 0.0
    %399 = vmatprep.subr.mxu0 0.0
    %400 = vmatpush2.msra.mxu0 0.0
    %401 = vmatprep.subr.mxu0 0.0
    %402 = vmatpush2.msra.mxu0 0.0
    %403 = vmatprep.subr.mxu0 0.0
    %404 = vmatpush2.msra.mxu0 0.0
    %405 = vmatprep.subr.mxu0 0.0
    %406 = vmatpush2.msra.mxu0 0.0
    %407 = vmatprep.subr.mxu0 0.0
    %408 = vmatpush2.msra.mxu0 0.0
    %409 = vmatprep.subr.mxu0 0.0
    %410 = vmatpush2.msra.mxu0 0.0
    %411 = vmatprep.mubr.f32.mxu0 0.0
    %412 = vmatmul.mubr.f32.gmra.mxu0 %v345
    %v413 = vpop.f32.mrf.mxu0
    %v414 = vadd.f32 0.0, %v413
    %v415 = vpop.f32.mrf.mxu0
    %416 = vdwg.mxu0
    %v417 = vadd.f32 %v342, %v414
    %v418 = vxor.u32 %v417, 2147483648
    %v419 = vmul.f32 %v418, 1.442695
    %v420 = vpow.pop %v419
    %v421 = vadd.f32 %v420, 1.0
    %v422 = vrcp.pop %v421
    %v423 = vmul.f32 1.0, %v422
    %v424 = vmul.f32 %v423, 2.0
    %v425 = vsub.f32 %v424, 1.0
    %v426 = vmul.f32 %v423, 0.0
    %428 = vrot.lane.b32.xlu0 %v425, 64
    %v429 = vpop.permute.xlu0 %428
    %v431 = vmul.f32 %v423, %v429
    %433 = vrot.lane.b32.xlu0 %v431, 32
    %v434 = vpop.permute.xlu0 %433
    %v436 = vadd.f32 %v426, %v434
    %v437 = vtanh.pop %v436
    %439 = vrot.lane.b32.xlu0 %v437, 64
    %v440 = vpop.permute.xlu0 %439
    %v442 = vmul.f32 %v423, %v440
    %s443 = scalar_lea.vmem [#allocation2], 8
    %v444 = vld [vmem:[%s443] sm:$0xff]
    %446 = vrot.lane.b32.xlu0 %v442, 32
    %v447 = vpop.permute.xlu0 %446
    %v448 = vsel %vm343, %v447, 0
    %450 = vmatprep.subr.mxu0 0.0
    %451 = vmatpush1.msra.mxu0 0.0
    %452 = vmatprep.subr.mxu0 0.0
    %453 = vmatpush1.msra.mxu0 0.0
    %454 = vmatprep.subr.mxu0 0.0
    %455 = vmatpush1.msra.mxu0 0.0
    %456 = vmatprep.subr.mxu0 0.0
    %457 = vmatpush1.msra.mxu0 0.0
    %458 = vmatprep.subr.mxu0 0.0
    %459 = vmatpush1.msra.mxu0 0.0
    %460 = vmatprep.subr.mxu0 0.0
    %461 = vmatpush1.msra.mxu0 0.0
    %462 = vmatprep.subr.mxu0 0.0
    %463 = vmatpush1.msra.mxu0 0.0
    %464 = vmatprep.subr.mxu0 0.0
    %465 = vmatpush1.msra.mxu0 0.0
    %466 = vmatprep.subr.mxu0 0.0
    %467 = vmatpush1.msra.mxu0 0.0
    %468 = vmatprep.subr.mxu0 0.0
    %469 = vmatpush1.msra.mxu0 0.0
    %470 = vmatprep.subr.mxu0 0.0
    %471 = vmatpush1.msra.mxu0 0.0
    %472 = vmatprep.subr.mxu0 0.0
    %473 = vmatpush1.msra.mxu0 0.0
    %474 = vmatprep.subr.mxu0 0.0
    %475 = vmatpush1.msra.mxu0 %v341
    %476 = vmatprep.subr.mxu0 0.0
    %477 = vmatpush1.msra.mxu0 %v340
    %478 = vmatprep.subr.mxu0 0.0
    %479 = vmatpush1.msra.mxu0 %v339
    %480 = vmatprep.subr.mxu0 0.0
    %481 = vmatpush1.msra.mxu0 %v338
    %482 = vmatprep.subr.mxu0 0.0
    %483 = vmatpush2.msra.mxu0 0.0
    %484 = vmatprep.subr.mxu0 0.0
    %485 = vmatpush2.msra.mxu0 0.0
    %486 = vmatprep.subr.mxu0 0.0
    %487 = vmatpush2.msra.mxu0 0.0
    %488 = vmatprep.subr.mxu0 0.0
    %489 = vmatpush2.msra.mxu0 0.0
    %490 = vmatprep.subr.mxu0 0.0
    %491 = vmatpush2.msra.mxu0 0.0
    %492 = vmatprep.subr.mxu0 0.0
    %493 = vmatpush2.msra.mxu0 0.0
    %494 = vmatprep.subr.mxu0 0.0
    %495 = vmatpush2.msra.mxu0 0.0
    %496 = vmatprep.subr.mxu0 0.0
    %497 = vmatpush2.msra.mxu0 0.0
    %498 = vmatprep.subr.mxu0 0.0
    %499 = vmatpush2.msra.mxu0 0.0
    %500 = vmatprep.subr.mxu0 0.0
    %501 = vmatpush2.msra.mxu0 0.0
    %502 = vmatprep.subr.mxu0 0.0
    %503 = vmatpush2.msra.mxu0 0.0
    %504 = vmatprep.subr.mxu0 0.0
    %505 = vmatpush2.msra.mxu0 0.0
    %506 = vmatprep.subr.mxu0 0.0
    %507 = vmatpush2.msra.mxu0 0.0
    %508 = vmatprep.subr.mxu0 0.0
    %509 = vmatpush2.msra.mxu0 0.0
    %510 = vmatprep.subr.mxu0 0.0
    %511 = vmatpush2.msra.mxu0 0.0
    %512 = vmatprep.subr.mxu0 0.0
    %513 = vmatpush2.msra.mxu0 0.0
    %514 = vmatprep.mubr.f32.mxu0 0.0
    %515 = vmatmul.mubr.f32.gmra.mxu0 %v448
    %v516 = vpop.f32.mrf.mxu0
    %v517 = vadd.f32 0.0, %v516
    %v518 = vpop.f32.mrf.mxu0
    %519 = vdwg.mxu0
    %v520 = vadd.f32 %v444, %v517
    %v521 = vxor.u32 %v520, 2147483648
    %v522 = vmul.f32 %v521, 1.442695
    %v523 = vpow.pop %v522
    %v524 = vadd.f32 %v523, 1.0
    %v525 = vrcp.pop %v524
    %v526 = vmul.f32 1.0, %v525
    %v527 = vmul.f32 %v526, 2.0
    %v528 = vsub.f32 %v527, 1.0
    %v529 = vmul.f32 %v526, %v436
    %531 = vrot.lane.b32.xlu0 %v528, 64
    %v532 = vpop.permute.xlu0 %531
    %v534 = vmul.f32 %v526, %v532
    %536 = vrot.lane.b32.xlu0 %v534, 32
    %v537 = vpop.permute.xlu0 %536
    %v539 = vadd.f32 %v529, %v537
    %v540 = vtanh.pop %v539
    %542 = vrot.lane.b32.xlu0 %v540, 64
    %v543 = vpop.permute.xlu0 %542
    %v545 = vmul.f32 %v526, %v543
    %s546 = scalar_lea.vmem [#allocation2], 16
    %v547 = vld [vmem:[%s546] sm:$0xff]
    %549 = vrot.lane.b32.xlu0 %v545, 32
    %v550 = vpop.permute.xlu0 %549
    %v551 = vsel %vm343, %v550, 0
    %553 = vmatprep.subr.mxu0 0.0
    %554 = vmatpush1.msra.mxu0 0.0
    %555 = vmatprep.subr.mxu0 0.0
    %556 = vmatpush1.msra.mxu0 0.0
    %557 = vmatprep.subr.mxu0 0.0
    %558 = vmatpush1.msra.mxu0 0.0
    %559 = vmatprep.subr.mxu0 0.0
    %560 = vmatpush1.msra.mxu0 0.0
    %561 = vmatprep.subr.mxu0 0.0
    %562 = vmatpush1.msra.mxu0 0.0
    %563 = vmatprep.subr.mxu0 0.0
    %564 = vmatpush1.msra.mxu0 0.0
    %565 = vmatprep.subr.mxu0 0.0
    %566 = vmatpush1.msra.mxu0 0.0
    %567 = vmatprep.subr.mxu0 0.0
    %568 = vmatpush1.msra.mxu0 0.0
    %569 = vmatprep.subr.mxu0 0.0
    %570 = vmatpush1.msra.mxu0 0.0
    %571 = vmatprep.subr.mxu0 0.0
    %572 = vmatpush1.msra.mxu0 0.0
    %573 = vmatprep.subr.mxu0 0.0
    %574 = vmatpush1.msra.mxu0 0.0
    %575 = vmatprep.subr.mxu0 0.0
    %576 = vmatpush1.msra.mxu0 0.0
    %577 = vmatprep.subr.mxu0 0.0
    %578 = vmatpush1.msra.mxu0 %v341
    %579 = vmatprep.subr.mxu0 0.0
    %580 = vmatpush1.msra.mxu0 %v340
    %581 = vmatprep.subr.mxu0 0.0
    %582 = vmatpush1.msra.mxu0 %v339
    %583 = vmatprep.subr.mxu0 0.0
    %584 = vmatpush1.msra.mxu0 %v338
    %585 = vmatprep.subr.mxu0 0.0
    %586 = vmatpush2.msra.mxu0 0.0
    %587 = vmatprep.subr.mxu0 0.0
    %588 = vmatpush2.msra.mxu0 0.0
    %589 = vmatprep.subr.mxu0 0.0
    %590 = vmatpush2.msra.mxu0 0.0
    %591 = vmatprep.subr.mxu0 0.0
    %592 = vmatpush2.msra.mxu0 0.0
    %593 = vmatprep.subr.mxu0 0.0
    %594 = vmatpush2.msra.mxu0 0.0
    %595 = vmatprep.subr.mxu0 0.0
    %596 = vmatpush2.msra.mxu0 0.0
    %597 = vmatprep.subr.mxu0 0.0
    %598 = vmatpush2.msra.mxu0 0.0
    %599 = vmatprep.subr.mxu0 0.0
    %600 = vmatpush2.msra.mxu0 0.0
    %601 = vmatprep.subr.mxu0 0.0
    %602 = vmatpush2.msra.mxu0 0.0
    %603 = vmatprep.subr.mxu0 0.0
    %604 = vmatpush2.msra.mxu0 0.0
    %605 = vmatprep.subr.mxu0 0.0
    %606 = vmatpush2.msra.mxu0 0.0
    %607 = vmatprep.subr.mxu0 0.0
    %608 = vmatpush2.msra.mxu0 0.0
    %609 = vmatprep.subr.mxu0 0.0
    %610 = vmatpush2.msra.mxu0 0.0
    %611 = vmatprep.subr.mxu0 0.0
    %612 = vmatpush2.msra.mxu0 0.0
    %613 = vmatprep.subr.mxu0 0.0
    %614 = vmatpush2.msra.mxu0 0.0
    %615 = vmatprep.subr.mxu0 0.0
    %616 = vmatpush2.msra.mxu0 0.0
    %617 = vmatprep.mubr.f32.mxu0 0.0
    %618 = vmatmul.mubr.f32.gmra.mxu0 %v551
    %v619 = vpop.f32.mrf.mxu0
    %v620 = vadd.f32 0.0, %v619
    %v621 = vpop.f32.mrf.mxu0
    %622 = vdwg.mxu0
    %v623 = vadd.f32 %v547, %v620
    %v624 = vxor.u32 %v623, 2147483648
    %v625 = vmul.f32 %v624, 1.442695
    %v626 = vpow.pop %v625
    %v627 = vadd.f32 %v626, 1.0
    %v628 = vrcp.pop %v627
    %v629 = vmul.f32 1.0, %v628
    %v630 = vmul.f32 %v629, 2.0
    %v631 = vsub.f32 %v630, 1.0
    %v632 = vmul.f32 %v629, %v539
    %634 = vrot.lane.b32.xlu0 %v631, 64
    %v635 = vpop.permute.xlu0 %634
    %v637 = vmul.f32 %v629, %v635
    %639 = vrot.lane.b32.xlu0 %v637, 32
    %v640 = vpop.permute.xlu0 %639
    %v642 = vadd.f32 %v632, %v640
    %v643 = vtanh.pop %v642
    %645 = vrot.lane.b32.xlu0 %v643, 64
    %v646 = vpop.permute.xlu0 %645
    %v648 = vmul.f32 %v629, %v646
    %s649 = scalar_lea.vmem [#allocation2], 24
    %v650 = vld [vmem:[%s649] sm:$0xff]
    %652 = vrot.lane.b32.xlu0 %v648, 32
    %v653 = vpop.permute.xlu0 %652
    %v654 = vsel %vm343, %v653, 0
    %656 = vmatprep.subr.mxu0 0.0
    %657 = vmatpush1.msra.mxu0 0.0
    %658 = vmatprep.subr.mxu0 0.0
    %659 = vmatpush1.msra.mxu0 0.0
    %660 = vmatprep.subr.mxu0 0.0
    %661 = vmatpush1.msra.mxu0 0.0
    %662 = vmatprep.subr.mxu0 0.0
    %663 = vmatpush1.msra.mxu0 0.0
    %664 = vmatprep.subr.mxu0 0.0
    %665 = vmatpush1.msra.mxu0 0.0
    %666 = vmatprep.subr.mxu0 0.0
    %667 = vmatpush1.msra.mxu0 0.0
    %668 = vmatprep.subr.mxu0 0.0
    %669 = vmatpush1.msra.mxu0 0.0
    %670 = vmatprep.subr.mxu0 0.0
    %671 = vmatpush1.msra.mxu0 0.0
    %672 = vmatprep.subr.mxu0 0.0
    %673 = vmatpush1.msra.mxu0 0.0
    %674 = vmatprep.subr.mxu0 0.0
    %675 = vmatpush1.msra.mxu0 0.0
    %676 = vmatprep.subr.mxu0 0.0
    %677 = vmatpush1.msra.mxu0 0.0
    %678 = vmatprep.subr.mxu0 0.0
    %679 = vmatpush1.msra.mxu0 0.0
    %680 = vmatprep.subr.mxu0 0.0
    %681 = vmatpush1.msra.mxu0 %v341
    %682 = vmatprep.subr.mxu0 0.0
    %683 = vmatpush1.msra.mxu0 %v340
    %684 = vmatprep.subr.mxu0 0.0
    %685 = vmatpush1.msra.mxu0 %v339
    %686 = vmatprep.subr.mxu0 0.0
    %687 = vmatpush1.msra.mxu0 %v338
    %688 = vmatprep.subr.mxu0 0.0
    %689 = vmatpush2.msra.mxu0 0.0
    %690 = vmatprep.subr.mxu0 0.0
    %691 = vmatpush2.msra.mxu0 0.0
    %692 = vmatprep.subr.mxu0 0.0
    %693 = vmatpush2.msra.mxu0 0.0
    %694 = vmatprep.subr.mxu0 0.0
    %695 = vmatpush2.msra.mxu0 0.0
    %696 = vmatprep.subr.mxu0 0.0
    %697 = vmatpush2.msra.mxu0 0.0
    %698 = vmatprep.subr.mxu0 0.0
    %699 = vmatpush2.msra.mxu0 0.0
    %700 = vmatprep.subr.mxu0 0.0
    %701 = vmatpush2.msra.mxu0 0.0
    %702 = vmatprep.subr.mxu0 0.0
    %703 = vmatpush2.msra.mxu0 0.0
    %704 = vmatprep.subr.mxu0 0.0
    %705 = vmatpush2.msra.mxu0 0.0
    %706 = vmatprep.subr.mxu0 0.0
    %707 = vmatpush2.msra.mxu0 0.0
    %708 = vmatprep.subr.mxu0 0.0
    %709 = vmatpush2.msra.mxu0 0.0
    %710 = vmatprep.subr.mxu0 0.0
    %711 = vmatpush2.msra.mxu0 0.0
    %712 = vmatprep.subr.mxu0 0.0
    %713 = vmatpush2.msra.mxu0 0.0
    %714 = vmatprep.subr.mxu0 0.0
    %715 = vmatpush2.msra.mxu0 0.0
    %716 = vmatprep.subr.mxu0 0.0
    %717 = vmatpush2.msra.mxu0 0.0
    %718 = vmatprep.subr.mxu0 0.0
    %719 = vmatpush2.msra.mxu0 0.0
    %720 = vmatprep.mubr.f32.mxu0 0.0
    %721 = vmatmul.mubr.f32.gmra.mxu0 %v654
    %v722 = vpop.f32.mrf.mxu0
    %v723 = vadd.f32 0.0, %v722
    %v724 = vpop.f32.mrf.mxu0
    %725 = vdwg.mxu0
    %v726 = vadd.f32 %v650, %v723
    %v727 = vxor.u32 %v726, 2147483648
    %v728 = vmul.f32 %v727, 1.442695
    %v729 = vpow.pop %v728
    %v730 = vadd.f32 %v729, 1.0
    %v731 = vrcp.pop %v730
    %v732 = vmul.f32 1.0, %v731
    %v733 = vmul.f32 %v732, 2.0
    %v734 = vsub.f32 %v733, 1.0
    %v735 = vmul.f32 %v732, %v642
    %737 = vrot.lane.b32.xlu0 %v734, 64
    %v738 = vpop.permute.xlu0 %737
    %v740 = vmul.f32 %v732, %v738
    %742 = vrot.lane.b32.xlu0 %v740, 32
    %v743 = vpop.permute.xlu0 %742
    %v745 = vadd.f32 %v735, %v743
    %v746 = vtanh.pop %v745
    %748 = vrot.lane.b32.xlu0 %v746, 64
    %v749 = vpop.permute.xlu0 %748
    %v751 = vmul.f32 %v732, %v749
    %s752 = scalar_lea.vmem [#allocation2], 32
    %v753 = vld [vmem:[%s752] sm:$0xff]
    %755 = vrot.lane.b32.xlu0 %v751, 32
    %v756 = vpop.permute.xlu0 %755
    %v757 = vsel %vm343, %v756, 0
    %759 = vmatprep.subr.mxu0 0.0
    %760 = vmatpush1.msra.mxu0 0.0
    %761 = vmatprep.subr.mxu0 0.0
    %762 = vmatpush1.msra.mxu0 0.0
    %763 = vmatprep.subr.mxu0 0.0
    %764 = vmatpush1.msra.mxu0 0.0
    %765 = vmatprep.subr.mxu0 0.0
    %766 = vmatpush1.msra.mxu0 0.0
    %767 = vmatprep.subr.mxu0 0.0
    %768 = vmatpush1.msra.mxu0 0.0
    %769 = vmatprep.subr.mxu0 0.0
    %770 = vmatpush1.msra.mxu0 0.0
    %771 = vmatprep.subr.mxu0 0.0
    %772 = vmatpush1.msra.mxu0 0.0
    %773 = vmatprep.subr.mxu0 0.0
    %774 = vmatpush1.msra.mxu0 0.0
    %775 = vmatprep.subr.mxu0 0.0
    %776 = vmatpush1.msra.mxu0 0.0
    %777 = vmatprep.subr.mxu0 0.0
    %778 = vmatpush1.msra.mxu0 0.0
    %779 = vmatprep.subr.mxu0 0.0
    %780 = vmatpush1.msra.mxu0 0.0
    %781 = vmatprep.subr.mxu0 0.0
    %782 = vmatpush1.msra.mxu0 0.0
    %783 = vmatprep.subr.mxu0 0.0
    %784 = vmatpush1.msra.mxu0 %v341
    %785 = vmatprep.subr.mxu0 0.0
    %786 = vmatpush1.msra.mxu0 %v340
    %787 = vmatprep.subr.mxu0 0.0
    %788 = vmatpush1.msra.mxu0 %v339
    %789 = vmatprep.subr.mxu0 0.0
    %790 = vmatpush1.msra.mxu0 %v338
    %791 = vmatprep.subr.mxu0 0.0
    %792 = vmatpush2.msra.mxu0 0.0
    %793 = vmatprep.subr.mxu0 0.0
    %794 = vmatpush2.msra.mxu0 0.0
    %795 = vmatprep.subr.mxu0 0.0
    %796 = vmatpush2.msra.mxu0 0.0
    %797 = vmatprep.subr.mxu0 0.0
    %798 = vmatpush2.msra.mxu0 0.0
    %799 = vmatprep.subr.mxu0 0.0
    %800 = vmatpush2.msra.mxu0 0.0
    %801 = vmatprep.subr.mxu0 0.0
    %802 = vmatpush2.msra.mxu0 0.0
    %803 = vmatprep.subr.mxu0 0.0
    %804 = vmatpush2.msra.mxu0 0.0
    %805 = vmatprep.subr.mxu0 0.0
    %806 = vmatpush2.msra.mxu0 0.0
    %807 = vmatprep.subr.mxu0 0.0
    %808 = vmatpush2.msra.mxu0 0.0
    %809 = vmatprep.subr.mxu0 0.0
    %810 = vmatpush2.msra.mxu0 0.0
    %811 = vmatprep.subr.mxu0 0.0
    %812 = vmatpush2.msra.mxu0 0.0
    %813 = vmatprep.subr.mxu0 0.0
    %814 = vmatpush2.msra.mxu0 0.0
    %815 = vmatprep.subr.mxu0 0.0
    %816 = vmatpush2.msra.mxu0 0.0
    %817 = vmatprep.subr.mxu0 0.0
    %818 = vmatpush2.msra.mxu0 0.0
    %819 = vmatprep.subr.mxu0 0.0
    %820 = vmatpush2.msra.mxu0 0.0
    %821 = vmatprep.subr.mxu0 0.0
    %822 = vmatpush2.msra.mxu0 0.0
    %823 = vmatprep.mubr.f32.mxu0 0.0
    %824 = vmatmul.mubr.f32.gmra.mxu0 %v757
    %v825 = vpop.f32.mrf.mxu0
    %v826 = vadd.f32 0.0, %v825
    %v827 = vpop.f32.mrf.mxu0
    %828 = vdwg.mxu0
    %v829 = vadd.f32 %v753, %v826
    %v830 = vxor.u32 %v829, 2147483648
    %v831 = vmul.f32 %v830, 1.442695
    %v832 = vpow.pop %v831
    %v833 = vadd.f32 %v832, 1.0
    %v834 = vrcp.pop %v833
    %v835 = vmul.f32 1.0, %v834
    %v836 = vmul.f32 %v835, 2.0
    %v837 = vsub.f32 %v836, 1.0
    %v838 = vmul.f32 %v835, %v745
    %840 = vrot.lane.b32.xlu0 %v837, 64
    %v841 = vpop.permute.xlu0 %840
    %v843 = vmul.f32 %v835, %v841
    %845 = vrot.lane.b32.xlu0 %v843, 32
    %v846 = vpop.permute.xlu0 %845
    %v848 = vadd.f32 %v838, %v846
    %v849 = vtanh.pop %v848
    %851 = vrot.lane.b32.xlu0 %v849, 64
    %v852 = vpop.permute.xlu0 %851
    %v854 = vmul.f32 %v835, %v852
    %s855 = scalar_lea.vmem [#allocation2], 40
    %v856 = vld [vmem:[%s855] sm:$0xff]
    %858 = vrot.lane.b32.xlu0 %v854, 32
    %v859 = vpop.permute.xlu0 %858
    %v860 = vsel %vm343, %v859, 0
    %862 = vmatprep.subr.mxu0 0.0
    %863 = vmatpush1.msra.mxu0 0.0
    %864 = vmatprep.subr.mxu0 0.0
    %865 = vmatpush1.msra.mxu0 0.0
    %866 = vmatprep.subr.mxu0 0.0
    %867 = vmatpush1.msra.mxu0 0.0
    %868 = vmatprep.subr.mxu0 0.0
    %869 = vmatpush1.msra.mxu0 0.0
    %870 = vmatprep.subr.mxu0 0.0
    %871 = vmatpush1.msra.mxu0 0.0
    %872 = vmatprep.subr.mxu0 0.0
    %873 = vmatpush1.msra.mxu0 0.0
    %874 = vmatprep.subr.mxu0 0.0
    %875 = vmatpush1.msra.mxu0 0.0
    %876 = vmatprep.subr.mxu0 0.0
    %877 = vmatpush1.msra.mxu0 0.0
    %878 = vmatprep.subr.mxu0 0.0
    %879 = vmatpush1.msra.mxu0 0.0
    %880 = vmatprep.subr.mxu0 0.0
    %881 = vmatpush1.msra.mxu0 0.0
    %882 = vmatprep.subr.mxu0 0.0
    %883 = vmatpush1.msra.mxu0 0.0
    %884 = vmatprep.subr.mxu0 0.0
    %885 = vmatpush1.msra.mxu0 0.0
    %886 = vmatprep.subr.mxu0 0.0
    %887 = vmatpush1.msra.mxu0 %v341
    %888 = vmatprep.subr.mxu0 0.0
    %889 = vmatpush1.msra.mxu0 %v340
    %890 = vmatprep.subr.mxu0 0.0
    %891 = vmatpush1.msra.mxu0 %v339
    %892 = vmatprep.subr.mxu0 0.0
    %893 = vmatpush1.msra.mxu0 %v338
    %894 = vmatprep.subr.mxu0 0.0
    %895 = vmatpush2.msra.mxu0 0.0
    %896 = vmatprep.subr.mxu0 0.0
    %897 = vmatpush2.msra.mxu0 0.0
    %898 = vmatprep.subr.mxu0 0.0
    %899 = vmatpush2.msra.mxu0 0.0
    %900 = vmatprep.subr.mxu0 0.0
    %901 = vmatpush2.msra.mxu0 0.0
    %902 = vmatprep.subr.mxu0 0.0
    %903 = vmatpush2.msra.mxu0 0.0
    %904 = vmatprep.subr.mxu0 0.0
    %905 = vmatpush2.msra.mxu0 0.0
    %906 = vmatprep.subr.mxu0 0.0
    %907 = vmatpush2.msra.mxu0 0.0
    %908 = vmatprep.subr.mxu0 0.0
    %909 = vmatpush2.msra.mxu0 0.0
    %910 = vmatprep.subr.mxu0 0.0
    %911 = vmatpush2.msra.mxu0 0.0
    %912 = vmatprep.subr.mxu0 0.0
    %913 = vmatpush2.msra.mxu0 0.0
    %914 = vmatprep.subr.mxu0 0.0
    %915 = vmatpush2.msra.mxu0 0.0
    %916 = vmatprep.subr.mxu0 0.0
    %917 = vmatpush2.msra.mxu0 0.0
    %918 = vmatprep.subr.mxu0 0.0
    %919 = vmatpush2.msra.mxu0 0.0
    %920 = vmatprep.subr.mxu0 0.0
    %921 = vmatpush2.msra.mxu0 0.0
    %922 = vmatprep.subr.mxu0 0.0
    %923 = vmatpush2.msra.mxu0 0.0
    %924 = vmatprep.subr.mxu0 0.0
    %925 = vmatpush2.msra.mxu0 0.0
    %926 = vmatprep.mubr.f32.mxu0 0.0
    %927 = vmatmul.mubr.f32.gmra.mxu0 %v860
    %v928 = vpop.f32.mrf.mxu0
    %v929 = vadd.f32 0.0, %v928
    %v930 = vpop.f32.mrf.mxu0
    %931 = vdwg.mxu0
    %v932 = vadd.f32 %v856, %v929
    %v933 = vxor.u32 %v932, 2147483648
    %v934 = vmul.f32 %v933, 1.442695
    %v935 = vpow.pop %v934
    %v936 = vadd.f32 %v935, 1.0
    %v937 = vrcp.pop %v936
    %v938 = vmul.f32 1.0, %v937
    %v939 = vmul.f32 %v938, 2.0
    %v940 = vsub.f32 %v939, 1.0
    %v941 = vmul.f32 %v938, %v848
    %943 = vrot.lane.b32.xlu0 %v940, 64
    %v944 = vpop.permute.xlu0 %943
    %v946 = vmul.f32 %v938, %v944
    %948 = vrot.lane.b32.xlu0 %v946, 32
    %v949 = vpop.permute.xlu0 %948
    %v951 = vadd.f32 %v941, %v949
    %v952 = vtanh.pop %v951
    %954 = vrot.lane.b32.xlu0 %v952, 64
    %v955 = vpop.permute.xlu0 %954
    %v957 = vmul.f32 %v938, %v955
    %s958 = scalar_lea.vmem [#allocation2], 48
    %v959 = vld [vmem:[%s958] sm:$0xff]
    %961 = vrot.lane.b32.xlu0 %v957, 32
    %v962 = vpop.permute.xlu0 %961
    %v963 = vsel %vm343, %v962, 0
    %965 = vmatprep.subr.mxu0 0.0
    %966 = vmatpush1.msra.mxu0 0.0
    %967 = vmatprep.subr.mxu0 0.0
    %968 = vmatpush1.msra.mxu0 0.0
    %969 = vmatprep.subr.mxu0 0.0
    %970 = vmatpush1.msra.mxu0 0.0
    %971 = vmatprep.subr.mxu0 0.0
    %972 = vmatpush1.msra.mxu0 0.0
    %973 = vmatprep.subr.mxu0 0.0
    %974 = vmatpush1.msra.mxu0 0.0
    %975 = vmatprep.subr.mxu0 0.0
    %976 = vmatpush1.msra.mxu0 0.0
    %977 = vmatprep.subr.mxu0 0.0
    %978 = vmatpush1.msra.mxu0 0.0
    %979 = vmatprep.subr.mxu0 0.0
    %980 = vmatpush1.msra.mxu0 0.0
    %981 = vmatprep.subr.mxu0 0.0
    %982 = vmatpush1.msra.mxu0 0.0
    %983 = vmatprep.subr.mxu0 0.0
    %984 = vmatpush1.msra.mxu0 0.0
    %985 = vmatprep.subr.mxu0 0.0
    %986 = vmatpush1.msra.mxu0 0.0
    %987 = vmatprep.subr.mxu0 0.0
    %988 = vmatpush1.msra.mxu0 0.0
    %989 = vmatprep.subr.mxu0 0.0
    %990 = vmatpush1.msra.mxu0 %v341
    %991 = vmatprep.subr.mxu0 0.0
    %992 = vmatpush1.msra.mxu0 %v340
    %993 = vmatprep.subr.mxu0 0.0
    %994 = vmatpush1.msra.mxu0 %v339
    %995 = vmatprep.subr.mxu0 0.0
    %996 = vmatpush1.msra.mxu0 %v338
    %997 = vmatprep.subr.mxu0 0.0
    %998 = vmatpush2.msra.mxu0 0.0
    %999 = vmatprep.subr.mxu0 0.0
    %1000 = vmatpush2.msra.mxu0 0.0
    %1001 = vmatprep.subr.mxu0 0.0
    %1002 = vmatpush2.msra.mxu0 0.0
    %1003 = vmatprep.subr.mxu0 0.0
    %1004 = vmatpush2.msra.mxu0 0.0
    %1005 = vmatprep.subr.mxu0 0.0
    %1006 = vmatpush2.msra.mxu0 0.0
    %1007 = vmatprep.subr.mxu0 0.0
    %1008 = vmatpush2.msra.mxu0 0.0
    %1009 = vmatprep.subr.mxu0 0.0
    %1010 = vmatpush2.msra.mxu0 0.0
    %1011 = vmatprep.subr.mxu0 0.0
    %1012 = vmatpush2.msra.mxu0 0.0
    %1013 = vmatprep.subr.mxu0 0.0
    %1014 = vmatpush2.msra.mxu0 0.0
    %1015 = vmatprep.subr.mxu0 0.0
    %1016 = vmatpush2.msra.mxu0 0.0
    %1017 = vmatprep.subr.mxu0 0.0
    %1018 = vmatpush2.msra.mxu0 0.0
    %1019 = vmatprep.subr.mxu0 0.0
    %1020 = vmatpush2.msra.mxu0 0.0
    %1021 = vmatprep.subr.mxu0 0.0
    %1022 = vmatpush2.msra.mxu0 0.0
    %1023 = vmatprep.subr.mxu0 0.0
    %1024 = vmatpush2.msra.mxu0 0.0
    %1025 = vmatprep.subr.mxu0 0.0
    %1026 = vmatpush2.msra.mxu0 0.0
    %1027 = vmatprep.subr.mxu0 0.0
    %1028 = vmatpush2.msra.mxu0 0.0
    %1029 = vmatprep.mubr.f32.mxu0 0.0
    %1030 = vmatmul.mubr.f32.gmra.mxu0 %v963
    %v1031 = vpop.f32.mrf.mxu0
    %v1032 = vadd.f32 0.0, %v1031
    %v1033 = vpop.f32.mrf.mxu0
    %1034 = vdwg.mxu0
    %v1035 = vadd.f32 %v959, %v1032
    %v1036 = vxor.u32 %v1035, 2147483648
    %v1037 = vmul.f32 %v1036, 1.442695
    %v1038 = vpow.pop %v1037
    %v1039 = vadd.f32 %v1038, 1.0
    %v1040 = vrcp.pop %v1039
    %v1041 = vmul.f32 1.0, %v1040
    %v1042 = vmul.f32 %v1041, 2.0
    %v1043 = vsub.f32 %v1042, 1.0
    %v1044 = vmul.f32 %v1041, %v951
    %1046 = vrot.lane.b32.xlu0 %v1043, 64
    %v1047 = vpop.permute.xlu0 %1046
    %v1049 = vmul.f32 %v1041, %v1047
    %1051 = vrot.lane.b32.xlu0 %v1049, 32
    %v1052 = vpop.permute.xlu0 %1051
    %v1054 = vadd.f32 %v1044, %v1052
    %v1055 = vtanh.pop %v1054
    %1057 = vrot.lane.b32.xlu0 %v1055, 64
    %v1058 = vpop.permute.xlu0 %1057
    %v1060 = vmul.f32 %v1041, %v1058
    %s1061 = scalar_lea.vmem [#allocation2], 56
    %v1062 = vld [vmem:[%s1061] sm:$0xff]
    %1064 = vrot.lane.b32.xlu0 %v1060, 32
    %v1065 = vpop.permute.xlu0 %1064
    %v1066 = vsel %vm343, %v1065, 0
    %1068 = vmatprep.subr.mxu0 0.0
    %1069 = vmatpush1.msra.mxu0 0.0
    %1070 = vmatprep.subr.mxu0 0.0
    %1071 = vmatpush1.msra.mxu0 0.0
    %1072 = vmatprep.subr.mxu0 0.0
    %1073 = vmatpush1.msra.mxu0 0.0
    %1074 = vmatprep.subr.mxu0 0.0
    %1075 = vmatpush1.msra.mxu0 0.0
    %1076 = vmatprep.subr.mxu0 0.0
    %1077 = vmatpush1.msra.mxu0 0.0
    %1078 = vmatprep.subr.mxu0 0.0
    %1079 = vmatpush1.msra.mxu0 0.0
    %1080 = vmatprep.subr.mxu0 0.0
    %1081 = vmatpush1.msra.mxu0 0.0
    %1082 = vmatprep.subr.mxu0 0.0
    %1083 = vmatpush1.msra.mxu0 0.0
    %1084 = vmatprep.subr.mxu0 0.0
    %1085 = vmatpush1.msra.mxu0 0.0
    %1086 = vmatprep.subr.mxu0 0.0
    %1087 = vmatpush1.msra.mxu0 0.0
    %1088 = vmatprep.subr.mxu0 0.0
    %1089 = vmatpush1.msra.mxu0 0.0
    %1090 = vmatprep.subr.mxu0 0.0
    %1091 = vmatpush1.msra.mxu0 0.0
    %1092 = vmatprep.subr.mxu0 0.0
    %1093 = vmatpush1.msra.mxu0 %v341
    %1094 = vmatprep.subr.mxu0 0.0
    %1095 = vmatpush1.msra.mxu0 %v340
    %1096 = vmatprep.subr.mxu0 0.0
    %1097 = vmatpush1.msra.mxu0 %v339
    %1098 = vmatprep.subr.mxu0 0.0
    %1099 = vmatpush1.msra.mxu0 %v338
    %1100 = vmatprep.subr.mxu0 0.0
    %1101 = vmatpush2.msra.mxu0 0.0
    %1102 = vmatprep.subr.mxu0 0.0
    %1103 = vmatpush2.msra.mxu0 0.0
    %1104 = vmatprep.subr.mxu0 0.0
    %1105 = vmatpush2.msra.mxu0 0.0
    %1106 = vmatprep.subr.mxu0 0.0
    %1107 = vmatpush2.msra.mxu0 0.0
    %1108 = vmatprep.subr.mxu0 0.0
    %1109 = vmatpush2.msra.mxu0 0.0
    %1110 = vmatprep.subr.mxu0 0.0
    %1111 = vmatpush2.msra.mxu0 0.0
    %1112 = vmatprep.subr.mxu0 0.0
    %1113 = vmatpush2.msra.mxu0 0.0
    %1114 = vmatprep.subr.mxu0 0.0
    %1115 = vmatpush2.msra.mxu0 0.0
    %1116 = vmatprep.subr.mxu0 0.0
    %1117 = vmatpush2.msra.mxu0 0.0
    %1118 = vmatprep.subr.mxu0 0.0
    %1119 = vmatpush2.msra.mxu0 0.0
    %1120 = vmatprep.subr.mxu0 0.0
    %1121 = vmatpush2.msra.mxu0 0.0
    %1122 = vmatprep.subr.mxu0 0.0
    %1123 = vmatpush2.msra.mxu0 0.0
    %1124 = vmatprep.subr.mxu0 0.0
    %1125 = vmatpush2.msra.mxu0 0.0
    %1126 = vmatprep.subr.mxu0 0.0
    %1127 = vmatpush2.msra.mxu0 0.0
    %1128 = vmatprep.subr.mxu0 0.0
    %1129 = vmatpush2.msra.mxu0 0.0
    %1130 = vmatprep.subr.mxu0 0.0
    %1131 = vmatpush2.msra.mxu0 0.0
    %1132 = vmatprep.mubr.f32.mxu0 0.0
    %1133 = vmatmul.mubr.f32.gmra.mxu0 %v1066
    %v1134 = vpop.f32.mrf.mxu0
    %v1135 = vadd.f32 0.0, %v1134
    %v1136 = vpop.f32.mrf.mxu0
    %1137 = vdwg.mxu0
    %v1138 = vadd.f32 %v1062, %v1135
    %v1139 = vxor.u32 %v1138, 2147483648
    %v1140 = vmul.f32 %v1139, 1.442695
    %v1141 = vpow.pop %v1140
    %v1142 = vadd.f32 %v1141, 1.0
    %v1143 = vrcp.pop %v1142
    %v1144 = vmul.f32 1.0, %v1143
    %v1145 = vmul.f32 %v1144, 2.0
    %v1146 = vsub.f32 %v1145, 1.0
    %v1147 = vmul.f32 %v1144, %v1054
    %1149 = vrot.lane.b32.xlu0 %v1146, 64
    %v1150 = vpop.permute.xlu0 %1149
    %v1152 = vmul.f32 %v1144, %v1150
    %1154 = vrot.lane.b32.xlu0 %v1152, 32
    %v1155 = vpop.permute.xlu0 %1154
    %v1157 = vadd.f32 %v1147, %v1155
    %v1158 = vtanh.pop %v1157
    %1160 = vrot.lane.b32.xlu0 %v1158, 64
    %v1161 = vpop.permute.xlu0 %1160
    %v1163 = vmul.f32 %v1144, %v1161
    %v1164 = vld [vmem:[#allocation11] sm:$0xff]
    %v1165 = vld [vmem:[#allocation11 + $0x8] sm:$0xff]
    %v1166 = vld [vmem:[%s5] sm:$0x1]
    %v1168 = vlaneseq
    %v1169 = vshrl.u32 %v1168, 7
    %v1170 = vsub.s32 0, %v1169
    %v1171 = vrot.slane %v1166, %v1170
    %1173 = vmatprep.subr.mxu0 0.0
    %1174 = vmatpush1.msra.mxu0 0.0
    %1175 = vmatprep.subr.mxu0 0.0
    %1176 = vmatpush1.msra.mxu0 0.0
    %1177 = vmatprep.subr.mxu0 0.0
    %1178 = vmatpush1.msra.mxu0 0.0
    %1179 = vmatprep.subr.mxu0 0.0
    %1180 = vmatpush1.msra.mxu0 0.0
    %1181 = vmatprep.subr.mxu0 0.0
    %1182 = vmatpush1.msra.mxu0 0.0
    %1183 = vmatprep.subr.mxu0 0.0
    %1184 = vmatpush1.msra.mxu0 0.0
    %1185 = vmatprep.subr.mxu0 0.0
    %1186 = vmatpush1.msra.mxu0 0.0
    %1187 = vmatprep.subr.mxu0 0.0
    %1188 = vmatpush1.msra.mxu0 0.0
    %1189 = vmatprep.subr.mxu0 0.0
    %1190 = vmatpush1.msra.mxu0 0.0
    %1191 = vmatprep.subr.mxu0 0.0
    %1192 = vmatpush1.msra.mxu0 0.0
    %1193 = vmatprep.subr.mxu0 0.0
    %1194 = vmatpush1.msra.mxu0 0.0
    %1195 = vmatprep.subr.mxu0 0.0
    %1196 = vmatpush1.msra.mxu0 0.0
    %1197 = vmatprep.subr.mxu0 0.0
    %1198 = vmatpush1.msra.mxu0 0.0
    %1199 = vmatprep.subr.mxu0 0.0
    %1200 = vmatpush1.msra.mxu0 0.0
    %1201 = vmatprep.subr.mxu0 0.0
    %1202 = vmatpush1.msra.mxu0 %v1165
    %1203 = vmatprep.subr.mxu0 0.0
    %1204 = vmatpush1.msra.mxu0 %v1164
    %1205 = vmatprep.subr.mxu0 0.0
    %1206 = vmatpush2.msra.mxu0 0.0
    %1207 = vmatprep.subr.mxu0 0.0
    %1208 = vmatpush2.msra.mxu0 0.0
    %1209 = vmatprep.subr.mxu0 0.0
    %1210 = vmatpush2.msra.mxu0 0.0
    %1211 = vmatprep.subr.mxu0 0.0
    %1212 = vmatpush2.msra.mxu0 0.0
    %1213 = vmatprep.subr.mxu0 0.0
    %1214 = vmatpush2.msra.mxu0 0.0
    %1215 = vmatprep.subr.mxu0 0.0
    %1216 = vmatpush2.msra.mxu0 0.0
    %1217 = vmatprep.subr.mxu0 0.0
    %1218 = vmatpush2.msra.mxu0 0.0
    %1219 = vmatprep.subr.mxu0 0.0
    %1220 = vmatpush2.msra.mxu0 0.0
    %1221 = vmatprep.subr.mxu0 0.0
    %1222 = vmatpush2.msra.mxu0 0.0
    %1223 = vmatprep.subr.mxu0 0.0
    %1224 = vmatpush2.msra.mxu0 0.0
    %1225 = vmatprep.subr.mxu0 0.0
    %1226 = vmatpush2.msra.mxu0 0.0
    %1227 = vmatprep.subr.mxu0 0.0
    %1228 = vmatpush2.msra.mxu0 0.0
    %1229 = vmatprep.subr.mxu0 0.0
    %1230 = vmatpush2.msra.mxu0 0.0
    %1231 = vmatprep.subr.mxu0 0.0
    %1232 = vmatpush2.msra.mxu0 0.0
    %1233 = vmatprep.subr.mxu0 0.0
    %1234 = vmatpush2.msra.mxu0 0.0
    %1235 = vmatprep.subr.mxu0 0.0
    %1236 = vmatpush2.msra.mxu0 0.0
    %1237 = vmatprep.mubr.f32.mxu0 0.0
    %1238 = vmatmul.mubr.f32.gmra.mxu0 %v192
    %v1239 = vpop.f32.mrf.mxu0
    %v1240 = vadd.f32 %v1171, %v1239
    %v1241 = vpop.f32.mrf.mxu0
    %1242 = vdwg.mxu0
    %v1243 = vxor.u32 %v1240, 2147483648
    %v1244 = vmul.f32 %v1243, 1.442695
    %v1245 = vpow.pop %v1244
    %v1246 = vadd.f32 %v1245, 1.0
    %v1247 = vrcp.pop %v1246
    %v1248 = vmul.f32 1.0, %v1247
    %v1249 = vmul.f32 %v1248, 2.0
    %v1250 = vsub.f32 %v1249, 1.0
    %v1251 = vmul.f32 %v1248, 0.0
    %1253 = vrot.lane.b32.xlu0 %v1250, 64
    %v1254 = vpop.permute.xlu0 %1253
    %v1256 = vmul.f32 %v1248, %v1254
    %1258 = vrot.lane.b32.xlu0 %v1256, 32
    %v1259 = vpop.permute.xlu0 %1258
    %v1261 = vadd.f32 %v1251, %v1259
    %v1262 = vtanh.pop %v1261
    %1264 = vrot.lane.b32.xlu0 %v1262, 64
    %v1265 = vpop.permute.xlu0 %1264
    %v1267 = vmul.f32 %v1248, %v1265
    %v1268 = vld [vmem:[#allocation13] sm:$0xff]
    %v1269 = vld [vmem:[#allocation13 + $0x8] sm:$0xff]
    %v1270 = vld [vmem:[#allocation13 + $0x10] sm:$0xff]
    %v1271 = vld [vmem:[#allocation13 + $0x18] sm:$0xff]
    %v1272 = vld [vmem:[#allocation13 + $0x20] sm:$0xff]
    %v1273 = vld [vmem:[#allocation13 + $0x28] sm:$0xff]
    %v1274 = vld [vmem:[#allocation13 + $0x30] sm:$0xff]
    %v1275 = vld [vmem:[#allocation13 + $0x38] sm:$0xff]
    %1277 = vrot.lane.b32.xlu0 %v1267, 32
    %v1278 = vpop.permute.xlu0 %1277
    %v1279 = vsel %vm343, %v1278, 0
    %1281 = vmatprep.subr.mxu0 0.0
    %1282 = vmatpush1.msra.mxu0 0.0
    %1283 = vmatprep.subr.mxu0 0.0
    %1284 = vmatpush1.msra.mxu0 0.0
    %1285 = vmatprep.subr.mxu0 0.0
    %1286 = vmatpush1.msra.mxu0 0.0
    %1287 = vmatprep.subr.mxu0 0.0
    %1288 = vmatpush1.msra.mxu0 0.0
    %1289 = vmatprep.subr.mxu0 0.0
    %1290 = vmatpush1.msra.mxu0 0.0
    %1291 = vmatprep.subr.mxu0 0.0
    %1292 = vmatpush1.msra.mxu0 0.0
    %1293 = vmatprep.subr.mxu0 0.0
    %1294 = vmatpush1.msra.mxu0 0.0
    %1295 = vmatprep.subr.mxu0 0.0
    %1296 = vmatpush1.msra.mxu0 0.0
    %1297 = vmatprep.subr.mxu0 0.0
    %1298 = vmatpush1.msra.mxu0 0.0
    %1299 = vmatprep.subr.mxu0 0.0
    %1300 = vmatpush1.msra.mxu0 0.0
    %1301 = vmatprep.subr.mxu0 0.0
    %1302 = vmatpush1.msra.mxu0 0.0
    %1303 = vmatprep.subr.mxu0 0.0
    %1304 = vmatpush1.msra.mxu0 0.0
    %1305 = vmatprep.subr.mxu0 0.0
    %1306 = vmatpush1.msra.mxu0 %v1275
    %1307 = vmatprep.subr.mxu0 0.0
    %1308 = vmatpush1.msra.mxu0 %v1274
    %1309 = vmatprep.subr.mxu0 0.0
    %1310 = vmatpush1.msra.mxu0 %v1273
    %1311 = vmatprep.subr.mxu0 0.0
    %1312 = vmatpush1.msra.mxu0 %v1272
    %1313 = vmatprep.subr.mxu0 0.0
    %1314 = vmatpush2.msra.mxu0 0.0
    %1315 = vmatprep.subr.mxu0 0.0
    %1316 = vmatpush2.msra.mxu0 0.0
    %1317 = vmatprep.subr.mxu0 0.0
    %1318 = vmatpush2.msra.mxu0 0.0
    %1319 = vmatprep.subr.mxu0 0.0
    %1320 = vmatpush2.msra.mxu0 0.0
    %1321 = vmatprep.subr.mxu0 0.0
    %1322 = vmatpush2.msra.mxu0 0.0
    %1323 = vmatprep.subr.mxu0 0.0
    %1324 = vmatpush2.msra.mxu0 0.0
    %1325 = vmatprep.subr.mxu0 0.0
    %1326 = vmatpush2.msra.mxu0 0.0
    %1327 = vmatprep.subr.mxu0 0.0
    %1328 = vmatpush2.msra.mxu0 0.0
    %1329 = vmatprep.subr.mxu0 0.0
    %1330 = vmatpush2.msra.mxu0 0.0
    %1331 = vmatprep.subr.mxu0 0.0
    %1332 = vmatpush2.msra.mxu0 0.0
    %1333 = vmatprep.subr.mxu0 0.0
    %1334 = vmatpush2.msra.mxu0 0.0
    %1335 = vmatprep.subr.mxu0 0.0
    %1336 = vmatpush2.msra.mxu0 0.0
    %1337 = vmatprep.subr.mxu0 0.0
    %1338 = vmatpush2.msra.mxu0 0.0
    %1339 = vmatprep.subr.mxu0 0.0
    %1340 = vmatpush2.msra.mxu0 0.0
    %1341 = vmatprep.subr.mxu0 0.0
    %1342 = vmatpush2.msra.mxu0 0.0
    %1343 = vmatprep.subr.mxu0 0.0
    %1344 = vmatpush2.msra.mxu0 0.0
    %1345 = vmatprep.mubr.f32.mxu0 0.0
    %1346 = vmatmul.mubr.f32.gmra.mxu0 %v1279
    %v1347 = vpop.f32.mrf.mxu0
    %v1348 = vadd.f32 0.0, %v1347
    %v1349 = vpop.f32.mrf.mxu0
    %1350 = vdwg.mxu0
    %1352 = vrot.lane.b32.xlu0 %v1163, 32
    %v1353 = vpop.permute.xlu0 %1352
    %v1354 = vsel %vm343, %v1353, 0
    %1356 = vmatprep.subr.mxu0 0.0
    %1357 = vmatpush1.msra.mxu0 0.0
    %1358 = vmatprep.subr.mxu0 0.0
    %1359 = vmatpush1.msra.mxu0 0.0
    %1360 = vmatprep.subr.mxu0 0.0
    %1361 = vmatpush1.msra.mxu0 0.0
    %1362 = vmatprep.subr.mxu0 0.0
    %1363 = vmatpush1.msra.mxu0 0.0
    %1364 = vmatprep.subr.mxu0 0.0
    %1365 = vmatpush1.msra.mxu0 0.0
    %1366 = vmatprep.subr.mxu0 0.0
    %1367 = vmatpush1.msra.mxu0 0.0
    %1368 = vmatprep.subr.mxu0 0.0
    %1369 = vmatpush1.msra.mxu0 0.0
    %1370 = vmatprep.subr.mxu0 0.0
    %1371 = vmatpush1.msra.mxu0 0.0
    %1372 = vmatprep.subr.mxu0 0.0
    %1373 = vmatpush1.msra.mxu0 0.0
    %1374 = vmatprep.subr.mxu0 0.0
    %1375 = vmatpush1.msra.mxu0 0.0
    %1376 = vmatprep.subr.mxu0 0.0
    %1377 = vmatpush1.msra.mxu0 0.0
    %1378 = vmatprep.subr.mxu0 0.0
    %1379 = vmatpush1.msra.mxu0 0.0
    %1380 = vmatprep.subr.mxu0 0.0
    %1381 = vmatpush1.msra.mxu0 %v1271
    %1382 = vmatprep.subr.mxu0 0.0
    %1383 = vmatpush1.msra.mxu0 %v1270
    %1384 = vmatprep.subr.mxu0 0.0
    %1385 = vmatpush1.msra.mxu0 %v1269
    %1386 = vmatprep.subr.mxu0 0.0
    %1387 = vmatpush1.msra.mxu0 %v1268
    %1388 = vmatprep.subr.mxu0 0.0
    %1389 = vmatpush2.msra.mxu0 0.0
    %1390 = vmatprep.subr.mxu0 0.0
    %1391 = vmatpush2.msra.mxu0 0.0
    %1392 = vmatprep.subr.mxu0 0.0
    %1393 = vmatpush2.msra.mxu0 0.0
    %1394 = vmatprep.subr.mxu0 0.0
    %1395 = vmatpush2.msra.mxu0 0.0
    %1396 = vmatprep.subr.mxu0 0.0
    %1397 = vmatpush2.msra.mxu0 0.0
    %1398 = vmatprep.subr.mxu0 0.0
    %1399 = vmatpush2.msra.mxu0 0.0
    %1400 = vmatprep.subr.mxu0 0.0
    %1401 = vmatpush2.msra.mxu0 0.0
    %1402 = vmatprep.subr.mxu0 0.0
    %1403 = vmatpush2.msra.mxu0 0.0
    %1404 = vmatprep.subr.mxu0 0.0
    %1405 = vmatpush2.msra.mxu0 0.0
    %1406 = vmatprep.subr.mxu0 0.0
    %1407 = vmatpush2.msra.mxu0 0.0
    %1408 = vmatprep.subr.mxu0 0.0
    %1409 = vmatpush2.msra.mxu0 0.0
    %1410 = vmatprep.subr.mxu0 0.0
    %1411 = vmatpush2.msra.mxu0 0.0
    %1412 = vmatprep.subr.mxu0 0.0
    %1413 = vmatpush2.msra.mxu0 0.0
    %1414 = vmatprep.subr.mxu0 0.0
    %1415 = vmatpush2.msra.mxu0 0.0
    %1416 = vmatprep.subr.mxu0 0.0
    %1417 = vmatpush2.msra.mxu0 0.0
    %1418 = vmatprep.subr.mxu0 0.0
    %1419 = vmatpush2.msra.mxu0 0.0
    %1420 = vmatprep.mubr.f32.mxu0 0.0
    %1421 = vmatmul.mubr.f32.gmra.mxu0 %v1354
    %v1422 = vpop.f32.mrf.mxu0
    %v1423 = vadd.f32 %v1348, %v1422
    %v1424 = vpop.f32.mrf.mxu0
    %1425 = vdwg.mxu0
    %v1426 = vld [vmem:[%s7] sm:$0x1]
    %v1428 = vlaneseq
    %v1429 = vshrl.u32 %v1428, 7
    %v1430 = vsub.s32 0, %v1429
    %v1431 = vrot.slane %v1426, %v1430
    %v1433 = vadd.f32 %v1423, %v1431
    %v1434 = vtanh.pop %v1433
    %1435 = vst [vmem:[#allocation20] sm:$0xff] %v1434
    %v1436 = vld [vmem:[#allocation14] sm:$0xff]
    %v1437 = vld [vmem:[#allocation14 + $0x8] sm:$0xff]
    %v1438 = vld [vmem:[#allocation14 + $0x10] sm:$0xff]
    %v1439 = vld [vmem:[#allocation14 + $0x18] sm:$0xff]
    %v1440 = vld [vmem:[#allocation14 + $0x20] sm:$0xff]
    %v1441 = vld [vmem:[#allocation14 + $0x28] sm:$0xff]
    %v1442 = vld [vmem:[#allocation14 + $0x30] sm:$0xff]
    %v1443 = vld [vmem:[#allocation14 + $0x38] sm:$0xff]
    %v1444 = vld [vmem:[#allocation14 + $0x40] sm:$0xff]
    %v1445 = vld [vmem:[#allocation14 + $0x48] sm:$0xff]
    %v1446 = vld [vmem:[#allocation14 + $0x50] sm:$0xff]
    %v1447 = vld [vmem:[#allocation14 + $0x58] sm:$0xff]
    %v1448 = vld [vmem:[#allocation14 + $0x60] sm:$0xff]
    %v1449 = vld [vmem:[#allocation14 + $0x68] sm:$0xff]
    %v1450 = vld [vmem:[#allocation14 + $0x70] sm:$0xff]
    %v1451 = vld [vmem:[#allocation14 + $0x78] sm:$0xff]
    %v1452 = vld [vmem:[%s10] sm:$0x1]
    %v1454 = vlaneseq
    %v1455 = vshrl.u32 %v1454, 7
    %v1456 = vsub.s32 0, %v1455
    %v1457 = vrot.slane %v1452, %v1456
    %1459 = vmatprep.subr.mxu0 0.0
    %1460 = vmatpush1.msra.mxu0 %v1451
    %1461 = vmatprep.subr.mxu0 0.0
    %1462 = vmatpush1.msra.mxu0 %v1450
    %1463 = vmatprep.subr.mxu0 0.0
    %1464 = vmatpush1.msra.mxu0 %v1449
    %1465 = vmatprep.subr.mxu0 0.0
    %1466 = vmatpush1.msra.mxu0 %v1448
    %1467 = vmatprep.subr.mxu0 0.0
    %1468 = vmatpush1.msra.mxu0 %v1447
    %1469 = vmatprep.subr.mxu0 0.0
    %1470 = vmatpush1.msra.mxu0 %v1446
    %1471 = vmatprep.subr.mxu0 0.0
    %1472 = vmatpush1.msra.mxu0 %v1445
    %1473 = vmatprep.subr.mxu0 0.0
    %1474 = vmatpush1.msra.mxu0 %v1444
    %1475 = vmatprep.subr.mxu0 0.0
    %1476 = vmatpush1.msra.mxu0 %v1443
    %1477 = vmatprep.subr.mxu0 0.0
    %1478 = vmatpush1.msra.mxu0 %v1442
    %1479 = vmatprep.subr.mxu0 0.0
    %1480 = vmatpush1.msra.mxu0 %v1441
    %1481 = vmatprep.subr.mxu0 0.0
    %1482 = vmatpush1.msra.mxu0 %v1440
    %1483 = vmatprep.subr.mxu0 0.0
    %1484 = vmatpush1.msra.mxu0 %v1439
    %1485 = vmatprep.subr.mxu0 0.0
    %1486 = vmatpush1.msra.mxu0 %v1438
    %1487 = vmatprep.subr.mxu0 0.0
    %1488 = vmatpush1.msra.mxu0 %v1437
    %1489 = vmatprep.subr.mxu0 0.0
    %1490 = vmatpush1.msra.mxu0 %v1436
    %1491 = vmatprep.subr.mxu0 0.0
    %1492 = vmatpush2.msra.mxu0 0.0
    %1493 = vmatprep.subr.mxu0 0.0
    %1494 = vmatpush2.msra.mxu0 0.0
    %1495 = vmatprep.subr.mxu0 0.0
    %1496 = vmatpush2.msra.mxu0 0.0
    %1497 = vmatprep.subr.mxu0 0.0
    %1498 = vmatpush2.msra.mxu0 0.0
    %1499 = vmatprep.subr.mxu0 0.0
    %1500 = vmatpush2.msra.mxu0 0.0
    %1501 = vmatprep.subr.mxu0 0.0
    %1502 = vmatpush2.msra.mxu0 0.0
    %1503 = vmatprep.subr.mxu0 0.0
    %1504 = vmatpush2.msra.mxu0 0.0
    %1505 = vmatprep.subr.mxu0 0.0
    %1506 = vmatpush2.msra.mxu0 0.0
    %1507 = vmatprep.subr.mxu0 0.0
    %1508 = vmatpush2.msra.mxu0 0.0
    %1509 = vmatprep.subr.mxu0 0.0
    %1510 = vmatpush2.msra.mxu0 0.0
    %1511 = vmatprep.subr.mxu0 0.0
    %1512 = vmatpush2.msra.mxu0 0.0
    %1513 = vmatprep.subr.mxu0 0.0
    %1514 = vmatpush2.msra.mxu0 0.0
    %1515 = vmatprep.subr.mxu0 0.0
    %1516 = vmatpush2.msra.mxu0 0.0
    %1517 = vmatprep.subr.mxu0 0.0
    %1518 = vmatpush2.msra.mxu0 0.0
    %1519 = vmatprep.subr.mxu0 0.0
    %1520 = vmatpush2.msra.mxu0 0.0
    %1521 = vmatprep.subr.mxu0 0.0
    %1522 = vmatpush2.msra.mxu0 0.0
    %1523 = vmatprep.mubr.f32.mxu0 0.0
    %1524 = vmatmul.mubr.f32.gmra.mxu0 %v1434
    %v1525 = vpop.f32.mrf.mxu0
    %v1526 = vadd.f32 %v1457, %v1525
    %v1527 = vpop.f32.mrf.mxu0
    %1528 = vdwg.mxu0
    %v1529 = vld [vmem:[#allocation16] sm:$0xff]
    %v1530 = vld [vmem:[#allocation16 + $0x8] sm:$0xff]
    %v1531 = vld [vmem:[#allocation16 + $0x10] sm:$0xff]
    %v1532 = vld [vmem:[#allocation16 + $0x18] sm:$0xff]
    %v1533 = vld [vmem:[#allocation3] sm:$0xff]
    %v1534 = vadd.f32 %v1533, %v1526
    %1535 = vmatprep.subr.mxu0 0.0
    %1536 = vmatpush1.msra.mxu0 0.0
    %1537 = vmatprep.subr.mxu0 0.0
    %1538 = vmatpush1.msra.mxu0 0.0
    %1539 = vmatprep.subr.mxu0 0.0
    %1540 = vmatpush1.msra.mxu0 0.0
    %1541 = vmatprep.subr.mxu0 0.0
    %1542 = vmatpush1.msra.mxu0 0.0
    %1543 = vmatprep.subr.mxu0 0.0
    %1544 = vmatpush1.msra.mxu0 0.0
    %1545 = vmatprep.subr.mxu0 0.0
    %1546 = vmatpush1.msra.mxu0 0.0
    %1547 = vmatprep.subr.mxu0 0.0
    %1548 = vmatpush1.msra.mxu0 0.0
    %1549 = vmatprep.subr.mxu0 0.0
    %1550 = vmatpush1.msra.mxu0 0.0
    %1551 = vmatprep.subr.mxu0 0.0
    %1552 = vmatpush1.msra.mxu0 0.0
    %1553 = vmatprep.subr.mxu0 0.0
    %1554 = vmatpush1.msra.mxu0 0.0
    %1555 = vmatprep.subr.mxu0 0.0
    %1556 = vmatpush1.msra.mxu0 0.0
    %1557 = vmatprep.subr.mxu0 0.0
    %1558 = vmatpush1.msra.mxu0 0.0
    %1559 = vmatprep.subr.mxu0 0.0
    %1560 = vmatpush1.msra.mxu0 %v1532
    %1561 = vmatprep.subr.mxu0 0.0
    %1562 = vmatpush1.msra.mxu0 %v1531
    %1563 = vmatprep.subr.mxu0 0.0
    %1564 = vmatpush1.msra.mxu0 %v1530
    %1565 = vmatprep.subr.mxu0 0.0
    %1566 = vmatpush1.msra.mxu0 %v1529
    %1567 = vmatprep.subr.mxu0 0.0
    %1568 = vmatpush2.msra.mxu0 0.0
    %1569 = vmatprep.subr.mxu0 0.0
    %1570 = vmatpush2.msra.mxu0 0.0
    %1571 = vmatprep.subr.mxu0 0.0
    %1572 = vmatpush2.msra.mxu0 0.0
    %1573 = vmatprep.subr.mxu0 0.0
    %1574 = vmatpush2.msra.mxu0 0.0
    %1575 = vmatprep.subr.mxu0 0.0
    %1576 = vmatpush2.msra.mxu0 0.0
    %1577 = vmatprep.subr.mxu0 0.0
    %1578 = vmatpush2.msra.mxu0 0.0
    %1579 = vmatprep.subr.mxu0 0.0
    %1580 = vmatpush2.msra.mxu0 0.0
    %1581 = vmatprep.subr.mxu0 0.0
    %1582 = vmatpush2.msra.mxu0 0.0
    %1583 = vmatprep.subr.mxu0 0.0
    %1584 = vmatpush2.msra.mxu0 0.0
    %1585 = vmatprep.subr.mxu0 0.0
    %1586 = vmatpush2.msra.mxu0 0.0
    %1587 = vmatprep.subr.mxu0 0.0
    %1588 = vmatpush2.msra.mxu0 0.0
    %1589 = vmatprep.subr.mxu0 0.0
    %1590 = vmatpush2.msra.mxu0 0.0
    %1591 = vmatprep.subr.mxu0 0.0
    %1592 = vmatpush2.msra.mxu0 0.0
    %1593 = vmatprep.subr.mxu0 0.0
    %1594 = vmatpush2.msra.mxu0 0.0
    %1595 = vmatprep.subr.mxu0 0.0
    %1596 = vmatpush2.msra.mxu0 0.0
    %1597 = vmatprep.subr.mxu0 0.0
    %1598 = vmatpush2.msra.mxu0 0.0
    %1599 = vmatprep.mubr.f32.mxu0 0.0
    %1600 = vmatmul.mubr.f32.gmra.mxu0 %v345
    %v1601 = vpop.f32.mrf.mxu0
    %v1602 = vadd.f32 0.0, %v1601
    %v1603 = vpop.f32.mrf.mxu0
    %1604 = vdwg.mxu0
    %v1605 = vadd.f32 %v1534, %v1602
    %v1606 = vxor.u32 %v1605, 2147483648
    %v1607 = vmul.f32 %v1606, 1.442695
    %v1608 = vpow.pop %v1607
    %v1609 = vadd.f32 %v1608, 1.0
    %v1610 = vrcp.pop %v1609
    %v1611 = vmul.f32 1.0, %v1610
    %v1612 = vmul.f32 %v1611, 2.0
    %v1613 = vsub.f32 %v1612, 1.0
    %v1614 = vmul.f32 %v1611, 0.0
    %1616 = vrot.lane.b32.xlu0 %v1613, 64
    %v1617 = vpop.permute.xlu0 %1616
    %v1619 = vmul.f32 %v1611, %v1617
    %1621 = vrot.lane.b32.xlu0 %v1619, 32
    %v1622 = vpop.permute.xlu0 %1621
    %v1624 = vadd.f32 %v1614, %v1622
    %v1625 = vtanh.pop %v1624
    %1627 = vrot.lane.b32.xlu0 %v1625, 64
    %v1628 = vpop.permute.xlu0 %1627
    %v1630 = vmul.f32 %v1611, %v1628
    %1632 = vrot.lane.b32.xlu0 %v1630, 32
    %v1633 = vpop.permute.xlu0 %1632
    %1635 = vst.msk [vmem:[#allocation4] sm:$0xff] %vm343, %v1633
    %s1636 = scalar_lea.vmem [#allocation3], 8
    %v1637 = vld [vmem:[%s1636] sm:$0xff]
    %v1638 = vadd.f32 %v1637, %v1526
    %v1639 = vsel %vm343, %v1633, 0
    %1641 = vmatprep.subr.mxu0 0.0
    %1642 = vmatpush1.msra.mxu0 0.0
    %1643 = vmatprep.subr.mxu0 0.0
    %1644 = vmatpush1.msra.mxu0 0.0
    %1645 = vmatprep.subr.mxu0 0.0
    %1646 = vmatpush1.msra.mxu0 0.0
    %1647 = vmatprep.subr.mxu0 0.0
    %1648 = vmatpush1.msra.mxu0 0.0
    %1649 = vmatprep.subr.mxu0 0.0
    %1650 = vmatpush1.msra.mxu0 0.0
    %1651 = vmatprep.subr.mxu0 0.0
    %1652 = vmatpush1.msra.mxu0 0.0
    %1653 = vmatprep.subr.mxu0 0.0
    %1654 = vmatpush1.msra.mxu0 0.0
    %1655 = vmatprep.subr.mxu0 0.0
    %1656 = vmatpush1.msra.mxu0 0.0
    %1657 = vmatprep.subr.mxu0 0.0
    %1658 = vmatpush1.msra.mxu0 0.0
    %1659 = vmatprep.subr.mxu0 0.0
    %1660 = vmatpush1.msra.mxu0 0.0
    %1661 = vmatprep.subr.mxu0 0.0
    %1662 = vmatpush1.msra.mxu0 0.0
    %1663 = vmatprep.subr.mxu0 0.0
    %1664 = vmatpush1.msra.mxu0 0.0
    %1665 = vmatprep.subr.mxu0 0.0
    %1666 = vmatpush1.msra.mxu0 %v1532
    %1667 = vmatprep.subr.mxu0 0.0
    %1668 = vmatpush1.msra.mxu0 %v1531
    %1669 = vmatprep.subr.mxu0 0.0
    %1670 = vmatpush1.msra.mxu0 %v1530
    %1671 = vmatprep.subr.mxu0 0.0
    %1672 = vmatpush1.msra.mxu0 %v1529
    %1673 = vmatprep.subr.mxu0 0.0
    %1674 = vmatpush2.msra.mxu0 0.0
    %1675 = vmatprep.subr.mxu0 0.0
    %1676 = vmatpush2.msra.mxu0 0.0
    %1677 = vmatprep.subr.mxu0 0.0
    %1678 = vmatpush2.msra.mxu0 0.0
    %1679 = vmatprep.subr.mxu0 0.0
    %1680 = vmatpush2.msra.mxu0 0.0
    %1681 = vmatprep.subr.mxu0 0.0
    %1682 = vmatpush2.msra.mxu0 0.0
    %1683 = vmatprep.subr.mxu0 0.0
    %1684 = vmatpush2.msra.mxu0 0.0
    %1685 = vmatprep.subr.mxu0 0.0
    %1686 = vmatpush2.msra.mxu0 0.0
    %1687 = vmatprep.subr.mxu0 0.0
    %1688 = vmatpush2.msra.mxu0 0.0
    %1689 = vmatprep.subr.mxu0 0.0
    %1690 = vmatpush2.msra.mxu0 0.0
    %1691 = vmatprep.subr.mxu0 0.0
    %1692 = vmatpush2.msra.mxu0 0.0
    %1693 = vmatprep.subr.mxu0 0.0
    %1694 = vmatpush2.msra.mxu0 0.0
    %1695 = vmatprep.subr.mxu0 0.0
    %1696 = vmatpush2.msra.mxu0 0.0
    %1697 = vmatprep.subr.mxu0 0.0
    %1698 = vmatpush2.msra.mxu0 0.0
    %1699 = vmatprep.subr.mxu0 0.0
    %1700 = vmatpush2.msra.mxu0 0.0
    %1701 = vmatprep.subr.mxu0 0.0
    %1702 = vmatpush2.msra.mxu0 0.0
    %1703 = vmatprep.subr.mxu0 0.0
    %1704 = vmatpush2.msra.mxu0 0.0
    %1705 = vmatprep.mubr.f32.mxu0 0.0
    %1706 = vmatmul.mubr.f32.gmra.mxu0 %v1639
    %v1707 = vpop.f32.mrf.mxu0
    %v1708 = vadd.f32 0.0, %v1707
    %v1709 = vpop.f32.mrf.mxu0
    %1710 = vdwg.mxu0
    %v1711 = vadd.f32 %v1638, %v1708
    %v1712 = vxor.u32 %v1711, 2147483648
    %v1713 = vmul.f32 %v1712, 1.442695
    %v1714 = vpow.pop %v1713
    %v1715 = vadd.f32 %v1714, 1.0
    %v1716 = vrcp.pop %v1715
    %v1717 = vmul.f32 1.0, %v1716
    %v1718 = vmul.f32 %v1717, 2.0
    %v1719 = vsub.f32 %v1718, 1.0
    %v1720 = vmul.f32 %v1717, %v1624
    %1722 = vrot.lane.b32.xlu0 %v1719, 64
    %v1723 = vpop.permute.xlu0 %1722
    %v1725 = vmul.f32 %v1717, %v1723
    %1727 = vrot.lane.b32.xlu0 %v1725, 32
    %v1728 = vpop.permute.xlu0 %1727
    %v1730 = vadd.f32 %v1720, %v1728
    %v1731 = vtanh.pop %v1730
    %1733 = vrot.lane.b32.xlu0 %v1731, 64
    %v1734 = vpop.permute.xlu0 %1733
    %v1736 = vmul.f32 %v1717, %v1734
    %1738 = vrot.lane.b32.xlu0 %v1736, 64
    %v1739 = vpop.permute.xlu0 %1738
    %vm1741 = vcmask 523520
    %1742 = vst.msk [vmem:[#allocation4] sm:$0xff] %vm1741, %v1739
    %s1743 = scalar_lea.vmem [#allocation3], 16
    %v1744 = vld [vmem:[%s1743] sm:$0xff]
    %v1745 = vadd.f32 %v1744, %v1526
    %1746 = vrot.lane.b32.xlu0 %v1736, 32
    %v1747 = vpop.permute.xlu0 %1746
    %v1748 = vsel %vm343, %v1747, 0
    %1750 = vmatprep.subr.mxu0 0.0
    %1751 = vmatpush1.msra.mxu0 0.0
    %1752 = vmatprep.subr.mxu0 0.0
    %1753 = vmatpush1.msra.mxu0 0.0
    %1754 = vmatprep.subr.mxu0 0.0
    %1755 = vmatpush1.msra.mxu0 0.0
    %1756 = vmatprep.subr.mxu0 0.0
    %1757 = vmatpush1.msra.mxu0 0.0
    %1758 = vmatprep.subr.mxu0 0.0
    %1759 = vmatpush1.msra.mxu0 0.0
    %1760 = vmatprep.subr.mxu0 0.0
    %1761 = vmatpush1.msra.mxu0 0.0
    %1762 = vmatprep.subr.mxu0 0.0
    %1763 = vmatpush1.msra.mxu0 0.0
    %1764 = vmatprep.subr.mxu0 0.0
    %1765 = vmatpush1.msra.mxu0 0.0
    %1766 = vmatprep.subr.mxu0 0.0
    %1767 = vmatpush1.msra.mxu0 0.0
    %1768 = vmatprep.subr.mxu0 0.0
    %1769 = vmatpush1.msra.mxu0 0.0
    %1770 = vmatprep.subr.mxu0 0.0
    %1771 = vmatpush1.msra.mxu0 0.0
    %1772 = vmatprep.subr.mxu0 0.0
    %1773 = vmatpush1.msra.mxu0 0.0
    %1774 = vmatprep.subr.mxu0 0.0
    %1775 = vmatpush1.msra.mxu0 %v1532
    %1776 = vmatprep.subr.mxu0 0.0
    %1777 = vmatpush1.msra.mxu0 %v1531
    %1778 = vmatprep.subr.mxu0 0.0
    %1779 = vmatpush1.msra.mxu0 %v1530
    %1780 = vmatprep.subr.mxu0 0.0
    %1781 = vmatpush1.msra.mxu0 %v1529
    %1782 = vmatprep.subr.mxu0 0.0
    %1783 = vmatpush2.msra.mxu0 0.0
    %1784 = vmatprep.subr.mxu0 0.0
    %1785 = vmatpush2.msra.mxu0 0.0
    %1786 = vmatprep.subr.mxu0 0.0
    %1787 = vmatpush2.msra.mxu0 0.0
    %1788 = vmatprep.subr.mxu0 0.0
    %1789 = vmatpush2.msra.mxu0 0.0
    %1790 = vmatprep.subr.mxu0 0.0
    %1791 = vmatpush2.msra.mxu0 0.0
    %1792 = vmatprep.subr.mxu0 0.0
    %1793 = vmatpush2.msra.mxu0 0.0
    %1794 = vmatprep.subr.mxu0 0.0
    %1795 = vmatpush2.msra.mxu0 0.0
    %1796 = vmatprep.subr.mxu0 0.0
    %1797 = vmatpush2.msra.mxu0 0.0
    %1798 = vmatprep.subr.mxu0 0.0
    %1799 = vmatpush2.msra.mxu0 0.0
    %1800 = vmatprep.subr.mxu0 0.0
    %1801 = vmatpush2.msra.mxu0 0.0
    %1802 = vmatprep.subr.mxu0 0.0
    %1803 = vmatpush2.msra.mxu0 0.0
    %1804 = vmatprep.subr.mxu0 0.0
    %1805 = vmatpush2.msra.mxu0 0.0
    %1806 = vmatprep.subr.mxu0 0.0
    %1807 = vmatpush2.msra.mxu0 0.0
    %1808 = vmatprep.subr.mxu0 0.0
    %1809 = vmatpush2.msra.mxu0 0.0
    %1810 = vmatprep.subr.mxu0 0.0
    %1811 = vmatpush2.msra.mxu0 0.0
    %1812 = vmatprep.subr.mxu0 0.0
    %1813 = vmatpush2.msra.mxu0 0.0
    %1814 = vmatprep.mubr.f32.mxu0 0.0
    %1815 = vmatmul.mubr.f32.gmra.mxu0 %v1748
    %v1816 = vpop.f32.mrf.mxu0
    %v1817 = vadd.f32 0.0, %v1816
    %v1818 = vpop.f32.mrf.mxu0
    %1819 = vdwg.mxu0
    %v1820 = vadd.f32 %v1745, %v1817
    %v1821 = vxor.u32 %v1820, 2147483648
    %v1822 = vmul.f32 %v1821, 1.442695
    %v1823 = vpow.pop %v1822
    %v1824 = vadd.f32 %v1823, 1.0
    %v1825 = vrcp.pop %v1824
    %v1826 = vmul.f32 1.0, %v1825
    %v1827 = vmul.f32 %v1826, 2.0
    %v1828 = vsub.f32 %v1827, 1.0
    %v1829 = vmul.f32 %v1826, %v1730
    %1831 = vrot.lane.b32.xlu0 %v1828, 64
    %v1832 = vpop.permute.xlu0 %1831
    %v1834 = vmul.f32 %v1826, %v1832
    %1836 = vrot.lane.b32.xlu0 %v1834, 32
    %v1837 = vpop.permute.xlu0 %1836
    %v1839 = vadd.f32 %v1829, %v1837
    %v1840 = vtanh.pop %v1839
    %1842 = vrot.lane.b32.xlu0 %v1840, 64
    %v1843 = vpop.permute.xlu0 %1842
    %v1845 = vmul.f32 %v1826, %v1843
    %1847 = vrot.lane.b32.xlu0 %v1845, 96
    %v1848 = vpop.permute.xlu0 %1847
    %vm1850 = vcmask 785920
    %1851 = vst.msk [vmem:[#allocation4] sm:$0xff] %vm1850, %v1848
    %s1852 = scalar_lea.vmem [#allocation3], 24
    %v1853 = vld [vmem:[%s1852] sm:$0xff]
    %v1854 = vadd.f32 %v1853, %v1526
    %1855 = vrot.lane.b32.xlu0 %v1845, 32
    %v1856 = vpop.permute.xlu0 %1855
    %v1857 = vsel %vm343, %v1856, 0
    %1859 = vmatprep.subr.mxu0 0.0
    %1860 = vmatpush1.msra.mxu0 0.0
    %1861 = vmatprep.subr.mxu0 0.0
    %1862 = vmatpush1.msra.mxu0 0.0
    %1863 = vmatprep.subr.mxu0 0.0
    %1864 = vmatpush1.msra.mxu0 0.0
    %1865 = vmatprep.subr.mxu0 0.0
    %1866 = vmatpush1.msra.mxu0 0.0
    %1867 = vmatprep.subr.mxu0 0.0
    %1868 = vmatpush1.msra.mxu0 0.0
    %1869 = vmatprep.subr.mxu0 0.0
    %1870 = vmatpush1.msra.mxu0 0.0
    %1871 = vmatprep.subr.mxu0 0.0
    %1872 = vmatpush1.msra.mxu0 0.0
    %1873 = vmatprep.subr.mxu0 0.0
    %1874 = vmatpush1.msra.mxu0 0.0
    %1875 = vmatprep.subr.mxu0 0.0
    %1876 = vmatpush1.msra.mxu0 0.0
    %1877 = vmatprep.subr.mxu0 0.0
    %1878 = vmatpush1.msra.mxu0 0.0
    %1879 = vmatprep.subr.mxu0 0.0
    %1880 = vmatpush1.msra.mxu0 0.0
    %1881 = vmatprep.subr.mxu0 0.0
    %1882 = vmatpush1.msra.mxu0 0.0
    %1883 = vmatprep.subr.mxu0 0.0
    %1884 = vmatpush1.msra.mxu0 %v1532
    %1885 = vmatprep.subr.mxu0 0.0
    %1886 = vmatpush1.msra.mxu0 %v1531
    %1887 = vmatprep.subr.mxu0 0.0
    %1888 = vmatpush1.msra.mxu0 %v1530
    %1889 = vmatprep.subr.mxu0 0.0
    %1890 = vmatpush1.msra.mxu0 %v1529
    %1891 = vmatprep.subr.mxu0 0.0
    %1892 = vmatpush2.msra.mxu0 0.0
    %1893 = vmatprep.subr.mxu0 0.0
    %1894 = vmatpush2.msra.mxu0 0.0
    %1895 = vmatprep.subr.mxu0 0.0
    %1896 = vmatpush2.msra.mxu0 0.0
    %1897 = vmatprep.subr.mxu0 0.0
    %1898 = vmatpush2.msra.mxu0 0.0
    %1899 = vmatprep.subr.mxu0 0.0
    %1900 = vmatpush2.msra.mxu0 0.0
    %1901 = vmatprep.subr.mxu0 0.0
    %1902 = vmatpush2.msra.mxu0 0.0
    %1903 = vmatprep.subr.mxu0 0.0
    %1904 = vmatpush2.msra.mxu0 0.0
    %1905 = vmatprep.subr.mxu0 0.0
    %1906 = vmatpush2.msra.mxu0 0.0
    %1907 = vmatprep.subr.mxu0 0.0
    %1908 = vmatpush2.msra.mxu0 0.0
    %1909 = vmatprep.subr.mxu0 0.0
    %1910 = vmatpush2.msra.mxu0 0.0
    %1911 = vmatprep.subr.mxu0 0.0
    %1912 = vmatpush2.msra.mxu0 0.0
    %1913 = vmatprep.subr.mxu0 0.0
    %1914 = vmatpush2.msra.mxu0 0.0
    %1915 = vmatprep.subr.mxu0 0.0
    %1916 = vmatpush2.msra.mxu0 0.0
    %1917 = vmatprep.subr.mxu0 0.0
    %1918 = vmatpush2.msra.mxu0 0.0
    %1919 = vmatprep.subr.mxu0 0.0
    %1920 = vmatpush2.msra.mxu0 0.0
    %1921 = vmatprep.subr.mxu0 0.0
    %1922 = vmatpush2.msra.mxu0 0.0
    %1923 = vmatprep.mubr.f32.mxu0 0.0
    %1924 = vmatmul.mubr.f32.gmra.mxu0 %v1857
    %v1925 = vpop.f32.mrf.mxu0
    %v1926 = vadd.f32 0.0, %v1925
    %v1927 = vpop.f32.mrf.mxu0
    %1928 = vdwg.mxu0
    %v1929 = vadd.f32 %v1854, %v1926
    %v1930 = vxor.u32 %v1929, 2147483648
    %v1931 = vmul.f32 %v1930, 1.442695
    %v1932 = vpow.pop %v1931
    %v1933 = vadd.f32 %v1932, 1.0
    %v1934 = vrcp.pop %v1933
    %v1935 = vmul.f32 1.0, %v1934
    %v1936 = vmul.f32 %v1935, 2.0
    %v1937 = vsub.f32 %v1936, 1.0
    %v1938 = vmul.f32 %v1935, %v1839
    %1940 = vrot.lane.b32.xlu0 %v1937, 64
    %v1941 = vpop.permute.xlu0 %1940
    %v1943 = vmul.f32 %v1935, %v1941
    %1945 = vrot.lane.b32.xlu0 %v1943, 32
    %v1946 = vpop.permute.xlu0 %1945
    %v1948 = vadd.f32 %v1938, %v1946
    %v1949 = vtanh.pop %v1948
    %1951 = vrot.lane.b32.xlu0 %v1949, 64
    %v1952 = vpop.permute.xlu0 %1951
    %v1954 = vmul.f32 %v1935, %v1952
    %vm1955 = vcmask 1048320
    %1956 = vst.msk [vmem:[#allocation4] sm:$0xff] %vm1955, %v1954
    %s1957 = scalar_lea.vmem [#allocation3], 32
    %v1958 = vld [vmem:[%s1957] sm:$0xff]
    %v1959 = vadd.f32 %v1958, %v1526
    %1961 = vrot.lane.b32.xlu0 %v1954, 32
    %v1962 = vpop.permute.xlu0 %1961
    %v1963 = vsel %vm343, %v1962, 0
    %1965 = vmatprep.subr.mxu0 0.0
    %1966 = vmatpush1.msra.mxu0 0.0
    %1967 = vmatprep.subr.mxu0 0.0
    %1968 = vmatpush1.msra.mxu0 0.0
    %1969 = vmatprep.subr.mxu0 0.0
    %1970 = vmatpush1.msra.mxu0 0.0
    %1971 = vmatprep.subr.mxu0 0.0
    %1972 = vmatpush1.msra.mxu0 0.0
    %1973 = vmatprep.subr.mxu0 0.0
    %1974 = vmatpush1.msra.mxu0 0.0
    %1975 = vmatprep.subr.mxu0 0.0
    %1976 = vmatpush1.msra.mxu0 0.0
    %1977 = vmatprep.subr.mxu0 0.0
    %1978 = vmatpush1.msra.mxu0 0.0
    %1979 = vmatprep.subr.mxu0 0.0
    %1980 = vmatpush1.msra.mxu0 0.0
    %1981 = vmatprep.subr.mxu0 0.0
    %1982 = vmatpush1.msra.mxu0 0.0
    %1983 = vmatprep.subr.mxu0 0.0
    %1984 = vmatpush1.msra.mxu0 0.0
    %1985 = vmatprep.subr.mxu0 0.0
    %1986 = vmatpush1.msra.mxu0 0.0
    %1987 = vmatprep.subr.mxu0 0.0
    %1988 = vmatpush1.msra.mxu0 0.0
    %1989 = vmatprep.subr.mxu0 0.0
    %1990 = vmatpush1.msra.mxu0 %v1532
    %1991 = vmatprep.subr.mxu0 0.0
    %1992 = vmatpush1.msra.mxu0 %v1531
    %1993 = vmatprep.subr.mxu0 0.0
    %1994 = vmatpush1.msra.mxu0 %v1530
    %1995 = vmatprep.subr.mxu0 0.0
    %1996 = vmatpush1.msra.mxu0 %v1529
    %1997 = vmatprep.subr.mxu0 0.0
    %1998 = vmatpush2.msra.mxu0 0.0
    %1999 = vmatprep.subr.mxu0 0.0
    %2000 = vmatpush2.msra.mxu0 0.0
    %2001 = vmatprep.subr.mxu0 0.0
    %2002 = vmatpush2.msra.mxu0 0.0
    %2003 = vmatprep.subr.mxu0 0.0
    %2004 = vmatpush2.msra.mxu0 0.0
    %2005 = vmatprep.subr.mxu0 0.0
    %2006 = vmatpush2.msra.mxu0 0.0
    %2007 = vmatprep.subr.mxu0 0.0
    %2008 = vmatpush2.msra.mxu0 0.0
    %2009 = vmatprep.subr.mxu0 0.0
    %2010 = vmatpush2.msra.mxu0 0.0
    %2011 = vmatprep.subr.mxu0 0.0
    %2012 = vmatpush2.msra.mxu0 0.0
    %2013 = vmatprep.subr.mxu0 0.0
    %2014 = vmatpush2.msra.mxu0 0.0
    %2015 = vmatprep.subr.mxu0 0.0
    %2016 = vmatpush2.msra.mxu0 0.0
    %2017 = vmatprep.subr.mxu0 0.0
    %2018 = vmatpush2.msra.mxu0 0.0
    %2019 = vmatprep.subr.mxu0 0.0
    %2020 = vmatpush2.msra.mxu0 0.0
    %2021 = vmatprep.subr.mxu0 0.0
    %2022 = vmatpush2.msra.mxu0 0.0
    %2023 = vmatprep.subr.mxu0 0.0
    %2024 = vmatpush2.msra.mxu0 0.0
    %2025 = vmatprep.subr.mxu0 0.0
    %2026 = vmatpush2.msra.mxu0 0.0
    %2027 = vmatprep.subr.mxu0 0.0
    %2028 = vmatpush2.msra.mxu0 0.0
    %2029 = vmatprep.mubr.f32.mxu0 0.0
    %2030 = vmatmul.mubr.f32.gmra.mxu0 %v1963
    %v2031 = vpop.f32.mrf.mxu0
    %v2032 = vadd.f32 0.0, %v2031
    %v2033 = vpop.f32.mrf.mxu0
    %2034 = vdwg.mxu0
    %v2035 = vadd.f32 %v1959, %v2032
    %v2036 = vxor.u32 %v2035, 2147483648
    %v2037 = vmul.f32 %v2036, 1.442695
    %v2038 = vpow.pop %v2037
    %v2039 = vadd.f32 %v2038, 1.0
    %v2040 = vrcp.pop %v2039
    %v2041 = vmul.f32 1.0, %v2040
    %v2042 = vmul.f32 %v2041, 2.0
    %v2043 = vsub.f32 %v2042, 1.0
    %v2044 = vmul.f32 %v2041, %v1948
    %2046 = vrot.lane.b32.xlu0 %v2043, 64
    %v2047 = vpop.permute.xlu0 %2046
    %v2049 = vmul.f32 %v2041, %v2047
    %2051 = vrot.lane.b32.xlu0 %v2049, 32
    %v2052 = vpop.permute.xlu0 %2051
    %v2054 = vadd.f32 %v2044, %v2052
    %v2055 = vtanh.pop %v2054
    %2057 = vrot.lane.b32.xlu0 %v2055, 64
    %v2058 = vpop.permute.xlu0 %2057
    %v2060 = vmul.f32 %v2041, %v2058
    %2062 = vrot.lane.b32.xlu0 %v2060, 32
    %v2063 = vpop.permute.xlu0 %2062
    %2065 = vst.msk [vmem:[#allocation4 + $0x8] sm:$0xff] %vm343, %v2063
    %s2066 = scalar_lea.vmem [#allocation3], 40
    %v2067 = vld [vmem:[%s2066] sm:$0xff]
    %v2068 = vadd.f32 %v2067, %v1526
    %v2069 = vsel %vm343, %v2063, 0
    %2071 = vmatprep.subr.mxu0 0.0
    %2072 = vmatpush1.msra.mxu0 0.0
    %2073 = vmatprep.subr.mxu0 0.0
    %2074 = vmatpush1.msra.mxu0 0.0
    %2075 = vmatprep.subr.mxu0 0.0
    %2076 = vmatpush1.msra.mxu0 0.0
    %2077 = vmatprep.subr.mxu0 0.0
    %2078 = vmatpush1.msra.mxu0 0.0
    %2079 = vmatprep.subr.mxu0 0.0
    %2080 = vmatpush1.msra.mxu0 0.0
    %2081 = vmatprep.subr.mxu0 0.0
    %2082 = vmatpush1.msra.mxu0 0.0
    %2083 = vmatprep.subr.mxu0 0.0
    %2084 = vmatpush1.msra.mxu0 0.0
    %2085 = vmatprep.subr.mxu0 0.0
    %2086 = vmatpush1.msra.mxu0 0.0
    %2087 = vmatprep.subr.mxu0 0.0
    %2088 = vmatpush1.msra.mxu0 0.0
    %2089 = vmatprep.subr.mxu0 0.0
    %2090 = vmatpush1.msra.mxu0 0.0
    %2091 = vmatprep.subr.mxu0 0.0
    %2092 = vmatpush1.msra.mxu0 0.0
    %2093 = vmatprep.subr.mxu0 0.0
    %2094 = vmatpush1.msra.mxu0 0.0
    %2095 = vmatprep.subr.mxu0 0.0
    %2096 = vmatpush1.msra.mxu0 %v1532
    %2097 = vmatprep.subr.mxu0 0.0
    %2098 = vmatpush1.msra.mxu0 %v1531
    %2099 = vmatprep.subr.mxu0 0.0
    %2100 = vmatpush1.msra.mxu0 %v1530
    %2101 = vmatprep.subr.mxu0 0.0
    %2102 = vmatpush1.msra.mxu0 %v1529
    %2103 = vmatprep.subr.mxu0 0.0
    %2104 = vmatpush2.msra.mxu0 0.0
    %2105 = vmatprep.subr.mxu0 0.0
    %2106 = vmatpush2.msra.mxu0 0.0
    %2107 = vmatprep.subr.mxu0 0.0
    %2108 = vmatpush2.msra.mxu0 0.0
    %2109 = vmatprep.subr.mxu0 0.0
    %2110 = vmatpush2.msra.mxu0 0.0
    %2111 = vmatprep.subr.mxu0 0.0
    %2112 = vmatpush2.msra.mxu0 0.0
    %2113 = vmatprep.subr.mxu0 0.0
    %2114 = vmatpush2.msra.mxu0 0.0
    %2115 = vmatprep.subr.mxu0 0.0
    %2116 = vmatpush2.msra.mxu0 0.0
    %2117 = vmatprep.subr.mxu0 0.0
    %2118 = vmatpush2.msra.mxu0 0.0
    %2119 = vmatprep.subr.mxu0 0.0
    %2120 = vmatpush2.msra.mxu0 0.0
    %2121 = vmatprep.subr.mxu0 0.0
    %2122 = vmatpush2.msra.mxu0 0.0
    %2123 = vmatprep.subr.mxu0 0.0
    %2124 = vmatpush2.msra.mxu0 0.0
    %2125 = vmatprep.subr.mxu0 0.0
    %2126 = vmatpush2.msra.mxu0 0.0
    %2127 = vmatprep.subr.mxu0 0.0
    %2128 = vmatpush2.msra.mxu0 0.0
    %2129 = vmatprep.subr.mxu0 0.0
    %2130 = vmatpush2.msra.mxu0 0.0
    %2131 = vmatprep.subr.mxu0 0.0
    %2132 = vmatpush2.msra.mxu0 0.0
    %2133 = vmatprep.subr.mxu0 0.0
    %2134 = vmatpush2.msra.mxu0 0.0
    %2135 = vmatprep.mubr.f32.mxu0 0.0
    %2136 = vmatmul.mubr.f32.gmra.mxu0 %v2069
    %v2137 = vpop.f32.mrf.mxu0
    %v2138 = vadd.f32 0.0, %v2137
    %v2139 = vpop.f32.mrf.mxu0
    %2140 = vdwg.mxu0
    %v2141 = vadd.f32 %v2068, %v2138
    %v2142 = vxor.u32 %v2141, 2147483648
    %v2143 = vmul.f32 %v2142, 1.442695
    %v2144 = vpow.pop %v2143
    %v2145 = vadd.f32 %v2144, 1.0
    %v2146 = vrcp.pop %v2145
    %v2147 = vmul.f32 1.0, %v2146
    %v2148 = vmul.f32 %v2147, 2.0
    %v2149 = vsub.f32 %v2148, 1.0
    %v2150 = vmul.f32 %v2147, %v2054
    %2152 = vrot.lane.b32.xlu0 %v2149, 64
    %v2153 = vpop.permute.xlu0 %2152
    %v2155 = vmul.f32 %v2147, %v2153
    %2157 = vrot.lane.b32.xlu0 %v2155, 32
    %v2158 = vpop.permute.xlu0 %2157
    %v2160 = vadd.f32 %v2150, %v2158
    %v2161 = vtanh.pop %v2160
    %2163 = vrot.lane.b32.xlu0 %v2161, 64
    %v2164 = vpop.permute.xlu0 %2163
    %v2166 = vmul.f32 %v2147, %v2164
    %2168 = vrot.lane.b32.xlu0 %v2166, 64
    %v2169 = vpop.permute.xlu0 %2168
    %2171 = vst.msk [vmem:[#allocation4 + $0x8] sm:$0xff] %vm1741, %v2169
    %s2172 = scalar_lea.vmem [#allocation3], 48
    %v2173 = vld [vmem:[%s2172] sm:$0xff]
    %v2174 = vadd.f32 %v2173, %v1526
    %2175 = vrot.lane.b32.xlu0 %v2166, 32
    %v2176 = vpop.permute.xlu0 %2175
    %v2177 = vsel %vm343, %v2176, 0
    %2179 = vmatprep.subr.mxu0 0.0
    %2180 = vmatpush1.msra.mxu0 0.0
    %2181 = vmatprep.subr.mxu0 0.0
    %2182 = vmatpush1.msra.mxu0 0.0
    %2183 = vmatprep.subr.mxu0 0.0
    %2184 = vmatpush1.msra.mxu0 0.0
    %2185 = vmatprep.subr.mxu0 0.0
    %2186 = vmatpush1.msra.mxu0 0.0
    %2187 = vmatprep.subr.mxu0 0.0
    %2188 = vmatpush1.msra.mxu0 0.0
    %2189 = vmatprep.subr.mxu0 0.0
    %2190 = vmatpush1.msra.mxu0 0.0
    %2191 = vmatprep.subr.mxu0 0.0
    %2192 = vmatpush1.msra.mxu0 0.0
    %2193 = vmatprep.subr.mxu0 0.0
    %2194 = vmatpush1.msra.mxu0 0.0
    %2195 = vmatprep.subr.mxu0 0.0
    %2196 = vmatpush1.msra.mxu0 0.0
    %2197 = vmatprep.subr.mxu0 0.0
    %2198 = vmatpush1.msra.mxu0 0.0
    %2199 = vmatprep.subr.mxu0 0.0
    %2200 = vmatpush1.msra.mxu0 0.0
    %2201 = vmatprep.subr.mxu0 0.0
    %2202 = vmatpush1.msra.mxu0 0.0
    %2203 = vmatprep.subr.mxu0 0.0
    %2204 = vmatpush1.msra.mxu0 %v1532
    %2205 = vmatprep.subr.mxu0 0.0
    %2206 = vmatpush1.msra.mxu0 %v1531
    %2207 = vmatprep.subr.mxu0 0.0
    %2208 = vmatpush1.msra.mxu0 %v1530
    %2209 = vmatprep.subr.mxu0 0.0
    %2210 = vmatpush1.msra.mxu0 %v1529
    %2211 = vmatprep.subr.mxu0 0.0
    %2212 = vmatpush2.msra.mxu0 0.0
    %2213 = vmatprep.subr.mxu0 0.0
    %2214 = vmatpush2.msra.mxu0 0.0
    %2215 = vmatprep.subr.mxu0 0.0
    %2216 = vmatpush2.msra.mxu0 0.0
    %2217 = vmatprep.subr.mxu0 0.0
    %2218 = vmatpush2.msra.mxu0 0.0
    %2219 = vmatprep.subr.mxu0 0.0
    %2220 = vmatpush2.msra.mxu0 0.0
    %2221 = vmatprep.subr.mxu0 0.0
    %2222 = vmatpush2.msra.mxu0 0.0
    %2223 = vmatprep.subr.mxu0 0.0
    %2224 = vmatpush2.msra.mxu0 0.0
    %2225 = vmatprep.subr.mxu0 0.0
    %2226 = vmatpush2.msra.mxu0 0.0
    %2227 = vmatprep.subr.mxu0 0.0
    %2228 = vmatpush2.msra.mxu0 0.0
    %2229 = vmatprep.subr.mxu0 0.0
    %2230 = vmatpush2.msra.mxu0 0.0
    %2231 = vmatprep.subr.mxu0 0.0
    %2232 = vmatpush2.msra.mxu0 0.0
    %2233 = vmatprep.subr.mxu0 0.0
    %2234 = vmatpush2.msra.mxu0 0.0
    %2235 = vmatprep.subr.mxu0 0.0
    %2236 = vmatpush2.msra.mxu0 0.0
    %2237 = vmatprep.subr.mxu0 0.0
    %2238 = vmatpush2.msra.mxu0 0.0
    %2239 = vmatprep.subr.mxu0 0.0
    %2240 = vmatpush2.msra.mxu0 0.0
    %2241 = vmatprep.subr.mxu0 0.0
    %2242 = vmatpush2.msra.mxu0 0.0
    %2243 = vmatprep.mubr.f32.mxu0 0.0
    %2244 = vmatmul.mubr.f32.gmra.mxu0 %v2177
    %v2245 = vpop.f32.mrf.mxu0
    %v2246 = vadd.f32 0.0, %v2245
    %v2247 = vpop.f32.mrf.mxu0
    %2248 = vdwg.mxu0
    %v2249 = vadd.f32 %v2174, %v2246
    %v2250 = vxor.u32 %v2249, 2147483648
    %v2251 = vmul.f32 %v2250, 1.442695
    %v2252 = vpow.pop %v2251
    %v2253 = vadd.f32 %v2252, 1.0
    %v2254 = vrcp.pop %v2253
    %v2255 = vmul.f32 1.0, %v2254
    %v2256 = vmul.f32 %v2255, 2.0
    %v2257 = vsub.f32 %v2256, 1.0
    %v2258 = vmul.f32 %v2255, %v2160
    %2260 = vrot.lane.b32.xlu0 %v2257, 64
    %v2261 = vpop.permute.xlu0 %2260
    %v2263 = vmul.f32 %v2255, %v2261
    %2265 = vrot.lane.b32.xlu0 %v2263, 32
    %v2266 = vpop.permute.xlu0 %2265
    %v2268 = vadd.f32 %v2258, %v2266
    %v2269 = vtanh.pop %v2268
    %2271 = vrot.lane.b32.xlu0 %v2269, 64
    %v2272 = vpop.permute.xlu0 %2271
    %v2274 = vmul.f32 %v2255, %v2272
    %2276 = vrot.lane.b32.xlu0 %v2274, 96
    %v2277 = vpop.permute.xlu0 %2276
    %2279 = vst.msk [vmem:[#allocation4 + $0x8] sm:$0xff] %vm1850, %v2277
    %s2280 = scalar_lea.vmem [#allocation3], 56
    %v2281 = vld [vmem:[%s2280] sm:$0xff]
    %v2282 = vadd.f32 %v2281, %v1526
    %2283 = vrot.lane.b32.xlu0 %v2274, 32
    %v2284 = vpop.permute.xlu0 %2283
    %v2285 = vsel %vm343, %v2284, 0
    %2287 = vmatprep.subr.mxu0 0.0
    %2288 = vmatpush1.msra.mxu0 0.0
    %2289 = vmatprep.subr.mxu0 0.0
    %2290 = vmatpush1.msra.mxu0 0.0
    %2291 = vmatprep.subr.mxu0 0.0
    %2292 = vmatpush1.msra.mxu0 0.0
    %2293 = vmatprep.subr.mxu0 0.0
    %2294 = vmatpush1.msra.mxu0 0.0
    %2295 = vmatprep.subr.mxu0 0.0
    %2296 = vmatpush1.msra.mxu0 0.0
    %2297 = vmatprep.subr.mxu0 0.0
    %2298 = vmatpush1.msra.mxu0 0.0
    %2299 = vmatprep.subr.mxu0 0.0
    %2300 = vmatpush1.msra.mxu0 0.0
    %2301 = vmatprep.subr.mxu0 0.0
    %2302 = vmatpush1.msra.mxu0 0.0
    %2303 = vmatprep.subr.mxu0 0.0
    %2304 = vmatpush1.msra.mxu0 0.0
    %2305 = vmatprep.subr.mxu0 0.0
    %2306 = vmatpush1.msra.mxu0 0.0
    %2307 = vmatprep.subr.mxu0 0.0
    %2308 = vmatpush1.msra.mxu0 0.0
    %2309 = vmatprep.subr.mxu0 0.0
    %2310 = vmatpush1.msra.mxu0 0.0
    %2311 = vmatprep.subr.mxu0 0.0
    %2312 = vmatpush1.msra.mxu0 %v1532
    %2313 = vmatprep.subr.mxu0 0.0
    %2314 = vmatpush1.msra.mxu0 %v1531
    %2315 = vmatprep.subr.mxu0 0.0
    %2316 = vmatpush1.msra.mxu0 %v1530
    %2317 = vmatprep.subr.mxu0 0.0
    %2318 = vmatpush1.msra.mxu0 %v1529
    %2319 = vmatprep.subr.mxu0 0.0
    %2320 = vmatpush2.msra.mxu0 0.0
    %2321 = vmatprep.subr.mxu0 0.0
    %2322 = vmatpush2.msra.mxu0 0.0
    %2323 = vmatprep.subr.mxu0 0.0
    %2324 = vmatpush2.msra.mxu0 0.0
    %2325 = vmatprep.subr.mxu0 0.0
    %2326 = vmatpush2.msra.mxu0 0.0
    %2327 = vmatprep.subr.mxu0 0.0
    %2328 = vmatpush2.msra.mxu0 0.0
    %2329 = vmatprep.subr.mxu0 0.0
    %2330 = vmatpush2.msra.mxu0 0.0
    %2331 = vmatprep.subr.mxu0 0.0
    %2332 = vmatpush2.msra.mxu0 0.0
    %2333 = vmatprep.subr.mxu0 0.0
    %2334 = vmatpush2.msra.mxu0 0.0
    %2335 = vmatprep.subr.mxu0 0.0
    %2336 = vmatpush2.msra.mxu0 0.0
    %2337 = vmatprep.subr.mxu0 0.0
    %2338 = vmatpush2.msra.mxu0 0.0
    %2339 = vmatprep.subr.mxu0 0.0
    %2340 = vmatpush2.msra.mxu0 0.0
    %2341 = vmatprep.subr.mxu0 0.0
    %2342 = vmatpush2.msra.mxu0 0.0
    %2343 = vmatprep.subr.mxu0 0.0
    %2344 = vmatpush2.msra.mxu0 0.0
    %2345 = vmatprep.subr.mxu0 0.0
    %2346 = vmatpush2.msra.mxu0 0.0
    %2347 = vmatprep.subr.mxu0 0.0
    %2348 = vmatpush2.msra.mxu0 0.0
    %2349 = vmatprep.subr.mxu0 0.0
    %2350 = vmatpush2.msra.mxu0 0.0
    %2351 = vmatprep.mubr.f32.mxu0 0.0
    %2352 = vmatmul.mubr.f32.gmra.mxu0 %v2285
    %v2353 = vpop.f32.mrf.mxu0
    %v2354 = vadd.f32 0.0, %v2353
    %v2355 = vpop.f32.mrf.mxu0
    %2356 = vdwg.mxu0
    %v2357 = vadd.f32 %v2282, %v2354
    %v2358 = vxor.u32 %v2357, 2147483648
    %v2359 = vmul.f32 %v2358, 1.442695
    %v2360 = vpow.pop %v2359
    %v2361 = vadd.f32 %v2360, 1.0
    %v2362 = vrcp.pop %v2361
    %v2363 = vmul.f32 1.0, %v2362
    %v2364 = vmul.f32 %v2363, 2.0
    %v2365 = vsub.f32 %v2364, 1.0
    %v2366 = vmul.f32 %v2363, %v2268
    %2368 = vrot.lane.b32.xlu0 %v2365, 64
    %v2369 = vpop.permute.xlu0 %2368
    %v2371 = vmul.f32 %v2363, %v2369
    %2373 = vrot.lane.b32.xlu0 %v2371, 32
    %v2374 = vpop.permute.xlu0 %2373
    %v2376 = vadd.f32 %v2366, %v2374
    %v2377 = vtanh.pop %v2376
    %2379 = vrot.lane.b32.xlu0 %v2377, 64
    %v2380 = vpop.permute.xlu0 %2379
    %v2382 = vmul.f32 %v2363, %v2380
    %2383 = vst.msk [vmem:[#allocation4 + $0x8] sm:$0xff] %vm1955, %v2382
    %v2384 = vld [vmem:[#allocation4] sm:$0xff]
    %v2385 = vld [vmem:[#allocation4 + $0x8] sm:$0xff]
    %v2386 = vld [vmem:[#allocation17] sm:$0xff]
    %v2387 = vld [vmem:[#allocation17 + $0x8] sm:$0xff]
    %v2388 = vld [vmem:[#allocation17 + $0x10] sm:$0xff]
    %v2389 = vld [vmem:[#allocation17 + $0x18] sm:$0xff]
    %v2390 = vld [vmem:[#allocation17 + $0x20] sm:$0xff]
    %v2391 = vld [vmem:[#allocation17 + $0x28] sm:$0xff]
    %v2392 = vld [vmem:[#allocation17 + $0x30] sm:$0xff]
    %v2393 = vld [vmem:[#allocation17 + $0x38] sm:$0xff]
    %v2394 = vld [vmem:[#allocation17 + $0x40] sm:$0xff]
    %v2395 = vld [vmem:[#allocation17 + $0x48] sm:$0xff]
    %v2396 = vld [vmem:[#allocation17 + $0x50] sm:$0xff]
    %v2397 = vld [vmem:[#allocation17 + $0x58] sm:$0xff]
    %v2398 = vld [vmem:[#allocation17 + $0x60] sm:$0xff]
    %v2399 = vld [vmem:[#allocation17 + $0x68] sm:$0xff]
    %v2400 = vld [vmem:[#allocation17 + $0x70] sm:$0xff]
    %v2401 = vld [vmem:[#allocation17 + $0x78] sm:$0xff]
    %v2402 = vld [vmem:[#allocation17 + $0x80] sm:$0xff]
    %v2403 = vld [vmem:[#allocation17 + $0x88] sm:$0xff]
    %v2404 = vld [vmem:[#allocation17 + $0x90] sm:$0xff]
    %v2405 = vld [vmem:[#allocation17 + $0x98] sm:$0xff]
    %v2406 = vld [vmem:[#allocation17 + $0xa0] sm:$0xff]
    %v2407 = vld [vmem:[#allocation17 + $0xa8] sm:$0xff]
    %v2408 = vld [vmem:[#allocation17 + $0xb0] sm:$0xff]
    %v2409 = vld [vmem:[#allocation17 + $0xb8] sm:$0xff]
    %v2410 = vld [vmem:[#allocation17 + $0xc0] sm:$0xff]
    %v2411 = vld [vmem:[#allocation17 + $0xc8] sm:$0xff]
    %v2412 = vld [vmem:[#allocation17 + $0xd0] sm:$0xff]
    %v2413 = vld [vmem:[#allocation17 + $0xd8] sm:$0xff]
    %v2414 = vld [vmem:[#allocation17 + $0xe0] sm:$0xff]
    %v2415 = vld [vmem:[#allocation17 + $0xe8] sm:$0xff]
    %v2416 = vld [vmem:[#allocation17 + $0xf0] sm:$0xff]
    %v2417 = vld [vmem:[#allocation17 + $0xf8] sm:$0xff]
    %v2418 = vld [vmem:[%s12] sm:$0x1]
    %v2420 = vlaneseq
    %v2421 = vshrl.u32 %v2420, 7
    %v2422 = vsub.s32 0, %v2421
    %v2423 = vrot.slane %v2418, %v2422
    %2425 = vmatprep.subr.mxu0 0.0
    %2426 = vmatpush1.msra.mxu0 %v2401
    %2427 = vmatprep.subr.mxu0 0.0
    %2428 = vmatpush1.msra.mxu0 %v2400
    %2429 = vmatprep.subr.mxu0 0.0
    %2430 = vmatpush1.msra.mxu0 %v2399
    %2431 = vmatprep.subr.mxu0 0.0
    %2432 = vmatpush1.msra.mxu0 %v2398
    %2433 = vmatprep.subr.mxu0 0.0
    %2434 = vmatpush1.msra.mxu0 %v2397
    %2435 = vmatprep.subr.mxu0 0.0
    %2436 = vmatpush1.msra.mxu0 %v2396
    %2437 = vmatprep.subr.mxu0 0.0
    %2438 = vmatpush1.msra.mxu0 %v2395
    %2439 = vmatprep.subr.mxu0 0.0
    %2440 = vmatpush1.msra.mxu0 %v2394
    %2441 = vmatprep.subr.mxu0 0.0
    %2442 = vmatpush1.msra.mxu0 %v2393
    %2443 = vmatprep.subr.mxu0 0.0
    %2444 = vmatpush1.msra.mxu0 %v2392
    %2445 = vmatprep.subr.mxu0 0.0
    %2446 = vmatpush1.msra.mxu0 %v2391
    %2447 = vmatprep.subr.mxu0 0.0
    %2448 = vmatpush1.msra.mxu0 %v2390
    %2449 = vmatprep.subr.mxu0 0.0
    %2450 = vmatpush1.msra.mxu0 %v2389
    %2451 = vmatprep.subr.mxu0 0.0
    %2452 = vmatpush1.msra.mxu0 %v2388
    %2453 = vmatprep.subr.mxu0 0.0
    %2454 = vmatpush1.msra.mxu0 %v2387
    %2455 = vmatprep.subr.mxu0 0.0
    %2456 = vmatpush1.msra.mxu0 %v2386
    %2457 = vmatprep.subr.mxu0 0.0
    %2458 = vmatpush2.msra.mxu0 %v2417
    %2459 = vmatprep.subr.mxu0 0.0
    %2460 = vmatpush2.msra.mxu0 %v2416
    %2461 = vmatprep.subr.mxu0 0.0
    %2462 = vmatpush2.msra.mxu0 %v2415
    %2463 = vmatprep.subr.mxu0 0.0
    %2464 = vmatpush2.msra.mxu0 %v2414
    %2465 = vmatprep.subr.mxu0 0.0
    %2466 = vmatpush2.msra.mxu0 %v2413
    %2467 = vmatprep.subr.mxu0 0.0
    %2468 = vmatpush2.msra.mxu0 %v2412
    %2469 = vmatprep.subr.mxu0 0.0
    %2470 = vmatpush2.msra.mxu0 %v2411
    %2471 = vmatprep.subr.mxu0 0.0
    %2472 = vmatpush2.msra.mxu0 %v2410
    %2473 = vmatprep.subr.mxu0 0.0
    %2474 = vmatpush2.msra.mxu0 %v2409
    %2475 = vmatprep.subr.mxu0 0.0
    %2476 = vmatpush2.msra.mxu0 %v2408
    %2477 = vmatprep.subr.mxu0 0.0
    %2478 = vmatpush2.msra.mxu0 %v2407
    %2479 = vmatprep.subr.mxu0 0.0
    %2480 = vmatpush2.msra.mxu0 %v2406
    %2481 = vmatprep.subr.mxu0 0.0
    %2482 = vmatpush2.msra.mxu0 %v2405
    %2483 = vmatprep.subr.mxu0 0.0
    %2484 = vmatpush2.msra.mxu0 %v2404
    %2485 = vmatprep.subr.mxu0 0.0
    %2486 = vmatpush2.msra.mxu0 %v2403
    %2487 = vmatprep.subr.mxu0 0.0
    %2488 = vmatpush2.msra.mxu0 %v2402
    %2489 = vmatprep.mubr.f32.mxu0 %v2385
    %2490 = vmatmul.mubr.f32.gmra.mxu0 %v2384
    %v2491 = vpop.f32.mrf.mxu0
    %v2492 = vadd.f32 %v2423, %v2491
    %v2493 = vpop.f32.mrf.mxu0
    %2494 = vdwg.mxu0
    %2495 = vst [vmem:[#allocation19] sm:$0xff] %v2492
    // Predicated region
    $region86: #{tpu_custom_call.1} parent=1 // pred_check
      _
    $region87: #{tpu_custom_call.1} parent=1 // pred_check_branch
      %2497 = sbr.rel (0) target = $region89
    $region88: #{tpu_custom_call.1} parent=1 // pred_region
      %s2499 = ssub.s32 128, 128
      %2500 = vsyncadd [#allocation7], %s2499
      %s2502 = sshll.u32 [#allocation19], 4
      %s2503 = int_to_ptr.vmem [resolvable:$true] %s2502
      %2505 = dma.vmem_to_hbm [thread:$0]  %s2503, 128, %s13, [#allocation7]
    $region89: #{tpu_custom_call.1} parent=1 // pred_fallthru
      _
    // Predicated region
    $region90: #{tpu_custom_call.1} parent=1 // pred_check
      _
    $region91: #{tpu_custom_call.1} parent=1 // pred_check_branch
      %2507 = sbr.rel (0) target = $region93
    $region92: #{tpu_custom_call.1} parent=1 // pred_region
      %s2509 = ssub.s32 128, 128
      %2510 = vsyncadd [#allocation21], %s2509
      %s2512 = sshll.u32 [#allocation20], 4
      %s2513 = int_to_ptr.vmem [resolvable:$true] %s2512
      %2515 = dma.vmem_to_hbm [thread:$0]  %s2513, 128, %s14, [#allocation21]
    $region93: #{tpu_custom_call.1} parent=1 // pred_fallthru
      _
    // Predicated region
    $region94: #{tpu_custom_call.1} parent=1 // pred_check
      _
    $region95: #{tpu_custom_call.1} parent=1 // pred_check_branch
      %2517 = sbr.rel (0) target = $region97
    $region96: #{tpu_custom_call.1} parent=1 // pred_region
      %2518 = dma.done [#allocation7], 128
    $region97: #{tpu_custom_call.1} parent=1 // pred_fallthru
      _
    // Predicated region
    $region98: #{tpu_custom_call.1} parent=1 // pred_check
      _
    $region99: #{tpu_custom_call.1} parent=1 // pred_check_branch
      %2520 = sbr.rel (0) target = $region101
    $region100: #{tpu_custom_call.1} parent=1 // pred_region
      %2521 = dma.done [#allocation21], 128
    $region101: #{tpu_custom_call.1} parent=1 // pred_fallthru
      _
    %2522 = vsyncpa [#allocation6], 1
    %2523 = vsyncpa [#allocation9], 1
    %2524 = vsyncpa [#allocation12], 1
    %2525 = vsyncpa [#allocation15], 1
    %2526 = vsyncpa [#allocation18], 1
    %2527 = vsyncpa [#allocation7], 1
    %2528 = vsyncpa [#allocation21], 1

</llo_original>
